<compile_context>
chip_gen: v5e
topology: v5e:2x2
jax: 0.10.0
libtpu: 0.0.40
codegen_flags: <defaults>
</compile_context>

<pallas_src>
import functools
import math

import jax
import jax.numpy as jnp
from jax.experimental import pallas as pl
from jax.experimental.pallas import tpu as pltpu

# ---------------------------------------------------------------- config ----
D_MODEL = 32
N_HEAD = 4
HEAD_DIM = D_MODEL // N_HEAD
DIM_FF = 64
NUM_LAYERS = 2
EPS = 1e-5
RETURN_INTERMEDIATE = True        # DETR default

W_COLS = 8 * D_MODEL + DIM_FF     # packed (D, x) weight slab width = 320
VEC_W = max(D_MODEL, DIM_FF)      # packed bias/LN slab lane width   = 64
NUM_VEC_ROWS = 18                 # packed bias/LN slab rows


# --------------------------------------------------------- kernel helpers ---
def _layer_norm(x, gamma, beta):
    # x: (N, D) f32; gamma/beta: (1, D).  Biased variance (matches PyTorch).
    mean = jnp.mean(x, axis=-1, keepdims=True)
    var = jnp.mean((x - mean) ** 2, axis=-1, keepdims=True)
    return (x - mean) * jax.lax.rsqrt(var + EPS) * gamma + beta


def _split_heads(x, batch, seq):
    """(batch*seq, D) f32 -> (N_HEAD*batch, seq, HEAD_DIM) bf16, z = h*batch+b."""
    xb = x.astype(jnp.bfloat16)
    parts = [xb[:, h * HEAD_DIM:(h + 1) * HEAD_DIM].reshape(batch, seq, HEAD_DIM)
             for h in range(N_HEAD)]
    return jnp.concatenate(parts, axis=0)


def _merge_heads(x, batch, seq):
    """(N_HEAD*batch, seq, HEAD_DIM) f32 -> (batch*seq, D) f32."""
    parts = [x[h * batch:(h + 1) * batch].reshape(batch * seq, HEAD_DIM)
             for h in range(N_HEAD)]
    return jnp.concatenate(parts, axis=-1)


def _attention(q, k, v, wo, bo, batch, t_q, t_k):
    """Multi-head attention with all (batch, head) pairs batched into one
    einsum pair and a single fused softmax.  q: (batch*t_q, D) f32,
    k/v: (batch*t_k, D) f32, wo: (D, D) bf16, bo: (1, D) f32."""
    scale = 1.0 / math.sqrt(HEAD_DIM)
    qh = _split_heads(q, batch, t_q)          # (B*H, t_q, hd) bf16
    kh = _split_heads(k, batch, t_k)          # (B*H, t_k, hd) bf16
    vh = _split_heads(v, batch, t_k)          # (B*H, t_k, hd) bf16

    s = jnp.einsum("zqd,zkd->zqk", qh, kh,
                   preferred_element_type=jnp.float32) * scale
    s = s - jnp.max(s, axis=-1, keepdims=True)        # one max over the tile
    p = jnp.exp(s)                                    # one exp
    p = p * pl.reciprocal(jnp.sum(p, axis=-1, keepdims=True), approx=True)

    o = jnp.einsum("zqk,zkd->zqd", p.astype(jnp.bfloat16), vh,
                   preferred_element_type=jnp.float32)  # (B*H, t_q, hd) f32
    o = _merge_heads(o, batch, t_q)                     # (B*t_q, D) f32
    return jnp.dot(o.astype(jnp.bfloat16), wo,
                   preferred_element_type=jnp.float32) + bo


# ------------------------------------------------------------------ kernel --
def fused_decoder_kernel(batch, n_tgt, n_mem,
                         tgt_ref, qpos_ref, mem_ref, pos_ref,
                         w_ref, w2_ref, vec_ref, out_ref):
    D = D_MODEL
    num_layers = w_ref.shape[0]

    def to_tokens(ref, seq):
        # seq-major (seq, B*D) -> batch-major token slab (B*seq, D)
        full = ref[...]
        return jnp.concatenate(
            [full[:, b * D:(b + 1) * D] for b in range(batch)], axis=0)

    tok = to_tokens(tgt_ref, n_tgt)            # (B*T, D) running tgt (f32)
    qpos = to_tokens(qpos_ref, n_tgt)          # (B*T, D)
    mem = to_tokens(mem_ref, n_mem)            # (B*S, D)
    mem_pp = mem + to_tokens(pos_ref, n_mem)   # layer-invariant, hoisted

    mem_bf = mem.astype(jnp.bfloat16)
    mem_pp_bf = mem_pp.astype(jnp.bfloat16)

    for l in range(num_layers):                # layers unrolled in-kernel
        w = w_ref[l]          # (D, 320)  bf16 packed (D, x) weights
        w2 = w2_ref[l]        # (F, D)    bf16 FFN second matrix
        vec = vec_ref[l]      # (18, 64)  f32 packed biases / LN params

        # --- unpack weight slab (static lane slices) -------------------------
        sa_wqk = w[:, 0:2 * D]
        sa_wv = w[:, 2 * D:3 * D]
        sa_wo = w[:, 3 * D:4 * D]
        ca_wq = w[:, 4 * D:5 * D]
        ca_wk = w[:, 5 * D:6 * D]
        ca_wv = w[:, 6 * D:7 * D]
        ca_wo = w[:, 7 * D:8 * D]
        ff_w1 = w[:, 8 * D:8 * D + DIM_FF]

        def row(i, width=D):
            return vec[i:i + 1, 0:width]

        sa_bq, sa_bk, sa_bv, sa_bo = row(0), row(1), row(2), row(3)
        ca_bq, ca_bk, ca_bv, ca_bo = row(4), row(5), row(6), row(7)
        ff_b1 = row(8, DIM_FF)
        ff_b2 = row(9)
        ln1_g, ln1_b = row(10), row(11)
        ln2_g, ln2_b = row(12), row(13)
        ln3_g, ln3_b = row(14), row(15)
        fin_g, fin_b = row(16), row(17)

        # --- self-attention: q = k = tgt + query_pos, v = tgt ----------------
        qk_in = (tok + qpos).astype(jnp.bfloat16)
        qk = jnp.dot(qk_in, sa_wqk, preferred_element_type=jnp.float32)
        q = qk[:, 0:D] + sa_bq
        k = qk[:, D:2 * D] + sa_bk
        v = jnp.dot(tok.astype(jnp.bfloat16), sa_wv,
                    preferred_element_type=jnp.float32) + sa_bv
        sa = _attention(q, k, v, sa_wo, sa_bo, batch, n_tgt, n_tgt)
        x = _layer_norm(tok + sa, ln1_g, ln1_b)

        # --- cross-attn: q = x + query_pos, k = memory + pos, v = memory -----
        q = jnp.dot((x + qpos).astype(jnp.bfloat16), ca_wq,
                    preferred_element_type=jnp.float32) + ca_bq
        k = jnp.dot(mem_pp_bf, ca_wk,
                    preferred_element_type=jnp.float32) + ca_bk
        v = jnp.dot(mem_bf, ca_wv,
                    preferred_element_type=jnp.float32) + ca_bv
        ca = _attention(q, k, v, ca_wo, ca_bo, batch, n_tgt, n_mem)
        x = _layer_norm(x + ca, ln2_g, ln2_b)

        # --- feed-forward ------------------------------------------------------
        h = jnp.maximum(
            jnp.dot(x.astype(jnp.bfloat16), ff_w1,
                    preferred_element_type=jnp.float32) + ff_b1, 0.0)
        ff = jnp.dot(h.astype(jnp.bfloat16), w2,
                     preferred_element_type=jnp.float32) + ff_b2
        x = _layer_norm(x + ff, ln3_g, ln3_b)

        # shared final LayerNorm applied to this layer's intermediate output,
        # stored seq-major as (T, B*D) so the wrapper reshape is free.
        y = _layer_norm(x, fin_g, fin_b)                           # (B*T, D)
        out_ref[l] = jnp.concatenate(
            [y[b * n_tgt:(b + 1) * n_tgt, :] for b in range(batch)], axis=-1)

        tok = x    # carry to next layer


# ---------------------------------------------------------------- wrapper ---
def transformer_decoder(tgt, memory, pos, query_pos,
                        w_stack, w2_stack, vec_stack,
                        return_intermediate=RETURN_INTERMEDIATE):
    """tgt/query_pos: (T, B, D); memory/pos: (S, B, D) -- PyTorch seq-major."""
    T, B, D = tgt.shape
    S = memory.shape[0]
    L = w_stack.shape[0]

    # Free metadata reshapes only (no transposes, no data movement).
    tgt2 = tgt.reshape(T, B * D)
    qpos2 = query_pos.reshape(T, B * D)
    mem2 = memory.reshape(S, B * D)
    pos2 = pos.reshape(S, B * D)

    vmem = pl.BlockSpec(memory_space=pltpu.MemorySpace.VMEM)
    kernel = functools.partial(fused_decoder_kernel, B, T, S)

    out = pl.pallas_call(
        kernel,
        out_shape=jax.ShapeDtypeStruct((L, T, B * D), jnp.float32),
        in_specs=[vmem] * 7,
        out_specs=vmem,
    )(tgt2, qpos2, mem2, pos2, w_stack, w2_stack, vec_stack)

    out = out.reshape(L, T, B, D)      # free: pure reshape, no transpose
    if return_intermediate:
        return out
    return out[-1:]                    # norm(final).unsqueeze(0)


# ---------------------------------------------------------- parameter init --
def init_layer_params(key):
    ks = jax.random.split(key, 10)
    it = iter(ks)

    def w(k, fi, fo):
        return jax.random.normal(k, (fi, fo), jnp.float32) / math.sqrt(fi)

    zeros = lambda n: jnp.zeros((1, n), jnp.float32)
    ones = lambda n: jnp.ones((1, n), jnp.float32)
    D, F = D_MODEL, DIM_FF
    return dict(
        sa_wq=w(next(it), D, D), sa_bq=zeros(D),
        sa_wk=w(next(it), D, D), sa_bk=zeros(D),
        sa_wv=w(next(it), D, D), sa_bv=zeros(D),
        sa_wo=w(next(it), D, D), sa_bo=zeros(D),
        ca_wq=w(next(it), D, D), ca_bq=zeros(D),
        ca_wk=w(next(it), D, D), ca_bk=zeros(D),
        ca_wv=w(next(it), D, D), ca_bv=zeros(D),
        ca_wo=w(next(it), D, D), ca_bo=zeros(D),
        n1_g=ones(D), n1_b=zeros(D),
        n2_g=ones(D), n2_b=zeros(D),
        n3_g=ones(D), n3_b=zeros(D),
        ff_w1=w(next(it), D, F), ff_b1=zeros(F),
        ff_w2=w(next(it), F, D), ff_b2=zeros(D),
    )


def pack_params(layer_params, norm_g, norm_b):
    """Pack per-layer params into 3 L-stacked slabs for the fused kernel."""
    ws, w2s, vecs = [], [], []

    def pad_row(v):
        return jnp.pad(v, ((0, 0), (0, VEC_W - v.shape[1])))

    for p in layer_params:
        w = jnp.concatenate(
            [p["sa_wq"], p["sa_wk"], p["sa_wv"], p["sa_wo"],
             p["ca_wq"], p["ca_wk"], p["ca_wv"], p["ca_wo"], p["ff_w1"]],
            axis=1)                                            # (D, 320)
        rows = [p["sa_bq"], p["sa_bk"], p["sa_bv"], p["sa_bo"],
                p["ca_bq"], p["ca_bk"], p["ca_bv"], p["ca_bo"],
                p["ff_b1"], p["ff_b2"],
                p["n1_g"], p["n1_b"], p["n2_g"], p["n2_b"],
                p["n3_g"], p["n3_b"], norm_g, norm_b]
        vec = jnp.concatenate([pad_row(r) for r in rows], axis=0)  # (18, 64)
        ws.append(w)
        w2s.append(p["ff_w2"])
        vecs.append(vec)
    # Matmul operands in bf16 (MXU-native on v5e/v6e/v7x);
    # biases / LayerNorm params stay f32.
    return (jnp.stack(ws).astype(jnp.bfloat16),
            jnp.stack(w2s).astype(jnp.bfloat16),
            jnp.stack(vecs))


# --------------------------------------------------------------------- main -
if __name__ == "__main__":
    key = jax.random.PRNGKey(0)
    B, T, S = 2, 8, 16   # batch, num object queries, memory (H*W) length

    k1, k2, k3, k4, kp = jax.random.split(key, 5)
    tgt = jax.random.normal(k1, (T, B, D_MODEL), jnp.float32)        # queries
    memory = jax.random.normal(k2, (S, B, D_MODEL), jnp.float32)     # encoder out
    pos = jax.random.normal(k3, (S, B, D_MODEL), jnp.float32)        # pos embed
    query_pos = jax.random.normal(k4, (T, B, D_MODEL), jnp.float32)  # query embed

    layer_keys = jax.random.split(kp, NUM_LAYERS)
    layer_params = [init_layer_params(layer_keys[i]) for i in range(NUM_LAYERS)]
    norm_g = jnp.ones((1, D_MODEL), jnp.float32)
    norm_b = jnp.zeros((1, D_MODEL), jnp.float32)

    w_stack, w2_stack, vec_stack = pack_params(layer_params, norm_g, norm_b)

    run = jax.jit(functools.partial(transformer_decoder,
                                    return_intermediate=RETURN_INTERMEDIATE))
    out = run(tgt, memory, pos, query_pos, w_stack, w2_stack, vec_stack)
    out = jax.block_until_ready(out)

    expected = ((NUM_LAYERS, T, B, D_MODEL) if RETURN_INTERMEDIATE
                else (1, T, B, D_MODEL))
    assert out.shape == expected, (out.shape, expected)
    assert bool(jnp.all(jnp.isfinite(out)))
    print("KERNEL_OK")
</pallas_src>

<mosaic_0001>
module attributes {stable_mosaic.version = 11 : i64} {
  func.func @fused_decoder_kernel(%arg0: memref<8x64xf32, #tpu.memory_space<vmem>>, %arg1: memref<8x64xf32, #tpu.memory_space<vmem>>, %arg2: memref<16x64xf32, #tpu.memory_space<vmem>>, %arg3: memref<16x64xf32, #tpu.memory_space<vmem>>, %arg4: memref<2x32x320xbf16, #tpu.memory_space<vmem>>, %arg5: memref<2x64x32xbf16, #tpu.memory_space<vmem>>, %arg6: memref<2x18x64xf32, #tpu.memory_space<vmem>>, %arg7: memref<2x8x64xf32, #tpu.memory_space<vmem>>) attributes {dimension_semantics = [], scalar_prefetch = 0 : i64, scratch_operands = 0 : i64, tpu.core_type = #tpu.core_type<tc>} {
    %c0 = arith.constant 0 : index
    %c0_0 = arith.constant 0 : index
    %0 = vector.load %arg0[%c0, %c0_0] : memref<8x64xf32, #tpu.memory_space<vmem>>, vector<8x64xf32>
    %1 = vector.extract_strided_slice %0 {offsets = [0, 0], sizes = [8, 32], strides = [1, 1]} : vector<8x64xf32> to vector<8x32xf32>
    %2 = vector.extract_strided_slice %0 {offsets = [0, 32], sizes = [8, 32], strides = [1, 1]} : vector<8x64xf32> to vector<8x32xf32>
    %3 = tpu.concatenate %1, %2 in 0 : vector<8x32xf32>, vector<8x32xf32> -> vector<16x32xf32>
    %c0_1 = arith.constant 0 : index
    %c0_2 = arith.constant 0 : index
    %4 = vector.load %arg1[%c0_1, %c0_2] : memref<8x64xf32, #tpu.memory_space<vmem>>, vector<8x64xf32>
    %5 = vector.extract_strided_slice %4 {offsets = [0, 0], sizes = [8, 32], strides = [1, 1]} : vector<8x64xf32> to vector<8x32xf32>
    %6 = vector.extract_strided_slice %4 {offsets = [0, 32], sizes = [8, 32], strides = [1, 1]} : vector<8x64xf32> to vector<8x32xf32>
    %7 = tpu.concatenate %5, %6 in 0 : vector<8x32xf32>, vector<8x32xf32> -> vector<16x32xf32>
    %c0_3 = arith.constant 0 : index
    %c0_4 = arith.constant 0 : index
    %8 = vector.load %arg2[%c0_3, %c0_4] : memref<16x64xf32, #tpu.memory_space<vmem>>, vector<16x64xf32>
    %9 = vector.extract_strided_slice %8 {offsets = [0, 0], sizes = [16, 32], strides = [1, 1]} : vector<16x64xf32> to vector<16x32xf32>
    %10 = vector.extract_strided_slice %8 {offsets = [0, 32], sizes = [16, 32], strides = [1, 1]} : vector<16x64xf32> to vector<16x32xf32>
    %11 = tpu.concatenate %9, %10 in 0 : vector<16x32xf32>, vector<16x32xf32> -> vector<32x32xf32>
    %c0_5 = arith.constant 0 : index
    %c0_6 = arith.constant 0 : index
    %12 = vector.load %arg3[%c0_5, %c0_6] : memref<16x64xf32, #tpu.memory_space<vmem>>, vector<16x64xf32>
    %13 = vector.extract_strided_slice %12 {offsets = [0, 0], sizes = [16, 32], strides = [1, 1]} : vector<16x64xf32> to vector<16x32xf32>
    %14 = vector.extract_strided_slice %12 {offsets = [0, 32], sizes = [16, 32], strides = [1, 1]} : vector<16x64xf32> to vector<16x32xf32>
    %15 = tpu.concatenate %13, %14 in 0 : vector<16x32xf32>, vector<16x32xf32> -> vector<32x32xf32>
    %16 = arith.addf %11, %15 : vector<32x32xf32>
    %17 = arith.truncf %11 : vector<32x32xf32> to vector<32x32xbf16>
    %18 = arith.truncf %16 : vector<32x32xf32> to vector<32x32xbf16>
    %c0_7 = arith.constant 0 : index
    %c0_8 = arith.constant 0 : index
    %c0_9 = arith.constant 0 : index
    %19 = vector.load %arg4[%c0_7, %c0_8, %c0_9] : memref<2x32x320xbf16, #tpu.memory_space<vmem>>, vector<1x32x320xbf16>
    %20 = vector.shape_cast %19 : vector<1x32x320xbf16> to vector<32x320xbf16>
    %c0_10 = arith.constant 0 : index
    %c0_11 = arith.constant 0 : index
    %c0_12 = arith.constant 0 : index
    %21 = vector.load %arg5[%c0_10, %c0_11, %c0_12] : memref<2x64x32xbf16, #tpu.memory_space<vmem>>, vector<1x64x32xbf16>
    %22 = vector.shape_cast %21 : vector<1x64x32xbf16> to vector<64x32xbf16>
    %c0_13 = arith.constant 0 : index
    %c0_14 = arith.constant 0 : index
    %c0_15 = arith.constant 0 : index
    %23 = vector.load %arg6[%c0_13, %c0_14, %c0_15] : memref<2x18x64xf32, #tpu.memory_space<vmem>>, vector<1x18x64xf32>
    %24 = vector.shape_cast %23 : vector<1x18x64xf32> to vector<18x64xf32>
    %25 = vector.extract_strided_slice %20 {offsets = [0, 0], sizes = [32, 64], strides = [1, 1]} : vector<32x320xbf16> to vector<32x64xbf16>
    %26 = vector.extract_strided_slice %20 {offsets = [0, 64], sizes = [32, 32], strides = [1, 1]} : vector<32x320xbf16> to vector<32x32xbf16>
    %27 = vector.extract_strided_slice %20 {offsets = [0, 96], sizes = [32, 32], strides = [1, 1]} : vector<32x320xbf16> to vector<32x32xbf16>
    %28 = vector.extract_strided_slice %20 {offsets = [0, 128], sizes = [32, 32], strides = [1, 1]} : vector<32x320xbf16> to vector<32x32xbf16>
    %29 = vector.extract_strided_slice %20 {offsets = [0, 160], sizes = [32, 32], strides = [1, 1]} : vector<32x320xbf16> to vector<32x32xbf16>
    %30 = vector.extract_strided_slice %20 {offsets = [0, 192], sizes = [32, 32], strides = [1, 1]} : vector<32x320xbf16> to vector<32x32xbf16>
    %31 = vector.extract_strided_slice %20 {offsets = [0, 224], sizes = [32, 32], strides = [1, 1]} : vector<32x320xbf16> to vector<32x32xbf16>
    %32 = vector.extract_strided_slice %20 {offsets = [0, 256], sizes = [32, 64], strides = [1, 1]} : vector<32x320xbf16> to vector<32x64xbf16>
    %33 = vector.extract_strided_slice %24 {offsets = [0, 0], sizes = [1, 32], strides = [1, 1]} : vector<18x64xf32> to vector<1x32xf32>
    %34 = vector.extract_strided_slice %24 {offsets = [1, 0], sizes = [1, 32], strides = [1, 1]} : vector<18x64xf32> to vector<1x32xf32>
    %35 = vector.extract_strided_slice %24 {offsets = [2, 0], sizes = [1, 32], strides = [1, 1]} : vector<18x64xf32> to vector<1x32xf32>
    %36 = vector.extract_strided_slice %24 {offsets = [3, 0], sizes = [1, 32], strides = [1, 1]} : vector<18x64xf32> to vector<1x32xf32>
    %37 = vector.extract_strided_slice %24 {offsets = [4, 0], sizes = [1, 32], strides = [1, 1]} : vector<18x64xf32> to vector<1x32xf32>
    %38 = vector.extract_strided_slice %24 {offsets = [5, 0], sizes = [1, 32], strides = [1, 1]} : vector<18x64xf32> to vector<1x32xf32>
    %39 = vector.extract_strided_slice %24 {offsets = [6, 0], sizes = [1, 32], strides = [1, 1]} : vector<18x64xf32> to vector<1x32xf32>
    %40 = vector.extract_strided_slice %24 {offsets = [7, 0], sizes = [1, 32], strides = [1, 1]} : vector<18x64xf32> to vector<1x32xf32>
    %41 = vector.extract_strided_slice %24 {offsets = [8, 0], sizes = [1, 64], strides = [1, 1]} : vector<18x64xf32> to vector<1x64xf32>
    %42 = vector.extract_strided_slice %24 {offsets = [9, 0], sizes = [1, 32], strides = [1, 1]} : vector<18x64xf32> to vector<1x32xf32>
    %43 = vector.extract_strided_slice %24 {offsets = [10, 0], sizes = [1, 32], strides = [1, 1]} : vector<18x64xf32> to vector<1x32xf32>
    %44 = vector.extract_strided_slice %24 {offsets = [11, 0], sizes = [1, 32], strides = [1, 1]} : vector<18x64xf32> to vector<1x32xf32>
    %45 = vector.extract_strided_slice %24 {offsets = [12, 0], sizes = [1, 32], strides = [1, 1]} : vector<18x64xf32> to vector<1x32xf32>
    %46 = vector.extract_strided_slice %24 {offsets = [13, 0], sizes = [1, 32], strides = [1, 1]} : vector<18x64xf32> to vector<1x32xf32>
    %47 = vector.extract_strided_slice %24 {offsets = [14, 0], sizes = [1, 32], strides = [1, 1]} : vector<18x64xf32> to vector<1x32xf32>
    %48 = vector.extract_strided_slice %24 {offsets = [15, 0], sizes = [1, 32], strides = [1, 1]} : vector<18x64xf32> to vector<1x32xf32>
    %49 = vector.extract_strided_slice %24 {offsets = [16, 0], sizes = [1, 32], strides = [1, 1]} : vector<18x64xf32> to vector<1x32xf32>
    %50 = vector.extract_strided_slice %24 {offsets = [17, 0], sizes = [1, 32], strides = [1, 1]} : vector<18x64xf32> to vector<1x32xf32>
    %51 = arith.addf %3, %7 : vector<16x32xf32>
    %52 = arith.truncf %51 : vector<16x32xf32> to vector<16x32xbf16>
    %cst = arith.constant dense<0.000000e+00> : vector<16x64xf32>
    %53 = tpu.matmul %52, %25, %cst {dimension_numbers = #tpu.dot_dimension_numbers<[1], [0], [0], [1], [0, 0, 1, 1], [], []>} : vector<16x32xbf16>, vector<32x64xbf16>, vector<16x64xf32> -> vector<16x64xf32>
    %54 = vector.extract_strided_slice %53 {offsets = [0, 0], sizes = [16, 32], strides = [1, 1]} : vector<16x64xf32> to vector<16x32xf32>
    %55 = vector.broadcast %33 : vector<1x32xf32> to vector<16x32xf32>
    %56 = arith.addf %54, %55 : vector<16x32xf32>
    %57 = vector.extract_strided_slice %53 {offsets = [0, 32], sizes = [16, 32], strides = [1, 1]} : vector<16x64xf32> to vector<16x32xf32>
    %58 = vector.broadcast %34 : vector<1x32xf32> to vector<16x32xf32>
    %59 = arith.addf %57, %58 : vector<16x32xf32>
    %60 = arith.truncf %3 : vector<16x32xf32> to vector<16x32xbf16>
    %cst_16 = arith.constant dense<0.000000e+00> : vector<16x32xf32>
    %61 = tpu.matmul %60, %26, %cst_16 {dimension_numbers = #tpu.dot_dimension_numbers<[1], [0], [0], [1], [0, 0, 1, 1], [], []>} : vector<16x32xbf16>, vector<32x32xbf16>, vector<16x32xf32> -> vector<16x32xf32>
    %62 = vector.broadcast %35 : vector<1x32xf32> to vector<16x32xf32>
    %63 = arith.addf %61, %62 : vector<16x32xf32>
    %64 = arith.truncf %56 : vector<16x32xf32> to vector<16x32xbf16>
    %65 = vector.extract_strided_slice %64 {offsets = [0, 0], sizes = [16, 8], strides = [1, 1]} : vector<16x32xbf16> to vector<16x8xbf16>
    %66 = vector.shape_cast %65 : vector<16x8xbf16> to vector<2x8x8xbf16>
    %67 = vector.extract_strided_slice %64 {offsets = [0, 8], sizes = [16, 8], strides = [1, 1]} : vector<16x32xbf16> to vector<16x8xbf16>
    %68 = vector.shape_cast %67 : vector<16x8xbf16> to vector<2x8x8xbf16>
    %69 = vector.extract_strided_slice %64 {offsets = [0, 16], sizes = [16, 8], strides = [1, 1]} : vector<16x32xbf16> to vector<16x8xbf16>
    %70 = vector.shape_cast %69 : vector<16x8xbf16> to vector<2x8x8xbf16>
    %71 = vector.extract_strided_slice %64 {offsets = [0, 24], sizes = [16, 8], strides = [1, 1]} : vector<16x32xbf16> to vector<16x8xbf16>
    %72 = vector.shape_cast %71 : vector<16x8xbf16> to vector<2x8x8xbf16>
    %73 = tpu.concatenate %66, %68, %70, %72 in 0 : vector<2x8x8xbf16>, vector<2x8x8xbf16>, vector<2x8x8xbf16>, vector<2x8x8xbf16> -> vector<8x8x8xbf16>
    %74 = arith.truncf %59 : vector<16x32xf32> to vector<16x32xbf16>
    %75 = vector.extract_strided_slice %74 {offsets = [0, 0], sizes = [16, 8], strides = [1, 1]} : vector<16x32xbf16> to vector<16x8xbf16>
    %76 = vector.shape_cast %75 : vector<16x8xbf16> to vector<2x8x8xbf16>
    %77 = vector.extract_strided_slice %74 {offsets = [0, 8], sizes = [16, 8], strides = [1, 1]} : vector<16x32xbf16> to vector<16x8xbf16>
    %78 = vector.shape_cast %77 : vector<16x8xbf16> to vector<2x8x8xbf16>
    %79 = vector.extract_strided_slice %74 {offsets = [0, 16], sizes = [16, 8], strides = [1, 1]} : vector<16x32xbf16> to vector<16x8xbf16>
    %80 = vector.shape_cast %79 : vector<16x8xbf16> to vector<2x8x8xbf16>
    %81 = vector.extract_strided_slice %74 {offsets = [0, 24], sizes = [16, 8], strides = [1, 1]} : vector<16x32xbf16> to vector<16x8xbf16>
    %82 = vector.shape_cast %81 : vector<16x8xbf16> to vector<2x8x8xbf16>
    %83 = tpu.concatenate %76, %78, %80, %82 in 0 : vector<2x8x8xbf16>, vector<2x8x8xbf16>, vector<2x8x8xbf16>, vector<2x8x8xbf16> -> vector<8x8x8xbf16>
    %84 = arith.truncf %63 : vector<16x32xf32> to vector<16x32xbf16>
    %85 = vector.extract_strided_slice %84 {offsets = [0, 0], sizes = [16, 8], strides = [1, 1]} : vector<16x32xbf16> to vector<16x8xbf16>
    %86 = vector.shape_cast %85 : vector<16x8xbf16> to vector<2x8x8xbf16>
    %87 = vector.extract_strided_slice %84 {offsets = [0, 8], sizes = [16, 8], strides = [1, 1]} : vector<16x32xbf16> to vector<16x8xbf16>
    %88 = vector.shape_cast %87 : vector<16x8xbf16> to vector<2x8x8xbf16>
    %89 = vector.extract_strided_slice %84 {offsets = [0, 16], sizes = [16, 8], strides = [1, 1]} : vector<16x32xbf16> to vector<16x8xbf16>
    %90 = vector.shape_cast %89 : vector<16x8xbf16> to vector<2x8x8xbf16>
    %91 = vector.extract_strided_slice %84 {offsets = [0, 24], sizes = [16, 8], strides = [1, 1]} : vector<16x32xbf16> to vector<16x8xbf16>
    %92 = vector.shape_cast %91 : vector<16x8xbf16> to vector<2x8x8xbf16>
    %93 = tpu.concatenate %86, %88, %90, %92 in 0 : vector<2x8x8xbf16>, vector<2x8x8xbf16>, vector<2x8x8xbf16>, vector<2x8x8xbf16> -> vector<8x8x8xbf16>
    "tpu.trace_start"() <{level = 10 : i32, message = "zqd,zkd->zqk"}> : () -> ()
    %cst_17 = arith.constant dense<0.000000e+00> : vector<8x8x8xf32>
    %94 = tpu.matmul %73, %83, %cst_17 {dimension_numbers = #tpu.dot_dimension_numbers<[2], [2], [1], [1], [0, 0, 0, 1, 1, 1], [0], [0]>} : vector<8x8x8xbf16>, vector<8x8x8xbf16>, vector<8x8x8xf32> -> vector<8x8x8xf32>
    "tpu.trace_stop"() : () -> ()
    %cst_18 = arith.constant 0.353553385 : f32
    %95 = vector.broadcast %cst_18 : f32 to vector<8x8x8xf32>
    %96 = arith.mulf %94, %95 : vector<8x8x8xf32>
    %cst_19 = arith.constant dense<0xFF800000> : vector<8x8xf32>
    %97 = vector.multi_reduction <maximumf>, %96, %cst_19 [2] : vector<8x8x8xf32> to vector<8x8xf32>
    %98 = vector.shape_cast %97 : vector<8x8xf32> to vector<8x8x1xf32>
    %99 = vector.broadcast %98 : vector<8x8x1xf32> to vector<8x8x8xf32>
    %100 = arith.subf %96, %99 : vector<8x8x8xf32>
    %101 = math.exp %100 : vector<8x8x8xf32>
    %cst_20 = arith.constant dense<0.000000e+00> : vector<8x8xf32>
    %102 = vector.multi_reduction <add>, %101, %cst_20 [2] : vector<8x8x8xf32> to vector<8x8xf32>
    %103 = vector.shape_cast %102 : vector<8x8xf32> to vector<8x8x1xf32>
    %104 = tpu.reciprocal %103 {approx = true} : vector<8x8x1xf32> -> vector<8x8x1xf32>
    %105 = vector.broadcast %104 : vector<8x8x1xf32> to vector<8x8x8xf32>
    %106 = arith.mulf %101, %105 : vector<8x8x8xf32>
    %107 = arith.truncf %106 : vector<8x8x8xf32> to vector<8x8x8xbf16>
    "tpu.trace_start"() <{level = 10 : i32, message = "zqk,zkd->zqd"}> : () -> ()
    %cst_21 = arith.constant dense<0.000000e+00> : vector<8x8x8xf32>
    %108 = tpu.matmul %107, %93, %cst_21 {dimension_numbers = #tpu.dot_dimension_numbers<[2], [1], [1], [2], [0, 0, 0, 1, 1, 2], [0], [0]>} : vector<8x8x8xbf16>, vector<8x8x8xbf16>, vector<8x8x8xf32> -> vector<8x8x8xf32>
    "tpu.trace_stop"() : () -> ()
    %109 = vector.extract_strided_slice %108 {offsets = [0, 0, 0], sizes = [2, 8, 8], strides = [1, 1, 1]} : vector<8x8x8xf32> to vector<2x8x8xf32>
    %110 = vector.shape_cast %109 : vector<2x8x8xf32> to vector<16x8xf32>
    %111 = vector.extract_strided_slice %108 {offsets = [2, 0, 0], sizes = [2, 8, 8], strides = [1, 1, 1]} : vector<8x8x8xf32> to vector<2x8x8xf32>
    %112 = vector.shape_cast %111 : vector<2x8x8xf32> to vector<16x8xf32>
    %113 = vector.extract_strided_slice %108 {offsets = [4, 0, 0], sizes = [2, 8, 8], strides = [1, 1, 1]} : vector<8x8x8xf32> to vector<2x8x8xf32>
    %114 = vector.shape_cast %113 : vector<2x8x8xf32> to vector<16x8xf32>
    %115 = vector.extract_strided_slice %108 {offsets = [6, 0, 0], sizes = [2, 8, 8], strides = [1, 1, 1]} : vector<8x8x8xf32> to vector<2x8x8xf32>
    %116 = vector.shape_cast %115 : vector<2x8x8xf32> to vector<16x8xf32>
    %117 = tpu.concatenate %110, %112, %114, %116 in 1 : vector<16x8xf32>, vector<16x8xf32>, vector<16x8xf32>, vector<16x8xf32> -> vector<16x32xf32>
    %118 = arith.truncf %117 : vector<16x32xf32> to vector<16x32xbf16>
    %cst_22 = arith.constant dense<0.000000e+00> : vector<16x32xf32>
    %119 = tpu.matmul %118, %27, %cst_22 {dimension_numbers = #tpu.dot_dimension_numbers<[1], [0], [0], [1], [0, 0, 1, 1], [], []>} : vector<16x32xbf16>, vector<32x32xbf16>, vector<16x32xf32> -> vector<16x32xf32>
    %120 = vector.broadcast %36 : vector<1x32xf32> to vector<16x32xf32>
    %121 = arith.addf %119, %120 : vector<16x32xf32>
    %122 = arith.addf %3, %121 : vector<16x32xf32>
    %cst_23 = arith.constant dense<0.000000e+00> : vector<16xf32>
    %123 = vector.multi_reduction <add>, %122, %cst_23 [1] : vector<16x32xf32> to vector<16xf32>
    %124 = vector.shape_cast %123 : vector<16xf32> to vector<16x1xf32>
    %cst_24 = arith.constant 3.200000e+01 : f32
    %125 = vector.broadcast %cst_24 : f32 to vector<16x1xf32>
    %126 = arith.divf %124, %125 : vector<16x1xf32>
    %127 = vector.broadcast %126 : vector<16x1xf32> to vector<16x32xf32>
    %128 = arith.subf %122, %127 : vector<16x32xf32>
    %129 = arith.mulf %128, %128 : vector<16x32xf32>
    %cst_25 = arith.constant dense<0.000000e+00> : vector<16xf32>
    %130 = vector.multi_reduction <add>, %129, %cst_25 [1] : vector<16x32xf32> to vector<16xf32>
    %131 = vector.shape_cast %130 : vector<16xf32> to vector<16x1xf32>
    %cst_26 = arith.constant 3.200000e+01 : f32
    %132 = vector.broadcast %cst_26 : f32 to vector<16x1xf32>
    %133 = arith.divf %131, %132 : vector<16x1xf32>
    %134 = vector.broadcast %126 : vector<16x1xf32> to vector<16x32xf32>
    %135 = arith.subf %122, %134 : vector<16x32xf32>
    %cst_27 = arith.constant 9.99999974E-6 : f32
    %136 = vector.broadcast %cst_27 : f32 to vector<16x1xf32>
    %137 = arith.addf %133, %136 : vector<16x1xf32>
    %138 = math.rsqrt %137 : vector<16x1xf32>
    %139 = vector.broadcast %138 : vector<16x1xf32> to vector<16x32xf32>
    %140 = arith.mulf %135, %139 : vector<16x32xf32>
    %141 = vector.broadcast %43 : vector<1x32xf32> to vector<16x32xf32>
    %142 = arith.mulf %140, %141 : vector<16x32xf32>
    %143 = vector.broadcast %44 : vector<1x32xf32> to vector<16x32xf32>
    %144 = arith.addf %142, %143 : vector<16x32xf32>
    %145 = arith.addf %144, %7 : vector<16x32xf32>
    %146 = arith.truncf %145 : vector<16x32xf32> to vector<16x32xbf16>
    %cst_28 = arith.constant dense<0.000000e+00> : vector<16x32xf32>
    %147 = tpu.matmul %146, %28, %cst_28 {dimension_numbers = #tpu.dot_dimension_numbers<[1], [0], [0], [1], [0, 0, 1, 1], [], []>} : vector<16x32xbf16>, vector<32x32xbf16>, vector<16x32xf32> -> vector<16x32xf32>
    %148 = vector.broadcast %37 : vector<1x32xf32> to vector<16x32xf32>
    %149 = arith.addf %147, %148 : vector<16x32xf32>
    %cst_29 = arith.constant dense<0.000000e+00> : vector<32x32xf32>
    %150 = tpu.matmul %18, %29, %cst_29 {dimension_numbers = #tpu.dot_dimension_numbers<[1], [0], [0], [1], [0, 0, 1, 1], [], []>} : vector<32x32xbf16>, vector<32x32xbf16>, vector<32x32xf32> -> vector<32x32xf32>
    %151 = vector.broadcast %38 : vector<1x32xf32> to vector<32x32xf32>
    %152 = arith.addf %150, %151 : vector<32x32xf32>
    %cst_30 = arith.constant dense<0.000000e+00> : vector<32x32xf32>
    %153 = tpu.matmul %17, %30, %cst_30 {dimension_numbers = #tpu.dot_dimension_numbers<[1], [0], [0], [1], [0, 0, 1, 1], [], []>} : vector<32x32xbf16>, vector<32x32xbf16>, vector<32x32xf32> -> vector<32x32xf32>
    %154 = vector.broadcast %39 : vector<1x32xf32> to vector<32x32xf32>
    %155 = arith.addf %153, %154 : vector<32x32xf32>
    %156 = arith.truncf %149 : vector<16x32xf32> to vector<16x32xbf16>
    %157 = vector.extract_strided_slice %156 {offsets = [0, 0], sizes = [16, 8], strides = [1, 1]} : vector<16x32xbf16> to vector<16x8xbf16>
    %158 = vector.shape_cast %157 : vector<16x8xbf16> to vector<2x8x8xbf16>
    %159 = vector.extract_strided_slice %156 {offsets = [0, 8], sizes = [16, 8], strides = [1, 1]} : vector<16x32xbf16> to vector<16x8xbf16>
    %160 = vector.shape_cast %159 : vector<16x8xbf16> to vector<2x8x8xbf16>
    %161 = vector.extract_strided_slice %156 {offsets = [0, 16], sizes = [16, 8], strides = [1, 1]} : vector<16x32xbf16> to vector<16x8xbf16>
    %162 = vector.shape_cast %161 : vector<16x8xbf16> to vector<2x8x8xbf16>
    %163 = vector.extract_strided_slice %156 {offsets = [0, 24], sizes = [16, 8], strides = [1, 1]} : vector<16x32xbf16> to vector<16x8xbf16>
    %164 = vector.shape_cast %163 : vector<16x8xbf16> to vector<2x8x8xbf16>
    %165 = tpu.concatenate %158, %160, %162, %164 in 0 : vector<2x8x8xbf16>, vector<2x8x8xbf16>, vector<2x8x8xbf16>, vector<2x8x8xbf16> -> vector<8x8x8xbf16>
    %166 = arith.truncf %152 : vector<32x32xf32> to vector<32x32xbf16>
    %167 = vector.extract_strided_slice %166 {offsets = [0, 0], sizes = [32, 8], strides = [1, 1]} : vector<32x32xbf16> to vector<32x8xbf16>
    %168 = vector.shape_cast %167 : vector<32x8xbf16> to vector<2x16x8xbf16>
    %169 = vector.extract_strided_slice %166 {offsets = [0, 8], sizes = [32, 8], strides = [1, 1]} : vector<32x32xbf16> to vector<32x8xbf16>
    %170 = vector.shape_cast %169 : vector<32x8xbf16> to vector<2x16x8xbf16>
    %171 = vector.extract_strided_slice %166 {offsets = [0, 16], sizes = [32, 8], strides = [1, 1]} : vector<32x32xbf16> to vector<32x8xbf16>
    %172 = vector.shape_cast %171 : vector<32x8xbf16> to vector<2x16x8xbf16>
    %173 = vector.extract_strided_slice %166 {offsets = [0, 24], sizes = [32, 8], strides = [1, 1]} : vector<32x32xbf16> to vector<32x8xbf16>
    %174 = vector.shape_cast %173 : vector<32x8xbf16> to vector<2x16x8xbf16>
    %175 = tpu.concatenate %168, %170, %172, %174 in 0 : vector<2x16x8xbf16>, vector<2x16x8xbf16>, vector<2x16x8xbf16>, vector<2x16x8xbf16> -> vector<8x16x8xbf16>
    %176 = arith.truncf %155 : vector<32x32xf32> to vector<32x32xbf16>
    %177 = vector.extract_strided_slice %176 {offsets = [0, 0], sizes = [32, 8], strides = [1, 1]} : vector<32x32xbf16> to vector<32x8xbf16>
    %178 = vector.shape_cast %177 : vector<32x8xbf16> to vector<2x16x8xbf16>
    %179 = vector.extract_strided_slice %176 {offsets = [0, 8], sizes = [32, 8], strides = [1, 1]} : vector<32x32xbf16> to vector<32x8xbf16>
    %180 = vector.shape_cast %179 : vector<32x8xbf16> to vector<2x16x8xbf16>
    %181 = vector.extract_strided_slice %176 {offsets = [0, 16], sizes = [32, 8], strides = [1, 1]} : vector<32x32xbf16> to vector<32x8xbf16>
    %182 = vector.shape_cast %181 : vector<32x8xbf16> to vector<2x16x8xbf16>
    %183 = vector.extract_strided_slice %176 {offsets = [0, 24], sizes = [32, 8], strides = [1, 1]} : vector<32x32xbf16> to vector<32x8xbf16>
    %184 = vector.shape_cast %183 : vector<32x8xbf16> to vector<2x16x8xbf16>
    %185 = tpu.concatenate %178, %180, %182, %184 in 0 : vector<2x16x8xbf16>, vector<2x16x8xbf16>, vector<2x16x8xbf16>, vector<2x16x8xbf16> -> vector<8x16x8xbf16>
    "tpu.trace_start"() <{level = 10 : i32, message = "zqd,zkd->zqk"}> : () -> ()
    %cst_31 = arith.constant dense<0.000000e+00> : vector<8x8x16xf32>
    %186 = tpu.matmul %165, %175, %cst_31 {dimension_numbers = #tpu.dot_dimension_numbers<[2], [2], [1], [1], [0, 0, 0, 1, 1, 1], [0], [0]>} : vector<8x8x8xbf16>, vector<8x16x8xbf16>, vector<8x8x16xf32> -> vector<8x8x16xf32>
    "tpu.trace_stop"() : () -> ()
    %cst_32 = arith.constant 0.353553385 : f32
    %187 = vector.broadcast %cst_32 : f32 to vector<8x8x16xf32>
    %188 = arith.mulf %186, %187 : vector<8x8x16xf32>
    %cst_33 = arith.constant dense<0xFF800000> : vector<8x8xf32>
    %189 = vector.multi_reduction <maximumf>, %188, %cst_33 [2] : vector<8x8x16xf32> to vector<8x8xf32>
    %190 = vector.shape_cast %189 : vector<8x8xf32> to vector<8x8x1xf32>
    %191 = vector.broadcast %190 : vector<8x8x1xf32> to vector<8x8x16xf32>
    %192 = arith.subf %188, %191 : vector<8x8x16xf32>
    %193 = math.exp %192 : vector<8x8x16xf32>
    %cst_34 = arith.constant dense<0.000000e+00> : vector<8x8xf32>
    %194 = vector.multi_reduction <add>, %193, %cst_34 [2] : vector<8x8x16xf32> to vector<8x8xf32>
    %195 = vector.shape_cast %194 : vector<8x8xf32> to vector<8x8x1xf32>
    %196 = tpu.reciprocal %195 {approx = true} : vector<8x8x1xf32> -> vector<8x8x1xf32>
    %197 = vector.broadcast %196 : vector<8x8x1xf32> to vector<8x8x16xf32>
    %198 = arith.mulf %193, %197 : vector<8x8x16xf32>
    %199 = arith.truncf %198 : vector<8x8x16xf32> to vector<8x8x16xbf16>
    "tpu.trace_start"() <{level = 10 : i32, message = "zqk,zkd->zqd"}> : () -> ()
    %cst_35 = arith.constant dense<0.000000e+00> : vector<8x8x8xf32>
    %200 = tpu.matmul %199, %185, %cst_35 {dimension_numbers = #tpu.dot_dimension_numbers<[2], [1], [1], [2], [0, 0, 0, 1, 1, 2], [0], [0]>} : vector<8x8x16xbf16>, vector<8x16x8xbf16>, vector<8x8x8xf32> -> vector<8x8x8xf32>
    "tpu.trace_stop"() : () -> ()
    %201 = vector.extract_strided_slice %200 {offsets = [0, 0, 0], sizes = [2, 8, 8], strides = [1, 1, 1]} : vector<8x8x8xf32> to vector<2x8x8xf32>
    %202 = vector.shape_cast %201 : vector<2x8x8xf32> to vector<16x8xf32>
    %203 = vector.extract_strided_slice %200 {offsets = [2, 0, 0], sizes = [2, 8, 8], strides = [1, 1, 1]} : vector<8x8x8xf32> to vector<2x8x8xf32>
    %204 = vector.shape_cast %203 : vector<2x8x8xf32> to vector<16x8xf32>
    %205 = vector.extract_strided_slice %200 {offsets = [4, 0, 0], sizes = [2, 8, 8], strides = [1, 1, 1]} : vector<8x8x8xf32> to vector<2x8x8xf32>
    %206 = vector.shape_cast %205 : vector<2x8x8xf32> to vector<16x8xf32>
    %207 = vector.extract_strided_slice %200 {offsets = [6, 0, 0], sizes = [2, 8, 8], strides = [1, 1, 1]} : vector<8x8x8xf32> to vector<2x8x8xf32>
    %208 = vector.shape_cast %207 : vector<2x8x8xf32> to vector<16x8xf32>
    %209 = tpu.concatenate %202, %204, %206, %208 in 1 : vector<16x8xf32>, vector<16x8xf32>, vector<16x8xf32>, vector<16x8xf32> -> vector<16x32xf32>
    %210 = arith.truncf %209 : vector<16x32xf32> to vector<16x32xbf16>
    %cst_36 = arith.constant dense<0.000000e+00> : vector<16x32xf32>
    %211 = tpu.matmul %210, %31, %cst_36 {dimension_numbers = #tpu.dot_dimension_numbers<[1], [0], [0], [1], [0, 0, 1, 1], [], []>} : vector<16x32xbf16>, vector<32x32xbf16>, vector<16x32xf32> -> vector<16x32xf32>
    %212 = vector.broadcast %40 : vector<1x32xf32> to vector<16x32xf32>
    %213 = arith.addf %211, %212 : vector<16x32xf32>
    %214 = arith.addf %144, %213 : vector<16x32xf32>
    %cst_37 = arith.constant dense<0.000000e+00> : vector<16xf32>
    %215 = vector.multi_reduction <add>, %214, %cst_37 [1] : vector<16x32xf32> to vector<16xf32>
    %216 = vector.shape_cast %215 : vector<16xf32> to vector<16x1xf32>
    %cst_38 = arith.constant 3.200000e+01 : f32
    %217 = vector.broadcast %cst_38 : f32 to vector<16x1xf32>
    %218 = arith.divf %216, %217 : vector<16x1xf32>
    %219 = vector.broadcast %218 : vector<16x1xf32> to vector<16x32xf32>
    %220 = arith.subf %214, %219 : vector<16x32xf32>
    %221 = arith.mulf %220, %220 : vector<16x32xf32>
    %cst_39 = arith.constant dense<0.000000e+00> : vector<16xf32>
    %222 = vector.multi_reduction <add>, %221, %cst_39 [1] : vector<16x32xf32> to vector<16xf32>
    %223 = vector.shape_cast %222 : vector<16xf32> to vector<16x1xf32>
    %cst_40 = arith.constant 3.200000e+01 : f32
    %224 = vector.broadcast %cst_40 : f32 to vector<16x1xf32>
    %225 = arith.divf %223, %224 : vector<16x1xf32>
    %226 = vector.broadcast %218 : vector<16x1xf32> to vector<16x32xf32>
    %227 = arith.subf %214, %226 : vector<16x32xf32>
    %cst_41 = arith.constant 9.99999974E-6 : f32
    %228 = vector.broadcast %cst_41 : f32 to vector<16x1xf32>
    %229 = arith.addf %225, %228 : vector<16x1xf32>
    %230 = math.rsqrt %229 : vector<16x1xf32>
    %231 = vector.broadcast %230 : vector<16x1xf32> to vector<16x32xf32>
    %232 = arith.mulf %227, %231 : vector<16x32xf32>
    %233 = vector.broadcast %45 : vector<1x32xf32> to vector<16x32xf32>
    %234 = arith.mulf %232, %233 : vector<16x32xf32>
    %235 = vector.broadcast %46 : vector<1x32xf32> to vector<16x32xf32>
    %236 = arith.addf %234, %235 : vector<16x32xf32>
    %237 = arith.truncf %236 : vector<16x32xf32> to vector<16x32xbf16>
    %cst_42 = arith.constant dense<0.000000e+00> : vector<16x64xf32>
    %238 = tpu.matmul %237, %32, %cst_42 {dimension_numbers = #tpu.dot_dimension_numbers<[1], [0], [0], [1], [0, 0, 1, 1], [], []>} : vector<16x32xbf16>, vector<32x64xbf16>, vector<16x64xf32> -> vector<16x64xf32>
    %239 = vector.broadcast %41 : vector<1x64xf32> to vector<16x64xf32>
    %240 = arith.addf %238, %239 : vector<16x64xf32>
    %cst_43 = arith.constant 0.000000e+00 : f32
    %241 = vector.broadcast %cst_43 : f32 to vector<16x64xf32>
    %242 = arith.maximumf %240, %241 : vector<16x64xf32>
    %243 = arith.truncf %242 : vector<16x64xf32> to vector<16x64xbf16>
    %cst_44 = arith.constant dense<0.000000e+00> : vector<16x32xf32>
    %244 = tpu.matmul %243, %22, %cst_44 {dimension_numbers = #tpu.dot_dimension_numbers<[1], [0], [0], [1], [0, 0, 1, 1], [], []>} : vector<16x64xbf16>, vector<64x32xbf16>, vector<16x32xf32> -> vector<16x32xf32>
    %245 = vector.broadcast %42 : vector<1x32xf32> to vector<16x32xf32>
    %246 = arith.addf %244, %245 : vector<16x32xf32>
    %247 = arith.addf %236, %246 : vector<16x32xf32>
    %cst_45 = arith.constant dense<0.000000e+00> : vector<16xf32>
    %248 = vector.multi_reduction <add>, %247, %cst_45 [1] : vector<16x32xf32> to vector<16xf32>
    %249 = vector.shape_cast %248 : vector<16xf32> to vector<16x1xf32>
    %cst_46 = arith.constant 3.200000e+01 : f32
    %250 = vector.broadcast %cst_46 : f32 to vector<16x1xf32>
    %251 = arith.divf %249, %250 : vector<16x1xf32>
    %252 = vector.broadcast %251 : vector<16x1xf32> to vector<16x32xf32>
    %253 = arith.subf %247, %252 : vector<16x32xf32>
    %254 = arith.mulf %253, %253 : vector<16x32xf32>
    %cst_47 = arith.constant dense<0.000000e+00> : vector<16xf32>
    %255 = vector.multi_reduction <add>, %254, %cst_47 [1] : vector<16x32xf32> to vector<16xf32>
    %256 = vector.shape_cast %255 : vector<16xf32> to vector<16x1xf32>
    %cst_48 = arith.constant 3.200000e+01 : f32
    %257 = vector.broadcast %cst_48 : f32 to vector<16x1xf32>
    %258 = arith.divf %256, %257 : vector<16x1xf32>
    %259 = vector.broadcast %251 : vector<16x1xf32> to vector<16x32xf32>
    %260 = arith.subf %247, %259 : vector<16x32xf32>
    %cst_49 = arith.constant 9.99999974E-6 : f32
    %261 = vector.broadcast %cst_49 : f32 to vector<16x1xf32>
    %262 = arith.addf %258, %261 : vector<16x1xf32>
    %263 = math.rsqrt %262 : vector<16x1xf32>
    %264 = vector.broadcast %263 : vector<16x1xf32> to vector<16x32xf32>
    %265 = arith.mulf %260, %264 : vector<16x32xf32>
    %266 = vector.broadcast %47 : vector<1x32xf32> to vector<16x32xf32>
    %267 = arith.mulf %265, %266 : vector<16x32xf32>
    %268 = vector.broadcast %48 : vector<1x32xf32> to vector<16x32xf32>
    %269 = arith.addf %267, %268 : vector<16x32xf32>
    %cst_50 = arith.constant dense<0.000000e+00> : vector<16xf32>
    %270 = vector.multi_reduction <add>, %269, %cst_50 [1] : vector<16x32xf32> to vector<16xf32>
    %271 = vector.shape_cast %270 : vector<16xf32> to vector<16x1xf32>
    %cst_51 = arith.constant 3.200000e+01 : f32
    %272 = vector.broadcast %cst_51 : f32 to vector<16x1xf32>
    %273 = arith.divf %271, %272 : vector<16x1xf32>
    %274 = vector.broadcast %273 : vector<16x1xf32> to vector<16x32xf32>
    %275 = arith.subf %269, %274 : vector<16x32xf32>
    %276 = arith.mulf %275, %275 : vector<16x32xf32>
    %cst_52 = arith.constant dense<0.000000e+00> : vector<16xf32>
    %277 = vector.multi_reduction <add>, %276, %cst_52 [1] : vector<16x32xf32> to vector<16xf32>
    %278 = vector.shape_cast %277 : vector<16xf32> to vector<16x1xf32>
    %cst_53 = arith.constant 3.200000e+01 : f32
    %279 = vector.broadcast %cst_53 : f32 to vector<16x1xf32>
    %280 = arith.divf %278, %279 : vector<16x1xf32>
    %281 = vector.broadcast %273 : vector<16x1xf32> to vector<16x32xf32>
    %282 = arith.subf %269, %281 : vector<16x32xf32>
    %cst_54 = arith.constant 9.99999974E-6 : f32
    %283 = vector.broadcast %cst_54 : f32 to vector<16x1xf32>
    %284 = arith.addf %280, %283 : vector<16x1xf32>
    %285 = math.rsqrt %284 : vector<16x1xf32>
    %286 = vector.broadcast %285 : vector<16x1xf32> to vector<16x32xf32>
    %287 = arith.mulf %282, %286 : vector<16x32xf32>
    %288 = vector.broadcast %49 : vector<1x32xf32> to vector<16x32xf32>
    %289 = arith.mulf %287, %288 : vector<16x32xf32>
    %290 = vector.broadcast %50 : vector<1x32xf32> to vector<16x32xf32>
    %291 = arith.addf %289, %290 : vector<16x32xf32>
    %292 = vector.extract_strided_slice %291 {offsets = [0, 0], sizes = [8, 32], strides = [1, 1]} : vector<16x32xf32> to vector<8x32xf32>
    %293 = vector.extract_strided_slice %291 {offsets = [8, 0], sizes = [8, 32], strides = [1, 1]} : vector<16x32xf32> to vector<8x32xf32>
    %294 = tpu.concatenate %292, %293 in 1 : vector<8x32xf32>, vector<8x32xf32> -> vector<8x64xf32>
    %c0_55 = arith.constant 0 : index
    %c0_56 = arith.constant 0 : index
    %c0_57 = arith.constant 0 : index
    %295 = vector.load %arg7[%c0_55, %c0_56, %c0_57] : memref<2x8x64xf32, #tpu.memory_space<vmem>>, vector<1x8x64xf32>
    %296 = vector.shape_cast %295 : vector<1x8x64xf32> to vector<8x64xf32>
    %297 = vector.shape_cast %294 : vector<8x64xf32> to vector<1x8x64xf32>
    tpu.vector_store %arg7[%c0_55, %c0_56, %c0_57], %297 {strides = array<i32>} : memref<2x8x64xf32, #tpu.memory_space<vmem>>, vector<1x8x64xf32>,
    %c1 = arith.constant 1 : index
    %c0_58 = arith.constant 0 : index
    %c0_59 = arith.constant 0 : index
    %298 = vector.load %arg4[%c1, %c0_58, %c0_59] : memref<2x32x320xbf16, #tpu.memory_space<vmem>>, vector<1x32x320xbf16>
    %299 = vector.shape_cast %298 : vector<1x32x320xbf16> to vector<32x320xbf16>
    %c1_60 = arith.constant 1 : index
    %c0_61 = arith.constant 0 : index
    %c0_62 = arith.constant 0 : index
    %300 = vector.load %arg5[%c1_60, %c0_61, %c0_62] : memref<2x64x32xbf16, #tpu.memory_space<vmem>>, vector<1x64x32xbf16>
    %301 = vector.shape_cast %300 : vector<1x64x32xbf16> to vector<64x32xbf16>
    %c1_63 = arith.constant 1 : index
    %c0_64 = arith.constant 0 : index
    %c0_65 = arith.constant 0 : index
    %302 = vector.load %arg6[%c1_63, %c0_64, %c0_65] : memref<2x18x64xf32, #tpu.memory_space<vmem>>, vector<1x18x64xf32>
    %303 = vector.shape_cast %302 : vector<1x18x64xf32> to vector<18x64xf32>
    %304 = vector.extract_strided_slice %299 {offsets = [0, 0], sizes = [32, 64], strides = [1, 1]} : vector<32x320xbf16> to vector<32x64xbf16>
    %305 = vector.extract_strided_slice %299 {offsets = [0, 64], sizes = [32, 32], strides = [1, 1]} : vector<32x320xbf16> to vector<32x32xbf16>
    %306 = vector.extract_strided_slice %299 {offsets = [0, 96], sizes = [32, 32], strides = [1, 1]} : vector<32x320xbf16> to vector<32x32xbf16>
    %307 = vector.extract_strided_slice %299 {offsets = [0, 128], sizes = [32, 32], strides = [1, 1]} : vector<32x320xbf16> to vector<32x32xbf16>
    %308 = vector.extract_strided_slice %299 {offsets = [0, 160], sizes = [32, 32], strides = [1, 1]} : vector<32x320xbf16> to vector<32x32xbf16>
    %309 = vector.extract_strided_slice %299 {offsets = [0, 192], sizes = [32, 32], strides = [1, 1]} : vector<32x320xbf16> to vector<32x32xbf16>
    %310 = vector.extract_strided_slice %299 {offsets = [0, 224], sizes = [32, 32], strides = [1, 1]} : vector<32x320xbf16> to vector<32x32xbf16>
    %311 = vector.extract_strided_slice %299 {offsets = [0, 256], sizes = [32, 64], strides = [1, 1]} : vector<32x320xbf16> to vector<32x64xbf16>
    %312 = vector.extract_strided_slice %303 {offsets = [0, 0], sizes = [1, 32], strides = [1, 1]} : vector<18x64xf32> to vector<1x32xf32>
    %313 = vector.extract_strided_slice %303 {offsets = [1, 0], sizes = [1, 32], strides = [1, 1]} : vector<18x64xf32> to vector<1x32xf32>
    %314 = vector.extract_strided_slice %303 {offsets = [2, 0], sizes = [1, 32], strides = [1, 1]} : vector<18x64xf32> to vector<1x32xf32>
    %315 = vector.extract_strided_slice %303 {offsets = [3, 0], sizes = [1, 32], strides = [1, 1]} : vector<18x64xf32> to vector<1x32xf32>
    %316 = vector.extract_strided_slice %303 {offsets = [4, 0], sizes = [1, 32], strides = [1, 1]} : vector<18x64xf32> to vector<1x32xf32>
    %317 = vector.extract_strided_slice %303 {offsets = [5, 0], sizes = [1, 32], strides = [1, 1]} : vector<18x64xf32> to vector<1x32xf32>
    %318 = vector.extract_strided_slice %303 {offsets = [6, 0], sizes = [1, 32], strides = [1, 1]} : vector<18x64xf32> to vector<1x32xf32>
    %319 = vector.extract_strided_slice %303 {offsets = [7, 0], sizes = [1, 32], strides = [1, 1]} : vector<18x64xf32> to vector<1x32xf32>
    %320 = vector.extract_strided_slice %303 {offsets = [8, 0], sizes = [1, 64], strides = [1, 1]} : vector<18x64xf32> to vector<1x64xf32>
    %321 = vector.extract_strided_slice %303 {offsets = [9, 0], sizes = [1, 32], strides = [1, 1]} : vector<18x64xf32> to vector<1x32xf32>
    %322 = vector.extract_strided_slice %303 {offsets = [10, 0], sizes = [1, 32], strides = [1, 1]} : vector<18x64xf32> to vector<1x32xf32>
    %323 = vector.extract_strided_slice %303 {offsets = [11, 0], sizes = [1, 32], strides = [1, 1]} : vector<18x64xf32> to vector<1x32xf32>
    %324 = vector.extract_strided_slice %303 {offsets = [12, 0], sizes = [1, 32], strides = [1, 1]} : vector<18x64xf32> to vector<1x32xf32>
    %325 = vector.extract_strided_slice %303 {offsets = [13, 0], sizes = [1, 32], strides = [1, 1]} : vector<18x64xf32> to vector<1x32xf32>
    %326 = vector.extract_strided_slice %303 {offsets = [14, 0], sizes = [1, 32], strides = [1, 1]} : vector<18x64xf32> to vector<1x32xf32>
    %327 = vector.extract_strided_slice %303 {offsets = [15, 0], sizes = [1, 32], strides = [1, 1]} : vector<18x64xf32> to vector<1x32xf32>
    %328 = vector.extract_strided_slice %303 {offsets = [16, 0], sizes = [1, 32], strides = [1, 1]} : vector<18x64xf32> to vector<1x32xf32>
    %329 = vector.extract_strided_slice %303 {offsets = [17, 0], sizes = [1, 32], strides = [1, 1]} : vector<18x64xf32> to vector<1x32xf32>
    %330 = arith.addf %269, %7 : vector<16x32xf32>
    %331 = arith.truncf %330 : vector<16x32xf32> to vector<16x32xbf16>
    %cst_66 = arith.constant dense<0.000000e+00> : vector<16x64xf32>
    %332 = tpu.matmul %331, %304, %cst_66 {dimension_numbers = #tpu.dot_dimension_numbers<[1], [0], [0], [1], [0, 0, 1, 1], [], []>} : vector<16x32xbf16>, vector<32x64xbf16>, vector<16x64xf32> -> vector<16x64xf32>
    %333 = vector.extract_strided_slice %332 {offsets = [0, 0], sizes = [16, 32], strides = [1, 1]} : vector<16x64xf32> to vector<16x32xf32>
    %334 = vector.broadcast %312 : vector<1x32xf32> to vector<16x32xf32>
    %335 = arith.addf %333, %334 : vector<16x32xf32>
    %336 = vector.extract_strided_slice %332 {offsets = [0, 32], sizes = [16, 32], strides = [1, 1]} : vector<16x64xf32> to vector<16x32xf32>
    %337 = vector.broadcast %313 : vector<1x32xf32> to vector<16x32xf32>
    %338 = arith.addf %336, %337 : vector<16x32xf32>
    %339 = arith.truncf %269 : vector<16x32xf32> to vector<16x32xbf16>
    %cst_67 = arith.constant dense<0.000000e+00> : vector<16x32xf32>
    %340 = tpu.matmul %339, %305, %cst_67 {dimension_numbers = #tpu.dot_dimension_numbers<[1], [0], [0], [1], [0, 0, 1, 1], [], []>} : vector<16x32xbf16>, vector<32x32xbf16>, vector<16x32xf32> -> vector<16x32xf32>
    %341 = vector.broadcast %314 : vector<1x32xf32> to vector<16x32xf32>
    %342 = arith.addf %340, %341 : vector<16x32xf32>
    %343 = arith.truncf %335 : vector<16x32xf32> to vector<16x32xbf16>
    %344 = vector.extract_strided_slice %343 {offsets = [0, 0], sizes = [16, 8], strides = [1, 1]} : vector<16x32xbf16> to vector<16x8xbf16>
    %345 = vector.shape_cast %344 : vector<16x8xbf16> to vector<2x8x8xbf16>
    %346 = vector.extract_strided_slice %343 {offsets = [0, 8], sizes = [16, 8], strides = [1, 1]} : vector<16x32xbf16> to vector<16x8xbf16>
    %347 = vector.shape_cast %346 : vector<16x8xbf16> to vector<2x8x8xbf16>
    %348 = vector.extract_strided_slice %343 {offsets = [0, 16], sizes = [16, 8], strides = [1, 1]} : vector<16x32xbf16> to vector<16x8xbf16>
    %349 = vector.shape_cast %348 : vector<16x8xbf16> to vector<2x8x8xbf16>
    %350 = vector.extract_strided_slice %343 {offsets = [0, 24], sizes = [16, 8], strides = [1, 1]} : vector<16x32xbf16> to vector<16x8xbf16>
    %351 = vector.shape_cast %350 : vector<16x8xbf16> to vector<2x8x8xbf16>
    %352 = tpu.concatenate %345, %347, %349, %351 in 0 : vector<2x8x8xbf16>, vector<2x8x8xbf16>, vector<2x8x8xbf16>, vector<2x8x8xbf16> -> vector<8x8x8xbf16>
    %353 = arith.truncf %338 : vector<16x32xf32> to vector<16x32xbf16>
    %354 = vector.extract_strided_slice %353 {offsets = [0, 0], sizes = [16, 8], strides = [1, 1]} : vector<16x32xbf16> to vector<16x8xbf16>
    %355 = vector.shape_cast %354 : vector<16x8xbf16> to vector<2x8x8xbf16>
    %356 = vector.extract_strided_slice %353 {offsets = [0, 8], sizes = [16, 8], strides = [1, 1]} : vector<16x32xbf16> to vector<16x8xbf16>
    %357 = vector.shape_cast %356 : vector<16x8xbf16> to vector<2x8x8xbf16>
    %358 = vector.extract_strided_slice %353 {offsets = [0, 16], sizes = [16, 8], strides = [1, 1]} : vector<16x32xbf16> to vector<16x8xbf16>
    %359 = vector.shape_cast %358 : vector<16x8xbf16> to vector<2x8x8xbf16>
    %360 = vector.extract_strided_slice %353 {offsets = [0, 24], sizes = [16, 8], strides = [1, 1]} : vector<16x32xbf16> to vector<16x8xbf16>
    %361 = vector.shape_cast %360 : vector<16x8xbf16> to vector<2x8x8xbf16>
    %362 = tpu.concatenate %355, %357, %359, %361 in 0 : vector<2x8x8xbf16>, vector<2x8x8xbf16>, vector<2x8x8xbf16>, vector<2x8x8xbf16> -> vector<8x8x8xbf16>
    %363 = arith.truncf %342 : vector<16x32xf32> to vector<16x32xbf16>
    %364 = vector.extract_strided_slice %363 {offsets = [0, 0], sizes = [16, 8], strides = [1, 1]} : vector<16x32xbf16> to vector<16x8xbf16>
    %365 = vector.shape_cast %364 : vector<16x8xbf16> to vector<2x8x8xbf16>
    %366 = vector.extract_strided_slice %363 {offsets = [0, 8], sizes = [16, 8], strides = [1, 1]} : vector<16x32xbf16> to vector<16x8xbf16>
    %367 = vector.shape_cast %366 : vector<16x8xbf16> to vector<2x8x8xbf16>
    %368 = vector.extract_strided_slice %363 {offsets = [0, 16], sizes = [16, 8], strides = [1, 1]} : vector<16x32xbf16> to vector<16x8xbf16>
    %369 = vector.shape_cast %368 : vector<16x8xbf16> to vector<2x8x8xbf16>
    %370 = vector.extract_strided_slice %363 {offsets = [0, 24], sizes = [16, 8], strides = [1, 1]} : vector<16x32xbf16> to vector<16x8xbf16>
    %371 = vector.shape_cast %370 : vector<16x8xbf16> to vector<2x8x8xbf16>
    %372 = tpu.concatenate %365, %367, %369, %371 in 0 : vector<2x8x8xbf16>, vector<2x8x8xbf16>, vector<2x8x8xbf16>, vector<2x8x8xbf16> -> vector<8x8x8xbf16>
    "tpu.trace_start"() <{level = 10 : i32, message = "zqd,zkd->zqk"}> : () -> ()
    %cst_68 = arith.constant dense<0.000000e+00> : vector<8x8x8xf32>
    %373 = tpu.matmul %352, %362, %cst_68 {dimension_numbers = #tpu.dot_dimension_numbers<[2], [2], [1], [1], [0, 0, 0, 1, 1, 1], [0], [0]>} : vector<8x8x8xbf16>, vector<8x8x8xbf16>, vector<8x8x8xf32> -> vector<8x8x8xf32>
    "tpu.trace_stop"() : () -> ()
    %cst_69 = arith.constant 0.353553385 : f32
    %374 = vector.broadcast %cst_69 : f32 to vector<8x8x8xf32>
    %375 = arith.mulf %373, %374 : vector<8x8x8xf32>
    %cst_70 = arith.constant dense<0xFF800000> : vector<8x8xf32>
    %376 = vector.multi_reduction <maximumf>, %375, %cst_70 [2] : vector<8x8x8xf32> to vector<8x8xf32>
    %377 = vector.shape_cast %376 : vector<8x8xf32> to vector<8x8x1xf32>
    %378 = vector.broadcast %377 : vector<8x8x1xf32> to vector<8x8x8xf32>
    %379 = arith.subf %375, %378 : vector<8x8x8xf32>
    %380 = math.exp %379 : vector<8x8x8xf32>
    %cst_71 = arith.constant dense<0.000000e+00> : vector<8x8xf32>
    %381 = vector.multi_reduction <add>, %380, %cst_71 [2] : vector<8x8x8xf32> to vector<8x8xf32>
    %382 = vector.shape_cast %381 : vector<8x8xf32> to vector<8x8x1xf32>
    %383 = tpu.reciprocal %382 {approx = true} : vector<8x8x1xf32> -> vector<8x8x1xf32>
    %384 = vector.broadcast %383 : vector<8x8x1xf32> to vector<8x8x8xf32>
    %385 = arith.mulf %380, %384 : vector<8x8x8xf32>
    %386 = arith.truncf %385 : vector<8x8x8xf32> to vector<8x8x8xbf16>
    "tpu.trace_start"() <{level = 10 : i32, message = "zqk,zkd->zqd"}> : () -> ()
    %cst_72 = arith.constant dense<0.000000e+00> : vector<8x8x8xf32>
    %387 = tpu.matmul %386, %372, %cst_72 {dimension_numbers = #tpu.dot_dimension_numbers<[2], [1], [1], [2], [0, 0, 0, 1, 1, 2], [0], [0]>} : vector<8x8x8xbf16>, vector<8x8x8xbf16>, vector<8x8x8xf32> -> vector<8x8x8xf32>
    "tpu.trace_stop"() : () -> ()
    %388 = vector.extract_strided_slice %387 {offsets = [0, 0, 0], sizes = [2, 8, 8], strides = [1, 1, 1]} : vector<8x8x8xf32> to vector<2x8x8xf32>
    %389 = vector.shape_cast %388 : vector<2x8x8xf32> to vector<16x8xf32>
    %390 = vector.extract_strided_slice %387 {offsets = [2, 0, 0], sizes = [2, 8, 8], strides = [1, 1, 1]} : vector<8x8x8xf32> to vector<2x8x8xf32>
    %391 = vector.shape_cast %390 : vector<2x8x8xf32> to vector<16x8xf32>
    %392 = vector.extract_strided_slice %387 {offsets = [4, 0, 0], sizes = [2, 8, 8], strides = [1, 1, 1]} : vector<8x8x8xf32> to vector<2x8x8xf32>
    %393 = vector.shape_cast %392 : vector<2x8x8xf32> to vector<16x8xf32>
    %394 = vector.extract_strided_slice %387 {offsets = [6, 0, 0], sizes = [2, 8, 8], strides = [1, 1, 1]} : vector<8x8x8xf32> to vector<2x8x8xf32>
    %395 = vector.shape_cast %394 : vector<2x8x8xf32> to vector<16x8xf32>
    %396 = tpu.concatenate %389, %391, %393, %395 in 1 : vector<16x8xf32>, vector<16x8xf32>, vector<16x8xf32>, vector<16x8xf32> -> vector<16x32xf32>
    %397 = arith.truncf %396 : vector<16x32xf32> to vector<16x32xbf16>
    %cst_73 = arith.constant dense<0.000000e+00> : vector<16x32xf32>
    %398 = tpu.matmul %397, %306, %cst_73 {dimension_numbers = #tpu.dot_dimension_numbers<[1], [0], [0], [1], [0, 0, 1, 1], [], []>} : vector<16x32xbf16>, vector<32x32xbf16>, vector<16x32xf32> -> vector<16x32xf32>
    %399 = vector.broadcast %315 : vector<1x32xf32> to vector<16x32xf32>
    %400 = arith.addf %398, %399 : vector<16x32xf32>
    %401 = arith.addf %269, %400 : vector<16x32xf32>
    %cst_74 = arith.constant dense<0.000000e+00> : vector<16xf32>
    %402 = vector.multi_reduction <add>, %401, %cst_74 [1] : vector<16x32xf32> to vector<16xf32>
    %403 = vector.shape_cast %402 : vector<16xf32> to vector<16x1xf32>
    %cst_75 = arith.constant 3.200000e+01 : f32
    %404 = vector.broadcast %cst_75 : f32 to vector<16x1xf32>
    %405 = arith.divf %403, %404 : vector<16x1xf32>
    %406 = vector.broadcast %405 : vector<16x1xf32> to vector<16x32xf32>
    %407 = arith.subf %401, %406 : vector<16x32xf32>
    %408 = arith.mulf %407, %407 : vector<16x32xf32>
    %cst_76 = arith.constant dense<0.000000e+00> : vector<16xf32>
    %409 = vector.multi_reduction <add>, %408, %cst_76 [1] : vector<16x32xf32> to vector<16xf32>
    %410 = vector.shape_cast %409 : vector<16xf32> to vector<16x1xf32>
    %cst_77 = arith.constant 3.200000e+01 : f32
    %411 = vector.broadcast %cst_77 : f32 to vector<16x1xf32>
    %412 = arith.divf %410, %411 : vector<16x1xf32>
    %413 = vector.broadcast %405 : vector<16x1xf32> to vector<16x32xf32>
    %414 = arith.subf %401, %413 : vector<16x32xf32>
    %cst_78 = arith.constant 9.99999974E-6 : f32
    %415 = vector.broadcast %cst_78 : f32 to vector<16x1xf32>
    %416 = arith.addf %412, %415 : vector<16x1xf32>
    %417 = math.rsqrt %416 : vector<16x1xf32>
    %418 = vector.broadcast %417 : vector<16x1xf32> to vector<16x32xf32>
    %419 = arith.mulf %414, %418 : vector<16x32xf32>
    %420 = vector.broadcast %322 : vector<1x32xf32> to vector<16x32xf32>
    %421 = arith.mulf %419, %420 : vector<16x32xf32>
    %422 = vector.broadcast %323 : vector<1x32xf32> to vector<16x32xf32>
    %423 = arith.addf %421, %422 : vector<16x32xf32>
    %424 = arith.addf %423, %7 : vector<16x32xf32>
    %425 = arith.truncf %424 : vector<16x32xf32> to vector<16x32xbf16>
    %cst_79 = arith.constant dense<0.000000e+00> : vector<16x32xf32>
    %426 = tpu.matmul %425, %307, %cst_79 {dimension_numbers = #tpu.dot_dimension_numbers<[1], [0], [0], [1], [0, 0, 1, 1], [], []>} : vector<16x32xbf16>, vector<32x32xbf16>, vector<16x32xf32> -> vector<16x32xf32>
    %427 = vector.broadcast %316 : vector<1x32xf32> to vector<16x32xf32>
    %428 = arith.addf %426, %427 : vector<16x32xf32>
    %cst_80 = arith.constant dense<0.000000e+00> : vector<32x32xf32>
    %429 = tpu.matmul %18, %308, %cst_80 {dimension_numbers = #tpu.dot_dimension_numbers<[1], [0], [0], [1], [0, 0, 1, 1], [], []>} : vector<32x32xbf16>, vector<32x32xbf16>, vector<32x32xf32> -> vector<32x32xf32>
    %430 = vector.broadcast %317 : vector<1x32xf32> to vector<32x32xf32>
    %431 = arith.addf %429, %430 : vector<32x32xf32>
    %cst_81 = arith.constant dense<0.000000e+00> : vector<32x32xf32>
    %432 = tpu.matmul %17, %309, %cst_81 {dimension_numbers = #tpu.dot_dimension_numbers<[1], [0], [0], [1], [0, 0, 1, 1], [], []>} : vector<32x32xbf16>, vector<32x32xbf16>, vector<32x32xf32> -> vector<32x32xf32>
    %433 = vector.broadcast %318 : vector<1x32xf32> to vector<32x32xf32>
    %434 = arith.addf %432, %433 : vector<32x32xf32>
    %435 = arith.truncf %428 : vector<16x32xf32> to vector<16x32xbf16>
    %436 = vector.extract_strided_slice %435 {offsets = [0, 0], sizes = [16, 8], strides = [1, 1]} : vector<16x32xbf16> to vector<16x8xbf16>
    %437 = vector.shape_cast %436 : vector<16x8xbf16> to vector<2x8x8xbf16>
    %438 = vector.extract_strided_slice %435 {offsets = [0, 8], sizes = [16, 8], strides = [1, 1]} : vector<16x32xbf16> to vector<16x8xbf16>
    %439 = vector.shape_cast %438 : vector<16x8xbf16> to vector<2x8x8xbf16>
    %440 = vector.extract_strided_slice %435 {offsets = [0, 16], sizes = [16, 8], strides = [1, 1]} : vector<16x32xbf16> to vector<16x8xbf16>
    %441 = vector.shape_cast %440 : vector<16x8xbf16> to vector<2x8x8xbf16>
    %442 = vector.extract_strided_slice %435 {offsets = [0, 24], sizes = [16, 8], strides = [1, 1]} : vector<16x32xbf16> to vector<16x8xbf16>
    %443 = vector.shape_cast %442 : vector<16x8xbf16> to vector<2x8x8xbf16>
    %444 = tpu.concatenate %437, %439, %441, %443 in 0 : vector<2x8x8xbf16>, vector<2x8x8xbf16>, vector<2x8x8xbf16>, vector<2x8x8xbf16> -> vector<8x8x8xbf16>
    %445 = arith.truncf %431 : vector<32x32xf32> to vector<32x32xbf16>
    %446 = vector.extract_strided_slice %445 {offsets = [0, 0], sizes = [32, 8], strides = [1, 1]} : vector<32x32xbf16> to vector<32x8xbf16>
    %447 = vector.shape_cast %446 : vector<32x8xbf16> to vector<2x16x8xbf16>
    %448 = vector.extract_strided_slice %445 {offsets = [0, 8], sizes = [32, 8], strides = [1, 1]} : vector<32x32xbf16> to vector<32x8xbf16>
    %449 = vector.shape_cast %448 : vector<32x8xbf16> to vector<2x16x8xbf16>
    %450 = vector.extract_strided_slice %445 {offsets = [0, 16], sizes = [32, 8], strides = [1, 1]} : vector<32x32xbf16> to vector<32x8xbf16>
    %451 = vector.shape_cast %450 : vector<32x8xbf16> to vector<2x16x8xbf16>
    %452 = vector.extract_strided_slice %445 {offsets = [0, 24], sizes = [32, 8], strides = [1, 1]} : vector<32x32xbf16> to vector<32x8xbf16>
    %453 = vector.shape_cast %452 : vector<32x8xbf16> to vector<2x16x8xbf16>
    %454 = tpu.concatenate %447, %449, %451, %453 in 0 : vector<2x16x8xbf16>, vector<2x16x8xbf16>, vector<2x16x8xbf16>, vector<2x16x8xbf16> -> vector<8x16x8xbf16>
    %455 = arith.truncf %434 : vector<32x32xf32> to vector<32x32xbf16>
    %456 = vector.extract_strided_slice %455 {offsets = [0, 0], sizes = [32, 8], strides = [1, 1]} : vector<32x32xbf16> to vector<32x8xbf16>
    %457 = vector.shape_cast %456 : vector<32x8xbf16> to vector<2x16x8xbf16>
    %458 = vector.extract_strided_slice %455 {offsets = [0, 8], sizes = [32, 8], strides = [1, 1]} : vector<32x32xbf16> to vector<32x8xbf16>
    %459 = vector.shape_cast %458 : vector<32x8xbf16> to vector<2x16x8xbf16>
    %460 = vector.extract_strided_slice %455 {offsets = [0, 16], sizes = [32, 8], strides = [1, 1]} : vector<32x32xbf16> to vector<32x8xbf16>
    %461 = vector.shape_cast %460 : vector<32x8xbf16> to vector<2x16x8xbf16>
    %462 = vector.extract_strided_slice %455 {offsets = [0, 24], sizes = [32, 8], strides = [1, 1]} : vector<32x32xbf16> to vector<32x8xbf16>
    %463 = vector.shape_cast %462 : vector<32x8xbf16> to vector<2x16x8xbf16>
    %464 = tpu.concatenate %457, %459, %461, %463 in 0 : vector<2x16x8xbf16>, vector<2x16x8xbf16>, vector<2x16x8xbf16>, vector<2x16x8xbf16> -> vector<8x16x8xbf16>
    "tpu.trace_start"() <{level = 10 : i32, message = "zqd,zkd->zqk"}> : () -> ()
    %cst_82 = arith.constant dense<0.000000e+00> : vector<8x8x16xf32>
    %465 = tpu.matmul %444, %454, %cst_82 {dimension_numbers = #tpu.dot_dimension_numbers<[2], [2], [1], [1], [0, 0, 0, 1, 1, 1], [0], [0]>} : vector<8x8x8xbf16>, vector<8x16x8xbf16>, vector<8x8x16xf32> -> vector<8x8x16xf32>
    "tpu.trace_stop"() : () -> ()
    %cst_83 = arith.constant 0.353553385 : f32
    %466 = vector.broadcast %cst_83 : f32 to vector<8x8x16xf32>
    %467 = arith.mulf %465, %466 : vector<8x8x16xf32>
    %cst_84 = arith.constant dense<0xFF800000> : vector<8x8xf32>
    %468 = vector.multi_reduction <maximumf>, %467, %cst_84 [2] : vector<8x8x16xf32> to vector<8x8xf32>
    %469 = vector.shape_cast %468 : vector<8x8xf32> to vector<8x8x1xf32>
    %470 = vector.broadcast %469 : vector<8x8x1xf32> to vector<8x8x16xf32>
    %471 = arith.subf %467, %470 : vector<8x8x16xf32>
    %472 = math.exp %471 : vector<8x8x16xf32>
    %cst_85 = arith.constant dense<0.000000e+00> : vector<8x8xf32>
    %473 = vector.multi_reduction <add>, %472, %cst_85 [2] : vector<8x8x16xf32> to vector<8x8xf32>
    %474 = vector.shape_cast %473 : vector<8x8xf32> to vector<8x8x1xf32>
    %475 = tpu.reciprocal %474 {approx = true} : vector<8x8x1xf32> -> vector<8x8x1xf32>
    %476 = vector.broadcast %475 : vector<8x8x1xf32> to vector<8x8x16xf32>
    %477 = arith.mulf %472, %476 : vector<8x8x16xf32>
    %478 = arith.truncf %477 : vector<8x8x16xf32> to vector<8x8x16xbf16>
    "tpu.trace_start"() <{level = 10 : i32, message = "zqk,zkd->zqd"}> : () -> ()
    %cst_86 = arith.constant dense<0.000000e+00> : vector<8x8x8xf32>
    %479 = tpu.matmul %478, %464, %cst_86 {dimension_numbers = #tpu.dot_dimension_numbers<[2], [1], [1], [2], [0, 0, 0, 1, 1, 2], [0], [0]>} : vector<8x8x16xbf16>, vector<8x16x8xbf16>, vector<8x8x8xf32> -> vector<8x8x8xf32>
    "tpu.trace_stop"() : () -> ()
    %480 = vector.extract_strided_slice %479 {offsets = [0, 0, 0], sizes = [2, 8, 8], strides = [1, 1, 1]} : vector<8x8x8xf32> to vector<2x8x8xf32>
    %481 = vector.shape_cast %480 : vector<2x8x8xf32> to vector<16x8xf32>
    %482 = vector.extract_strided_slice %479 {offsets = [2, 0, 0], sizes = [2, 8, 8], strides = [1, 1, 1]} : vector<8x8x8xf32> to vector<2x8x8xf32>
    %483 = vector.shape_cast %482 : vector<2x8x8xf32> to vector<16x8xf32>
    %484 = vector.extract_strided_slice %479 {offsets = [4, 0, 0], sizes = [2, 8, 8], strides = [1, 1, 1]} : vector<8x8x8xf32> to vector<2x8x8xf32>
    %485 = vector.shape_cast %484 : vector<2x8x8xf32> to vector<16x8xf32>
    %486 = vector.extract_strided_slice %479 {offsets = [6, 0, 0], sizes = [2, 8, 8], strides = [1, 1, 1]} : vector<8x8x8xf32> to vector<2x8x8xf32>
    %487 = vector.shape_cast %486 : vector<2x8x8xf32> to vector<16x8xf32>
    %488 = tpu.concatenate %481, %483, %485, %487 in 1 : vector<16x8xf32>, vector<16x8xf32>, vector<16x8xf32>, vector<16x8xf32> -> vector<16x32xf32>
    %489 = arith.truncf %488 : vector<16x32xf32> to vector<16x32xbf16>
    %cst_87 = arith.constant dense<0.000000e+00> : vector<16x32xf32>
    %490 = tpu.matmul %489, %310, %cst_87 {dimension_numbers = #tpu.dot_dimension_numbers<[1], [0], [0], [1], [0, 0, 1, 1], [], []>} : vector<16x32xbf16>, vector<32x32xbf16>, vector<16x32xf32> -> vector<16x32xf32>
    %491 = vector.broadcast %319 : vector<1x32xf32> to vector<16x32xf32>
    %492 = arith.addf %490, %491 : vector<16x32xf32>
    %493 = arith.addf %423, %492 : vector<16x32xf32>
    %cst_88 = arith.constant dense<0.000000e+00> : vector<16xf32>
    %494 = vector.multi_reduction <add>, %493, %cst_88 [1] : vector<16x32xf32> to vector<16xf32>
    %495 = vector.shape_cast %494 : vector<16xf32> to vector<16x1xf32>
    %cst_89 = arith.constant 3.200000e+01 : f32
    %496 = vector.broadcast %cst_89 : f32 to vector<16x1xf32>
    %497 = arith.divf %495, %496 : vector<16x1xf32>
    %498 = vector.broadcast %497 : vector<16x1xf32> to vector<16x32xf32>
    %499 = arith.subf %493, %498 : vector<16x32xf32>
    %500 = arith.mulf %499, %499 : vector<16x32xf32>
    %cst_90 = arith.constant dense<0.000000e+00> : vector<16xf32>
    %501 = vector.multi_reduction <add>, %500, %cst_90 [1] : vector<16x32xf32> to vector<16xf32>
    %502 = vector.shape_cast %501 : vector<16xf32> to vector<16x1xf32>
    %cst_91 = arith.constant 3.200000e+01 : f32
    %503 = vector.broadcast %cst_91 : f32 to vector<16x1xf32>
    %504 = arith.divf %502, %503 : vector<16x1xf32>
    %505 = vector.broadcast %497 : vector<16x1xf32> to vector<16x32xf32>
    %506 = arith.subf %493, %505 : vector<16x32xf32>
    %cst_92 = arith.constant 9.99999974E-6 : f32
    %507 = vector.broadcast %cst_92 : f32 to vector<16x1xf32>
    %508 = arith.addf %504, %507 : vector<16x1xf32>
    %509 = math.rsqrt %508 : vector<16x1xf32>
    %510 = vector.broadcast %509 : vector<16x1xf32> to vector<16x32xf32>
    %511 = arith.mulf %506, %510 : vector<16x32xf32>
    %512 = vector.broadcast %324 : vector<1x32xf32> to vector<16x32xf32>
    %513 = arith.mulf %511, %512 : vector<16x32xf32>
    %514 = vector.broadcast %325 : vector<1x32xf32> to vector<16x32xf32>
    %515 = arith.addf %513, %514 : vector<16x32xf32>
    %516 = arith.truncf %515 : vector<16x32xf32> to vector<16x32xbf16>
    %cst_93 = arith.constant dense<0.000000e+00> : vector<16x64xf32>
    %517 = tpu.matmul %516, %311, %cst_93 {dimension_numbers = #tpu.dot_dimension_numbers<[1], [0], [0], [1], [0, 0, 1, 1], [], []>} : vector<16x32xbf16>, vector<32x64xbf16>, vector<16x64xf32> -> vector<16x64xf32>
    %518 = vector.broadcast %320 : vector<1x64xf32> to vector<16x64xf32>
    %519 = arith.addf %517, %518 : vector<16x64xf32>
    %cst_94 = arith.constant 0.000000e+00 : f32
    %520 = vector.broadcast %cst_94 : f32 to vector<16x64xf32>
    %521 = arith.maximumf %519, %520 : vector<16x64xf32>
    %522 = arith.truncf %521 : vector<16x64xf32> to vector<16x64xbf16>
    %cst_95 = arith.constant dense<0.000000e+00> : vector<16x32xf32>
    %523 = tpu.matmul %522, %301, %cst_95 {dimension_numbers = #tpu.dot_dimension_numbers<[1], [0], [0], [1], [0, 0, 1, 1], [], []>} : vector<16x64xbf16>, vector<64x32xbf16>, vector<16x32xf32> -> vector<16x32xf32>
    %524 = vector.broadcast %321 : vector<1x32xf32> to vector<16x32xf32>
    %525 = arith.addf %523, %524 : vector<16x32xf32>
    %526 = arith.addf %515, %525 : vector<16x32xf32>
    %cst_96 = arith.constant dense<0.000000e+00> : vector<16xf32>
    %527 = vector.multi_reduction <add>, %526, %cst_96 [1] : vector<16x32xf32> to vector<16xf32>
    %528 = vector.shape_cast %527 : vector<16xf32> to vector<16x1xf32>
    %cst_97 = arith.constant 3.200000e+01 : f32
    %529 = vector.broadcast %cst_97 : f32 to vector<16x1xf32>
    %530 = arith.divf %528, %529 : vector<16x1xf32>
    %531 = vector.broadcast %530 : vector<16x1xf32> to vector<16x32xf32>
    %532 = arith.subf %526, %531 : vector<16x32xf32>
    %533 = arith.mulf %532, %532 : vector<16x32xf32>
    %cst_98 = arith.constant dense<0.000000e+00> : vector<16xf32>
    %534 = vector.multi_reduction <add>, %533, %cst_98 [1] : vector<16x32xf32> to vector<16xf32>
    %535 = vector.shape_cast %534 : vector<16xf32> to vector<16x1xf32>
    %cst_99 = arith.constant 3.200000e+01 : f32
    %536 = vector.broadcast %cst_99 : f32 to vector<16x1xf32>
    %537 = arith.divf %535, %536 : vector<16x1xf32>
    %538 = vector.broadcast %530 : vector<16x1xf32> to vector<16x32xf32>
    %539 = arith.subf %526, %538 : vector<16x32xf32>
    %cst_100 = arith.constant 9.99999974E-6 : f32
    %540 = vector.broadcast %cst_100 : f32 to vector<16x1xf32>
    %541 = arith.addf %537, %540 : vector<16x1xf32>
    %542 = math.rsqrt %541 : vector<16x1xf32>
    %543 = vector.broadcast %542 : vector<16x1xf32> to vector<16x32xf32>
    %544 = arith.mulf %539, %543 : vector<16x32xf32>
    %545 = vector.broadcast %326 : vector<1x32xf32> to vector<16x32xf32>
    %546 = arith.mulf %544, %545 : vector<16x32xf32>
    %547 = vector.broadcast %327 : vector<1x32xf32> to vector<16x32xf32>
    %548 = arith.addf %546, %547 : vector<16x32xf32>
    %cst_101 = arith.constant dense<0.000000e+00> : vector<16xf32>
    %549 = vector.multi_reduction <add>, %548, %cst_101 [1] : vector<16x32xf32> to vector<16xf32>
    %550 = vector.shape_cast %549 : vector<16xf32> to vector<16x1xf32>
    %cst_102 = arith.constant 3.200000e+01 : f32
    %551 = vector.broadcast %cst_102 : f32 to vector<16x1xf32>
    %552 = arith.divf %550, %551 : vector<16x1xf32>
    %553 = vector.broadcast %552 : vector<16x1xf32> to vector<16x32xf32>
    %554 = arith.subf %548, %553 : vector<16x32xf32>
    %555 = arith.mulf %554, %554 : vector<16x32xf32>
    %cst_103 = arith.constant dense<0.000000e+00> : vector<16xf32>
    %556 = vector.multi_reduction <add>, %555, %cst_103 [1] : vector<16x32xf32> to vector<16xf32>
    %557 = vector.shape_cast %556 : vector<16xf32> to vector<16x1xf32>
    %cst_104 = arith.constant 3.200000e+01 : f32
    %558 = vector.broadcast %cst_104 : f32 to vector<16x1xf32>
    %559 = arith.divf %557, %558 : vector<16x1xf32>
    %560 = vector.broadcast %552 : vector<16x1xf32> to vector<16x32xf32>
    %561 = arith.subf %548, %560 : vector<16x32xf32>
    %cst_105 = arith.constant 9.99999974E-6 : f32
    %562 = vector.broadcast %cst_105 : f32 to vector<16x1xf32>
    %563 = arith.addf %559, %562 : vector<16x1xf32>
    %564 = math.rsqrt %563 : vector<16x1xf32>
    %565 = vector.broadcast %564 : vector<16x1xf32> to vector<16x32xf32>
    %566 = arith.mulf %561, %565 : vector<16x32xf32>
    %567 = vector.broadcast %328 : vector<1x32xf32> to vector<16x32xf32>
    %568 = arith.mulf %566, %567 : vector<16x32xf32>
    %569 = vector.broadcast %329 : vector<1x32xf32> to vector<16x32xf32>
    %570 = arith.addf %568, %569 : vector<16x32xf32>
    %571 = vector.extract_strided_slice %570 {offsets = [0, 0], sizes = [8, 32], strides = [1, 1]} : vector<16x32xf32> to vector<8x32xf32>
    %572 = vector.extract_strided_slice %570 {offsets = [8, 0], sizes = [8, 32], strides = [1, 1]} : vector<16x32xf32> to vector<8x32xf32>
    %573 = tpu.concatenate %571, %572 in 1 : vector<8x32xf32>, vector<8x32xf32> -> vector<8x64xf32>
    %c1_106 = arith.constant 1 : index
    %c0_107 = arith.constant 0 : index
    %c0_108 = arith.constant 0 : index
    %574 = vector.load %arg7[%c1_106, %c0_107, %c0_108] : memref<2x8x64xf32, #tpu.memory_space<vmem>>, vector<1x8x64xf32>
    %575 = vector.shape_cast %574 : vector<1x8x64xf32> to vector<8x64xf32>
    %576 = vector.shape_cast %573 : vector<8x64xf32> to vector<1x8x64xf32>
    tpu.vector_store %arg7[%c1_106, %c0_107, %c0_108], %576 {strides = array<i32>} : memref<2x8x64xf32, #tpu.memory_space<vmem>>, vector<1x8x64xf32>,
    return
  }
}

</mosaic_0001>

<llo_original>
// kernel: transformer_decoder.1
$region0: #{transformer_decoder.1}
  #allocation0 [shape = 'u32[]', space=smem, size = 0x4, offset = 0x4, fixed_abs, tag = 'smem constant byte address 0x4 - core index']
  #allocation1 [shape = 'u32[72,128]{1,0:T(1,128)}', space=vmem, size = 0x9000, scoped, tag = 'internal scratch']
  %s0 = inlined_call_operand.vmem [shape: f32[8,64], index: 0, kind: input, shape index: {}]
  %s1 = inlined_call_operand.vmem [shape: f32[8,64], index: 1, kind: input, shape index: {}]
  %s2 = inlined_call_operand.vmem [shape: f32[16,64], index: 2, kind: input, shape index: {}]
  %s3 = inlined_call_operand.vmem [shape: f32[16,64], index: 3, kind: input, shape index: {}]
  %s4 = inlined_call_operand.vmem [shape: bf16[2,32,320], index: 4, kind: input, shape index: {}]
  %s5 = inlined_call_operand.vmem [shape: bf16[2,64,32], index: 5, kind: input, shape index: {}]
  %s6 = inlined_call_operand.vmem [shape: f32[2,18,64], index: 6, kind: input, shape index: {}]
  %s7 = inlined_call_operand.vmem [shape: f32[2,8,64], index: 7, kind: output, shape index: {}]
  %s8 = sld [smem:[#allocation0]]
  $region38: #{transformer_decoder.1} parent=0
    _
  %s10 = ssub.s32 1, %s8
  %s11 = scalar_select 0, %s10, %s8
  // Predicated region
  $region2: #{transformer_decoder.1} parent=0 // pred_check
    _
  $region3: #{transformer_decoder.1} parent=0 // pred_check_branch
    %13 = sbr.rel (0) target = $region5
  $region4: #{transformer_decoder.1} parent=0 // pred_region
    _
  $region5: #{transformer_decoder.1} parent=0 // pred_fallthru
    _
  // Predicated region
  $region6: #{transformer_decoder.1} parent=0 // pred_check
    _
  $region7: #{transformer_decoder.1} parent=0 // pred_check_branch
    %15 = sbr.rel (0) target = $region9
  $region8: #{transformer_decoder.1} parent=0 // pred_region
    _
  $region9: #{transformer_decoder.1} parent=0 // pred_fallthru
    _
  // Predicated region
  $region10: #{transformer_decoder.1} parent=0 // pred_check
    _
  $region11: #{transformer_decoder.1} parent=0 // pred_check_branch
    %17 = sbr.rel (0) target = $region13
  $region12: #{transformer_decoder.1} parent=0 // pred_region
    _
  $region13: #{transformer_decoder.1} parent=0 // pred_fallthru
    _
  // Predicated region
  $region14: #{transformer_decoder.1} parent=0 // pred_check
    _
  $region15: #{transformer_decoder.1} parent=0 // pred_check_branch
    %19 = sbr.rel (0) target = $region17
  $region16: #{transformer_decoder.1} parent=0 // pred_region
    _
  $region17: #{transformer_decoder.1} parent=0 // pred_fallthru
    _
  // Predicated region
  $region18: #{transformer_decoder.1} parent=0 // pred_check
    _
  $region19: #{transformer_decoder.1} parent=0 // pred_check_branch
    %21 = sbr.rel (0) target = $region21
  $region20: #{transformer_decoder.1} parent=0 // pred_region
    _
  $region21: #{transformer_decoder.1} parent=0 // pred_fallthru
    _
  // Predicated region
  $region22: #{transformer_decoder.1} parent=0 // pred_check
    _
  $region23: #{transformer_decoder.1} parent=0 // pred_check_branch
    %23 = sbr.rel (0) target = $region25
  $region24: #{transformer_decoder.1} parent=0 // pred_region
    _
  $region25: #{transformer_decoder.1} parent=0 // pred_fallthru
    _
  // Predicated region
  $region26: #{transformer_decoder.1} parent=0 // pred_check
    _
  $region27: #{transformer_decoder.1} parent=0 // pred_check_branch
    %25 = sbr.rel (0) target = $region29
  $region28: #{transformer_decoder.1} parent=0 // pred_region
    _
  $region29: #{transformer_decoder.1} parent=0 // pred_fallthru
    _
  %v27 = vld [vmem:[%s0] sm:$0xff]
  %29 = vrot.lane.b32.xlu0 %v27, 96
  %v30 = vpop.permute.xlu0 %29
  %v32 = vld [vmem:[%s1] sm:$0xff]
  %34 = vrot.lane.b32.xlu0 %v32, 96
  %v35 = vpop.permute.xlu0 %34
  %v37 = vld [vmem:[%s2] sm:$0xff]
  %v38 = vld [vmem:[%s2 + $0x8] sm:$0xff]
  %41 = vrot.lane.b32.xlu0 %v37, 96
  %v42 = vpop.permute.xlu0 %41
  %43 = vrot.lane.b32.xlu0 %v38, 96
  %v44 = vpop.permute.xlu0 %43
  %v47 = vld [vmem:[%s3] sm:$0xff]
  %v48 = vld [vmem:[%s3 + $0x8] sm:$0xff]
  %51 = vrot.lane.b32.xlu0 %v47, 96
  %v52 = vpop.permute.xlu0 %51
  %53 = vrot.lane.b32.xlu0 %v48, 96
  %v54 = vpop.permute.xlu0 %53
  %v57 = vadd.f32 %v37, %v47
  %v58 = vadd.f32 %v38, %v48
  %v59 = vadd.f32 %v42, %v52
  %v60 = vadd.f32 %v44, %v54
  %v61 = vpack.c.bf16 %v38, %v37
  %v62 = vpack.c.bf16 %v44, %v42
  %v63 = vpack.c.bf16 %v58, %v57
  %v64 = vpack.c.bf16 %v60, %v59
  %v65 = vld [vmem:[%s4] sm:$0xff]
  %v66 = vld [vmem:[%s4 + $0x8] sm:$0xf]
  %v67 = vld [vmem:[%s4 + $0xc] sm:$0xff]
  %v68 = vld [vmem:[%s4 + $0x14] sm:$0xf]
  %v69 = vld [vmem:[%s4 + $0x18] sm:$0xff]
  %v70 = vld [vmem:[%s4 + $0x20] sm:$0xf]
  %v71 = vld [vmem:[%s4 + $0x24] sm:$0xff]
  %v72 = vld [vmem:[%s4 + $0x2c] sm:$0xf]
  %v73 = vld [vmem:[%s5] sm:$0xf]
  %v74 = vld [vmem:[%s5 + $0x4] sm:$0xf]
  %v75 = vld [vmem:[%s5 + $0x8] sm:$0xf]
  %v76 = vld [vmem:[%s5 + $0xc] sm:$0xf]
  %v77 = vld [vmem:[%s5 + $0x10] sm:$0xf]
  %v78 = vld [vmem:[%s5 + $0x14] sm:$0xf]
  %v79 = vld [vmem:[%s5 + $0x18] sm:$0xf]
  %v80 = vld [vmem:[%s5 + $0x1c] sm:$0xf]
  %v81 = vld [vmem:[%s6] sm:$0xff]
  %v82 = vld [vmem:[%s6 + $0x8] sm:$0xff]
  %v83 = vld [vmem:[%s6 + $0x10] sm:$0x3]
  %v84 = vadd.f32 %v27, %v32
  %v85 = vadd.f32 %v30, %v35
  %v86 = vpack.c.bf16 %v85, %v84
  %v91 = vunpack.c.l.b16 %v65
  %v92 = vunpack.c.l.b16 %v67
  %v93 = vunpack.c.l.b16 %v69
  %v94 = vunpack.c.l.b16 %v71
  %v95 = vpack.c.b16 %v92, %v91
  %v96 = vpack.c.b16 %v94, %v93
  %vm99 = vcmask 261120
  %v101 = vsel %vm99, %v86, 0
  %103 = vmatpush.bf16.msra.mxu0 0
  %104 = vmatpush.bf16.msra.mxu0 0
  %105 = vmatpush.bf16.msra.mxu0 0
  %106 = vmatpush.bf16.msra.mxu0 0
  %107 = vmatpush.bf16.msra.mxu0 0
  %108 = vmatpush.bf16.msra.mxu0 0
  %109 = vmatpush.bf16.msra.mxu0 %v96
  %110 = vmatpush.bf16.msra.mxu0 %v95
  %111 = vmatmul.bf16.gmra.mxu0 %v101
  %v112 = vpop.f32.mrf.mxu0
  %v113 = vadd.f32 0.0, %v112
  %v114 = vpop.f32.mrf.mxu0
  %v115 = vadd.f32 0.0, %v114
  %116 = vdwg.mxu0
  %v117 = vperm.slane %v81, 0
  %v118 = vadd.f32 %v113, %v117
  %v119 = vadd.f32 %v115, %v117
  %v120 = vperm.slane %v81, 1
  %122 = vrot.lane.b32.xlu0 %v120, 32
  %v123 = vpop.permute.xlu0 %122
  %v125 = vadd.f32 %v113, %v123
  %v126 = vadd.f32 %v115, %v123
  %v127 = vpack.c.bf16 %v30, %v27
  %v128 = vperm.slane %v81, 2
  %129 = vrot.lane.b32.xlu0 %v95, 64
  %v130 = vpop.permute.xlu0 %129
  %131 = vrot.lane.b32.xlu0 %v96, 64
  %v132 = vpop.permute.xlu0 %131
  %v136 = vsel %vm99, %v127, 0
  %138 = vmatpush.bf16.msra.mxu0 0
  %139 = vmatpush.bf16.msra.mxu0 0
  %140 = vmatpush.bf16.msra.mxu0 0
  %141 = vmatpush.bf16.msra.mxu0 0
  %142 = vmatpush.bf16.msra.mxu0 0
  %143 = vmatpush.bf16.msra.mxu0 0
  %144 = vmatpush.bf16.msra.mxu0 %v132
  %145 = vmatpush.bf16.msra.mxu0 %v130
  %146 = vmatmul.bf16.gmra.mxu0 %v136
  %v147 = vpop.f32.mrf.mxu0
  %v148 = vadd.f32 %v128, %v147
  %v149 = vpop.f32.mrf.mxu0
  %v150 = vadd.f32 %v128, %v149
  %151 = vdwg.mxu0
  %v152 = vpack.c.bf16 %v118, %v118
  %v153 = vpack.c.bf16 %v119, %v119
  %156 = vrot.lane.b32.xlu0 %v152, 120
  %v157 = vpop.permute.xlu0 %156
  %158 = vrot.lane.b32.xlu0 %v153, 120
  %v159 = vpop.permute.xlu0 %158
  %160 = vrot.lane.b32.xlu0 %v152, 112
  %v161 = vpop.permute.xlu0 %160
  %162 = vrot.lane.b32.xlu0 %v153, 112
  %v163 = vpop.permute.xlu0 %162
  %164 = vrot.lane.b32.xlu0 %v152, 104
  %v165 = vpop.permute.xlu0 %164
  %166 = vrot.lane.b32.xlu0 %v153, 104
  %v167 = vpop.permute.xlu0 %166
  %v168 = vpack.c.bf16 %v125, %v125
  %v169 = vpack.c.bf16 %v126, %v126
  %172 = vrot.lane.b32.xlu0 %v168, 120
  %v173 = vpop.permute.xlu0 %172
  %174 = vrot.lane.b32.xlu0 %v169, 120
  %v175 = vpop.permute.xlu0 %174
  %176 = vrot.lane.b32.xlu0 %v168, 112
  %v177 = vpop.permute.xlu0 %176
  %178 = vrot.lane.b32.xlu0 %v169, 112
  %v179 = vpop.permute.xlu0 %178
  %180 = vrot.lane.b32.xlu0 %v168, 104
  %v181 = vpop.permute.xlu0 %180
  %182 = vrot.lane.b32.xlu0 %v169, 104
  %v183 = vpop.permute.xlu0 %182
  %v184 = vpack.c.bf16 %v148, %v148
  %v185 = vpack.c.bf16 %v150, %v150
  %188 = vrot.lane.b32.xlu0 %v184, 120
  %v189 = vpop.permute.xlu0 %188
  %190 = vrot.lane.b32.xlu0 %v185, 120
  %v191 = vpop.permute.xlu0 %190
  %192 = vrot.lane.b32.xlu0 %v184, 112
  %v193 = vpop.permute.xlu0 %192
  %194 = vrot.lane.b32.xlu0 %v185, 112
  %v195 = vpop.permute.xlu0 %194
  %196 = vrot.lane.b32.xlu0 %v184, 104
  %v197 = vpop.permute.xlu0 %196
  %198 = vrot.lane.b32.xlu0 %v185, 104
  %v199 = vpop.permute.xlu0 %198
  %v200 = vunpack.c.l.b16 %v168
  %v201 = vpack.c.b16 %v200, %v200
  %202 = vrot.lane.b32.xlu0 %v201, 96
  %v203 = vpop.permute.xlu0 %202
  %vm204 = vcmask 64512
  %v206 = vsel %vm204, %v152, 0
  %v209 = vsel %vm204, %v203, 0
  %211 = vmatpush.bf16.xpose.msra.mxu0 0
  %212 = vmatpush.bf16.xpose.msra.mxu0 0
  %213 = vmatpush.bf16.xpose.msra.mxu0 0
  %214 = vmatpush.bf16.xpose.msra.mxu0 0
  %215 = vmatpush.bf16.xpose.msra.mxu0 0
  %216 = vmatpush.bf16.xpose.msra.mxu0 0
  %217 = vmatpush.bf16.xpose.msra.mxu0 0
  %218 = vmatpush.bf16.xpose.msra.mxu0 %v209
  %219 = vmatmul.bf16.gmra.mxu0 %v206
  %v220 = vpop.f32.mrf.mxu0
  %v221 = vadd.f32 0.0, %v220
  %v222 = vpop.f32.mrf.mxu0
  %223 = vdwg.mxu0
  %v224 = vunpack.c.l.b16 %v169
  %v225 = vpack.c.b16 %v224, %v224
  %226 = vrot.lane.b32.xlu0 %v225, 96
  %v227 = vpop.permute.xlu0 %226
  %v229 = vsel %vm204, %v153, 0
  %v232 = vsel %vm204, %v227, 0
  %234 = vmatpush.bf16.xpose.msra.mxu0 0
  %235 = vmatpush.bf16.xpose.msra.mxu0 0
  %236 = vmatpush.bf16.xpose.msra.mxu0 0
  %237 = vmatpush.bf16.xpose.msra.mxu0 0
  %238 = vmatpush.bf16.xpose.msra.mxu0 0
  %239 = vmatpush.bf16.xpose.msra.mxu0 0
  %240 = vmatpush.bf16.xpose.msra.mxu0 0
  %241 = vmatpush.bf16.xpose.msra.mxu0 %v232
  %242 = vmatmul.bf16.gmra.mxu0 %v229
  %v243 = vpop.f32.mrf.mxu0
  %v244 = vadd.f32 0.0, %v243
  %v245 = vpop.f32.mrf.mxu0
  %246 = vdwg.mxu0
  %v247 = vunpack.c.l.b16 %v173
  %v248 = vpack.c.b16 %v247, %v247
  %249 = vrot.lane.b32.xlu0 %v248, 96
  %v250 = vpop.permute.xlu0 %249
  %v252 = vsel %vm204, %v157, 0
  %v255 = vsel %vm204, %v250, 0
  %257 = vmatpush.bf16.xpose.msra.mxu0 0
  %258 = vmatpush.bf16.xpose.msra.mxu0 0
  %259 = vmatpush.bf16.xpose.msra.mxu0 0
  %260 = vmatpush.bf16.xpose.msra.mxu0 0
  %261 = vmatpush.bf16.xpose.msra.mxu0 0
  %262 = vmatpush.bf16.xpose.msra.mxu0 0
  %263 = vmatpush.bf16.xpose.msra.mxu0 0
  %264 = vmatpush.bf16.xpose.msra.mxu0 %v255
  %265 = vmatmul.bf16.gmra.mxu0 %v252
  %v266 = vpop.f32.mrf.mxu0
  %v267 = vadd.f32 0.0, %v266
  %v268 = vpop.f32.mrf.mxu0
  %269 = vdwg.mxu0
  %v270 = vunpack.c.l.b16 %v175
  %v271 = vpack.c.b16 %v270, %v270
  %272 = vrot.lane.b32.xlu0 %v271, 96
  %v273 = vpop.permute.xlu0 %272
  %v275 = vsel %vm204, %v159, 0
  %v278 = vsel %vm204, %v273, 0
  %280 = vmatpush.bf16.xpose.msra.mxu0 0
  %281 = vmatpush.bf16.xpose.msra.mxu0 0
  %282 = vmatpush.bf16.xpose.msra.mxu0 0
  %283 = vmatpush.bf16.xpose.msra.mxu0 0
  %284 = vmatpush.bf16.xpose.msra.mxu0 0
  %285 = vmatpush.bf16.xpose.msra.mxu0 0
  %286 = vmatpush.bf16.xpose.msra.mxu0 0
  %287 = vmatpush.bf16.xpose.msra.mxu0 %v278
  %288 = vmatmul.bf16.gmra.mxu0 %v275
  %v289 = vpop.f32.mrf.mxu0
  %v290 = vadd.f32 0.0, %v289
  %v291 = vpop.f32.mrf.mxu0
  %292 = vdwg.mxu0
  %v293 = vunpack.c.l.b16 %v177
  %v294 = vpack.c.b16 %v293, %v293
  %295 = vrot.lane.b32.xlu0 %v294, 96
  %v296 = vpop.permute.xlu0 %295
  %v298 = vsel %vm204, %v161, 0
  %v301 = vsel %vm204, %v296, 0
  %303 = vmatpush.bf16.xpose.msra.mxu0 0
  %304 = vmatpush.bf16.xpose.msra.mxu0 0
  %305 = vmatpush.bf16.xpose.msra.mxu0 0
  %306 = vmatpush.bf16.xpose.msra.mxu0 0
  %307 = vmatpush.bf16.xpose.msra.mxu0 0
  %308 = vmatpush.bf16.xpose.msra.mxu0 0
  %309 = vmatpush.bf16.xpose.msra.mxu0 0
  %310 = vmatpush.bf16.xpose.msra.mxu0 %v301
  %311 = vmatmul.bf16.gmra.mxu0 %v298
  %v312 = vpop.f32.mrf.mxu0
  %v313 = vadd.f32 0.0, %v312
  %v314 = vpop.f32.mrf.mxu0
  %315 = vdwg.mxu0
  %v316 = vunpack.c.l.b16 %v179
  %v317 = vpack.c.b16 %v316, %v316
  %318 = vrot.lane.b32.xlu0 %v317, 96
  %v319 = vpop.permute.xlu0 %318
  %v321 = vsel %vm204, %v163, 0
  %v324 = vsel %vm204, %v319, 0
  %326 = vmatpush.bf16.xpose.msra.mxu0 0
  %327 = vmatpush.bf16.xpose.msra.mxu0 0
  %328 = vmatpush.bf16.xpose.msra.mxu0 0
  %329 = vmatpush.bf16.xpose.msra.mxu0 0
  %330 = vmatpush.bf16.xpose.msra.mxu0 0
  %331 = vmatpush.bf16.xpose.msra.mxu0 0
  %332 = vmatpush.bf16.xpose.msra.mxu0 0
  %333 = vmatpush.bf16.xpose.msra.mxu0 %v324
  %334 = vmatmul.bf16.gmra.mxu0 %v321
  %v335 = vpop.f32.mrf.mxu0
  %v336 = vadd.f32 0.0, %v335
  %v337 = vpop.f32.mrf.mxu0
  %338 = vdwg.mxu0
  %v339 = vunpack.c.l.b16 %v181
  %v340 = vpack.c.b16 %v339, %v339
  %341 = vrot.lane.b32.xlu0 %v340, 96
  %v342 = vpop.permute.xlu0 %341
  %v344 = vsel %vm204, %v165, 0
  %v347 = vsel %vm204, %v342, 0
  %349 = vmatpush.bf16.xpose.msra.mxu0 0
  %350 = vmatpush.bf16.xpose.msra.mxu0 0
  %351 = vmatpush.bf16.xpose.msra.mxu0 0
  %352 = vmatpush.bf16.xpose.msra.mxu0 0
  %353 = vmatpush.bf16.xpose.msra.mxu0 0
  %354 = vmatpush.bf16.xpose.msra.mxu0 0
  %355 = vmatpush.bf16.xpose.msra.mxu0 0
  %356 = vmatpush.bf16.xpose.msra.mxu0 %v347
  %357 = vmatmul.bf16.gmra.mxu0 %v344
  %v358 = vpop.f32.mrf.mxu0
  %v359 = vadd.f32 0.0, %v358
  %v360 = vpop.f32.mrf.mxu0
  %361 = vdwg.mxu0
  %v362 = vunpack.c.l.b16 %v183
  %v363 = vpack.c.b16 %v362, %v362
  %364 = vrot.lane.b32.xlu0 %v363, 96
  %v365 = vpop.permute.xlu0 %364
  %v367 = vsel %vm204, %v167, 0
  %v370 = vsel %vm204, %v365, 0
  %372 = vmatpush.bf16.xpose.msra.mxu0 0
  %373 = vmatpush.bf16.xpose.msra.mxu0 0
  %374 = vmatpush.bf16.xpose.msra.mxu0 0
  %375 = vmatpush.bf16.xpose.msra.mxu0 0
  %376 = vmatpush.bf16.xpose.msra.mxu0 0
  %377 = vmatpush.bf16.xpose.msra.mxu0 0
  %378 = vmatpush.bf16.xpose.msra.mxu0 0
  %379 = vmatpush.bf16.xpose.msra.mxu0 %v370
  %380 = vmatmul.bf16.gmra.mxu0 %v367
  %v381 = vpop.f32.mrf.mxu0
  %v382 = vadd.f32 0.0, %v381
  %v383 = vpop.f32.mrf.mxu0
  %384 = vdwg.mxu0
  %v385 = vmul.f32 %v221, 0.35355338
  %v386 = vmul.f32 %v244, 0.35355338
  %v387 = vmul.f32 %v267, 0.35355338
  %v388 = vmul.f32 %v290, 0.35355338
  %v389 = vmul.f32 %v313, 0.35355338
  %v390 = vmul.f32 %v336, 0.35355338
  %v391 = vmul.f32 %v359, 0.35355338
  %v392 = vmul.f32 %v382, 0.35355338
  %v393 = vsel %vm204, %v385, -inf
  %394 = vmax.xlane.f32.xlu0 %v393
  %v395 = vpop.xlane.xlu0 %394
  %v396 = vsel %vm204, %v386, -inf
  %397 = vmax.xlane.f32.xlu0 %v396
  %v398 = vpop.xlane.xlu0 %397
  %v399 = vsel %vm204, %v387, -inf
  %400 = vmax.xlane.f32.xlu0 %v399
  %v401 = vpop.xlane.xlu0 %400
  %v402 = vsel %vm204, %v388, -inf
  %403 = vmax.xlane.f32.xlu0 %v402
  %v404 = vpop.xlane.xlu0 %403
  %v405 = vsel %vm204, %v389, -inf
  %406 = vmax.xlane.f32.xlu0 %v405
  %v407 = vpop.xlane.xlu0 %406
  %v408 = vsel %vm204, %v390, -inf
  %409 = vmax.xlane.f32.xlu0 %v408
  %v410 = vpop.xlane.xlu0 %409
  %v411 = vsel %vm204, %v391, -inf
  %412 = vmax.xlane.f32.xlu0 %v411
  %v413 = vpop.xlane.xlu0 %412
  %v414 = vsel %vm204, %v392, -inf
  %415 = vmax.xlane.f32.xlu0 %v414
  %v416 = vpop.xlane.xlu0 %415
  %v417 = vsub.f32 %v385, %v395
  %v418 = vsub.f32 %v386, %v398
  %v419 = vsub.f32 %v387, %v401
  %v420 = vsub.f32 %v388, %v404
  %v421 = vsub.f32 %v389, %v407
  %v422 = vsub.f32 %v390, %v410
  %v423 = vsub.f32 %v391, %v413
  %v424 = vsub.f32 %v392, %v416
  %v425 = vmul.f32 %v417, 1.442695
  %v426 = vpow.pop %v425
  %v427 = vmul.f32 %v418, 1.442695
  %v428 = vpow.pop %v427
  %v429 = vmul.f32 %v419, 1.442695
  %v430 = vpow.pop %v429
  %v431 = vmul.f32 %v420, 1.442695
  %v432 = vpow.pop %v431
  %v433 = vmul.f32 %v421, 1.442695
  %v434 = vpow.pop %v433
  %v435 = vmul.f32 %v422, 1.442695
  %v436 = vpow.pop %v435
  %v437 = vmul.f32 %v423, 1.442695
  %v438 = vpow.pop %v437
  %v439 = vmul.f32 %v424, 1.442695
  %v440 = vpow.pop %v439
  %v441 = vsel %vm204, %v426, 0.0
  %442 = vadd.xlane.f32.xlu0 %v441
  %v443 = vpop.xlane.xlu0 %442
  %v444 = vsel %vm204, %v428, 0.0
  %445 = vadd.xlane.f32.xlu0 %v444
  %v446 = vpop.xlane.xlu0 %445
  %v447 = vsel %vm204, %v430, 0.0
  %448 = vadd.xlane.f32.xlu0 %v447
  %v449 = vpop.xlane.xlu0 %448
  %v450 = vsel %vm204, %v432, 0.0
  %451 = vadd.xlane.f32.xlu0 %v450
  %v452 = vpop.xlane.xlu0 %451
  %v453 = vsel %vm204, %v434, 0.0
  %454 = vadd.xlane.f32.xlu0 %v453
  %v455 = vpop.xlane.xlu0 %454
  %v456 = vsel %vm204, %v436, 0.0
  %457 = vadd.xlane.f32.xlu0 %v456
  %v458 = vpop.xlane.xlu0 %457
  %v459 = vsel %vm204, %v438, 0.0
  %460 = vadd.xlane.f32.xlu0 %v459
  %v461 = vpop.xlane.xlu0 %460
  %v462 = vsel %vm204, %v440, 0.0
  %463 = vadd.xlane.f32.xlu0 %v462
  %v464 = vpop.xlane.xlu0 %463
  %v465 = vrcp.pop %v443
  %v466 = vrcp.pop %v446
  %v467 = vrcp.pop %v449
  %v468 = vrcp.pop %v452
  %v469 = vrcp.pop %v455
  %v470 = vrcp.pop %v458
  %v471 = vrcp.pop %v461
  %v472 = vrcp.pop %v464
  %v473 = vmul.f32 %v426, %v465
  %v474 = vmul.f32 %v428, %v466
  %v475 = vmul.f32 %v430, %v467
  %v476 = vmul.f32 %v432, %v468
  %v477 = vmul.f32 %v434, %v469
  %v478 = vmul.f32 %v436, %v470
  %v479 = vmul.f32 %v438, %v471
  %v480 = vmul.f32 %v440, %v472
  %v481 = vpack.c.bf16 %v473, %v473
  %v482 = vpack.c.bf16 %v474, %v474
  %v483 = vpack.c.bf16 %v475, %v475
  %v484 = vpack.c.bf16 %v476, %v476
  %v485 = vpack.c.bf16 %v477, %v477
  %v486 = vpack.c.bf16 %v478, %v478
  %v487 = vpack.c.bf16 %v479, %v479
  %v488 = vpack.c.bf16 %v480, %v480
  %v490 = vsel %vm204, %v481, 0
  %vm492 = vcmask 1043456
  %v494 = vsel %vm492, %v184, 0
  %496 = vmatpush.bf16.msra.mxu0 0
  %497 = vmatpush.bf16.msra.mxu0 0
  %498 = vmatpush.bf16.msra.mxu0 0
  %499 = vmatpush.bf16.msra.mxu0 0
  %500 = vmatpush.bf16.msra.mxu0 0
  %501 = vmatpush.bf16.msra.mxu0 0
  %502 = vmatpush.bf16.msra.mxu0 0
  %503 = vmatpush.bf16.msra.mxu0 %v494
  %504 = vmatmul.bf16.gmra.mxu0 %v490
  %v505 = vpop.f32.mrf.mxu0
  %v506 = vadd.f32 0.0, %v505
  %v507 = vpop.f32.mrf.mxu0
  %508 = vdwg.mxu0
  %v510 = vsel %vm204, %v482, 0
  %v513 = vsel %vm492, %v185, 0
  %515 = vmatpush.bf16.msra.mxu0 0
  %516 = vmatpush.bf16.msra.mxu0 0
  %517 = vmatpush.bf16.msra.mxu0 0
  %518 = vmatpush.bf16.msra.mxu0 0
  %519 = vmatpush.bf16.msra.mxu0 0
  %520 = vmatpush.bf16.msra.mxu0 0
  %521 = vmatpush.bf16.msra.mxu0 0
  %522 = vmatpush.bf16.msra.mxu0 %v513
  %523 = vmatmul.bf16.gmra.mxu0 %v510
  %v524 = vpop.f32.mrf.mxu0
  %v525 = vadd.f32 0.0, %v524
  %v526 = vpop.f32.mrf.mxu0
  %527 = vdwg.mxu0
  %v529 = vsel %vm204, %v483, 0
  %v532 = vsel %vm492, %v189, 0
  %534 = vmatpush.bf16.msra.mxu0 0
  %535 = vmatpush.bf16.msra.mxu0 0
  %536 = vmatpush.bf16.msra.mxu0 0
  %537 = vmatpush.bf16.msra.mxu0 0
  %538 = vmatpush.bf16.msra.mxu0 0
  %539 = vmatpush.bf16.msra.mxu0 0
  %540 = vmatpush.bf16.msra.mxu0 0
  %541 = vmatpush.bf16.msra.mxu0 %v532
  %542 = vmatmul.bf16.gmra.mxu0 %v529
  %v543 = vpop.f32.mrf.mxu0
  %v544 = vadd.f32 0.0, %v543
  %v545 = vpop.f32.mrf.mxu0
  %546 = vdwg.mxu0
  %v548 = vsel %vm204, %v484, 0
  %v551 = vsel %vm492, %v191, 0
  %553 = vmatpush.bf16.msra.mxu0 0
  %554 = vmatpush.bf16.msra.mxu0 0
  %555 = vmatpush.bf16.msra.mxu0 0
  %556 = vmatpush.bf16.msra.mxu0 0
  %557 = vmatpush.bf16.msra.mxu0 0
  %558 = vmatpush.bf16.msra.mxu0 0
  %559 = vmatpush.bf16.msra.mxu0 0
  %560 = vmatpush.bf16.msra.mxu0 %v551
  %561 = vmatmul.bf16.gmra.mxu0 %v548
  %v562 = vpop.f32.mrf.mxu0
  %v563 = vadd.f32 0.0, %v562
  %v564 = vpop.f32.mrf.mxu0
  %565 = vdwg.mxu0
  %v567 = vsel %vm204, %v485, 0
  %v570 = vsel %vm492, %v193, 0
  %572 = vmatpush.bf16.msra.mxu0 0
  %573 = vmatpush.bf16.msra.mxu0 0
  %574 = vmatpush.bf16.msra.mxu0 0
  %575 = vmatpush.bf16.msra.mxu0 0
  %576 = vmatpush.bf16.msra.mxu0 0
  %577 = vmatpush.bf16.msra.mxu0 0
  %578 = vmatpush.bf16.msra.mxu0 0
  %579 = vmatpush.bf16.msra.mxu0 %v570
  %580 = vmatmul.bf16.gmra.mxu0 %v567
  %v581 = vpop.f32.mrf.mxu0
  %v582 = vadd.f32 0.0, %v581
  %v583 = vpop.f32.mrf.mxu0
  %584 = vdwg.mxu0
  %v586 = vsel %vm204, %v486, 0
  %v589 = vsel %vm492, %v195, 0
  %591 = vmatpush.bf16.msra.mxu0 0
  %592 = vmatpush.bf16.msra.mxu0 0
  %593 = vmatpush.bf16.msra.mxu0 0
  %594 = vmatpush.bf16.msra.mxu0 0
  %595 = vmatpush.bf16.msra.mxu0 0
  %596 = vmatpush.bf16.msra.mxu0 0
  %597 = vmatpush.bf16.msra.mxu0 0
  %598 = vmatpush.bf16.msra.mxu0 %v589
  %599 = vmatmul.bf16.gmra.mxu0 %v586
  %v600 = vpop.f32.mrf.mxu0
  %v601 = vadd.f32 0.0, %v600
  %v602 = vpop.f32.mrf.mxu0
  %603 = vdwg.mxu0
  %v605 = vsel %vm204, %v487, 0
  %v608 = vsel %vm492, %v197, 0
  %610 = vmatpush.bf16.msra.mxu0 0
  %611 = vmatpush.bf16.msra.mxu0 0
  %612 = vmatpush.bf16.msra.mxu0 0
  %613 = vmatpush.bf16.msra.mxu0 0
  %614 = vmatpush.bf16.msra.mxu0 0
  %615 = vmatpush.bf16.msra.mxu0 0
  %616 = vmatpush.bf16.msra.mxu0 0
  %617 = vmatpush.bf16.msra.mxu0 %v608
  %618 = vmatmul.bf16.gmra.mxu0 %v605
  %v619 = vpop.f32.mrf.mxu0
  %v620 = vadd.f32 0.0, %v619
  %v621 = vpop.f32.mrf.mxu0
  %622 = vdwg.mxu0
  %v624 = vsel %vm204, %v488, 0
  %v627 = vsel %vm492, %v199, 0
  %629 = vmatpush.bf16.msra.mxu0 0
  %630 = vmatpush.bf16.msra.mxu0 0
  %631 = vmatpush.bf16.msra.mxu0 0
  %632 = vmatpush.bf16.msra.mxu0 0
  %633 = vmatpush.bf16.msra.mxu0 0
  %634 = vmatpush.bf16.msra.mxu0 0
  %635 = vmatpush.bf16.msra.mxu0 0
  %636 = vmatpush.bf16.msra.mxu0 %v627
  %637 = vmatmul.bf16.gmra.mxu0 %v624
  %v638 = vpop.f32.mrf.mxu0
  %v639 = vadd.f32 0.0, %v638
  %v640 = vpop.f32.mrf.mxu0
  %641 = vdwg.mxu0
  %644 = vrot.lane.b32.xlu0 %v544, 8
  %v645 = vpop.permute.xlu0 %644
  %646 = vrot.lane.b32.xlu0 %v563, 8
  %v647 = vpop.permute.xlu0 %646
  %652 = vrot.lane.b32.xlu0 %v582, 16
  %v653 = vpop.permute.xlu0 %652
  %654 = vrot.lane.b32.xlu0 %v601, 16
  %v655 = vpop.permute.xlu0 %654
  %660 = vrot.lane.b32.xlu0 %v620, 24
  %v661 = vpop.permute.xlu0 %660
  %662 = vrot.lane.b32.xlu0 %v639, 24
  %v663 = vpop.permute.xlu0 %662
  %v666 = vsel %vm204, %v506, %v645
  %v667 = vsel %vm204, %v525, %v647
  %vm668 = vcmask 130048
  %v669 = vsel %vm668, %v666, %v653
  %v670 = vsel %vm668, %v667, %v655
  %vm671 = vcmask 195584
  %v672 = vsel %vm671, %v669, %v661
  %v673 = vsel %vm671, %v670, %v663
  %v674 = vpack.c.bf16 %v673, %v672
  %v675 = vperm.slane %v81, 3
  %676 = vrot.lane.b32.xlu0 %v95, 32
  %v677 = vpop.permute.xlu0 %676
  %678 = vrot.lane.b32.xlu0 %v96, 32
  %v679 = vpop.permute.xlu0 %678
  %v683 = vsel %vm99, %v674, 0
  %685 = vmatpush.bf16.msra.mxu0 0
  %686 = vmatpush.bf16.msra.mxu0 0
  %687 = vmatpush.bf16.msra.mxu0 0
  %688 = vmatpush.bf16.msra.mxu0 0
  %689 = vmatpush.bf16.msra.mxu0 0
  %690 = vmatpush.bf16.msra.mxu0 0
  %691 = vmatpush.bf16.msra.mxu0 %v679
  %692 = vmatpush.bf16.msra.mxu0 %v677
  %693 = vmatmul.bf16.gmra.mxu0 %v683
  %v694 = vpop.f32.mrf.mxu0
  %v695 = vadd.f32 %v675, %v694
  %v696 = vpop.f32.mrf.mxu0
  %v697 = vadd.f32 %v675, %v696
  %698 = vdwg.mxu0
  %v699 = vadd.f32 %v27, %v695
  %v700 = vadd.f32 %v30, %v697
  %v701 = vsel %vm99, %v699, 0.0
  %702 = vadd.xlane.f32.xlu0 %v701
  %v703 = vpop.xlane.xlu0 %702
  %v704 = vsel %vm99, %v700, 0.0
  %705 = vadd.xlane.f32.xlu0 %v704
  %v706 = vpop.xlane.xlu0 %705
  %v707 = vrcp.pop 32.0
  %v708 = vmul.f32 32.0, %v707
  %v709 = vsub.f32 1.0, %v708
  %v710 = vmul.f32 %v707, %v709
  %v711 = vadd.f32 %v707, %v710
  %vm712 = vweird.f32 %v707
  %v713 = vsel %vm712, %v707, %v711
  %v714 = vmul.f32 %v703, %v713
  %v715 = vmul.f32 %v706, %v713
  %v716 = vsub.f32 %v699, %v714
  %v717 = vsub.f32 %v700, %v715
  %v718 = vmul.f32 %v716, %v716
  %v719 = vmul.f32 %v717, %v717
  %v720 = vsel %vm99, %v718, 0.0
  %721 = vadd.xlane.f32.xlu0 %v720
  %v722 = vpop.xlane.xlu0 %721
  %v723 = vsel %vm99, %v719, 0.0
  %724 = vadd.xlane.f32.xlu0 %v723
  %v725 = vpop.xlane.xlu0 %724
  %v726 = vmul.f32 %v722, %v713
  %v727 = vmul.f32 %v725, %v713
  %v728 = vadd.f32 %v726, 1e-05
  %v729 = vadd.f32 %v727, 1e-05
  %v730 = vrsqrt.pop %v728
  %v731 = vmul.f32 %v730, %v728
  %v732 = vmul.f32 %v731, %v730
  %v733 = vmul.f32 0.5, %v732
  %v734 = vsub.f32 1.5, %v733
  %v735 = vmul.f32 %v730, %v734
  %vm736 = vweird.f32 %v728
  %vm737 = vweird.f32 %v730
  %vm738 = vmor %vm736, %vm737
  %v739 = vsel %vm738, %v730, %v735
  %v740 = vrsqrt.pop %v729
  %v741 = vmul.f32 %v740, %v729
  %v742 = vmul.f32 %v741, %v740
  %v743 = vmul.f32 0.5, %v742
  %v744 = vsub.f32 1.5, %v743
  %v745 = vmul.f32 %v740, %v744
  %vm746 = vweird.f32 %v729
  %vm747 = vweird.f32 %v740
  %vm748 = vmor %vm746, %vm747
  %v749 = vsel %vm748, %v740, %v745
  %v750 = vmul.f32 %v716, %v739
  %v751 = vmul.f32 %v717, %v749
  %v752 = vperm.slane %v82, 2
  %v753 = vmul.f32 %v750, %v752
  %v754 = vmul.f32 %v751, %v752
  %v755 = vperm.slane %v82, 3
  %v756 = vadd.f32 %v753, %v755
  %v757 = vadd.f32 %v754, %v755
  %v758 = vadd.f32 %v756, %v32
  %v759 = vadd.f32 %v757, %v35
  %v760 = vpack.c.bf16 %v759, %v758
  %v761 = vperm.slane %v81, 4
  %v762 = vunpack.c.h.b16 %v65
  %v763 = vunpack.c.h.b16 %v67
  %v764 = vunpack.c.h.b16 %v69
  %v765 = vunpack.c.h.b16 %v71
  %v766 = vpack.c.b16 %v763, %v762
  %v767 = vpack.c.b16 %v765, %v764
  %v771 = vsel %vm99, %v760, 0
  %773 = vmatpush.bf16.msra.mxu0 0
  %774 = vmatpush.bf16.msra.mxu0 0
  %775 = vmatpush.bf16.msra.mxu0 0
  %776 = vmatpush.bf16.msra.mxu0 0
  %777 = vmatpush.bf16.msra.mxu0 0
  %778 = vmatpush.bf16.msra.mxu0 0
  %779 = vmatpush.bf16.msra.mxu0 %v767
  %780 = vmatpush.bf16.msra.mxu0 %v766
  %781 = vmatmul.bf16.gmra.mxu0 %v771
  %v782 = vpop.f32.mrf.mxu0
  %v783 = vadd.f32 %v761, %v782
  %v784 = vpop.f32.mrf.mxu0
  %v785 = vadd.f32 %v761, %v784
  %786 = vdwg.mxu0
  %v787 = vperm.slane %v81, 5
  %788 = vrot.lane.b32.xlu0 %v766, 96
  %v789 = vpop.permute.xlu0 %788
  %790 = vrot.lane.b32.xlu0 %v767, 96
  %v791 = vpop.permute.xlu0 %790
  %v795 = vsel %vm99, %v63, 0
  %v798 = vsel %vm99, %v64, 0
  %800 = vmatpush.bf16.msra.mxu0 0
  %801 = vmatpush.bf16.msra.mxu0 0
  %802 = vmatpush.bf16.msra.mxu0 0
  %803 = vmatpush.bf16.msra.mxu0 0
  %804 = vmatpush.bf16.msra.mxu0 0
  %805 = vmatpush.bf16.msra.mxu0 0
  %806 = vmatpush.bf16.msra.mxu0 %v791
  %807 = vmatpush.bf16.msra.mxu0 %v789
  %808 = vmatmul.bf16.gmra.mxu0 %v795
  %v809 = vpop.f32.mrf.mxu0
  %v810 = vadd.f32 %v787, %v809
  %v811 = vpop.f32.mrf.mxu0
  %v812 = vadd.f32 %v787, %v811
  %813 = vmatmul.bf16.gmra.mxu0 %v798
  %v814 = vpop.f32.mrf.mxu0
  %v815 = vadd.f32 %v787, %v814
  %v816 = vpop.f32.mrf.mxu0
  %v817 = vadd.f32 %v787, %v816
  %818 = vdwg.mxu0
  %v819 = vperm.slane %v81, 6
  %820 = vrot.lane.b32.xlu0 %v766, 64
  %v821 = vpop.permute.xlu0 %820
  %822 = vrot.lane.b32.xlu0 %v767, 64
  %v823 = vpop.permute.xlu0 %822
  %v827 = vsel %vm99, %v61, 0
  %v830 = vsel %vm99, %v62, 0
  %832 = vmatpush.bf16.msra.mxu0 0
  %833 = vmatpush.bf16.msra.mxu0 0
  %834 = vmatpush.bf16.msra.mxu0 0
  %835 = vmatpush.bf16.msra.mxu0 0
  %836 = vmatpush.bf16.msra.mxu0 0
  %837 = vmatpush.bf16.msra.mxu0 0
  %838 = vmatpush.bf16.msra.mxu0 %v823
  %839 = vmatpush.bf16.msra.mxu0 %v821
  %840 = vmatmul.bf16.gmra.mxu0 %v827
  %v841 = vpop.f32.mrf.mxu0
  %v842 = vadd.f32 %v819, %v841
  %v843 = vpop.f32.mrf.mxu0
  %v844 = vadd.f32 %v819, %v843
  %845 = vmatmul.bf16.gmra.mxu0 %v830
  %v846 = vpop.f32.mrf.mxu0
  %v847 = vadd.f32 %v819, %v846
  %v848 = vpop.f32.mrf.mxu0
  %v849 = vadd.f32 %v819, %v848
  %850 = vdwg.mxu0
  %v851 = vpack.c.bf16 %v783, %v783
  %v852 = vpack.c.bf16 %v785, %v785
  %855 = vrot.lane.b32.xlu0 %v851, 120
  %v856 = vpop.permute.xlu0 %855
  %857 = vrot.lane.b32.xlu0 %v852, 120
  %v858 = vpop.permute.xlu0 %857
  %859 = vrot.lane.b32.xlu0 %v851, 112
  %v860 = vpop.permute.xlu0 %859
  %861 = vrot.lane.b32.xlu0 %v852, 112
  %v862 = vpop.permute.xlu0 %861
  %863 = vrot.lane.b32.xlu0 %v851, 104
  %v864 = vpop.permute.xlu0 %863
  %865 = vrot.lane.b32.xlu0 %v852, 104
  %v866 = vpop.permute.xlu0 %865
  %v867 = vpack.c.bf16 %v810, %v810
  %v868 = vpack.c.bf16 %v812, %v812
  %v869 = vpack.c.bf16 %v815, %v815
  %v870 = vpack.c.bf16 %v817, %v817
  %875 = vrot.lane.b32.xlu0 %v867, 120
  %v876 = vpop.permute.xlu0 %875
  %877 = vrot.lane.b32.xlu0 %v868, 120
  %v878 = vpop.permute.xlu0 %877
  %879 = vrot.lane.b32.xlu0 %v869, 120
  %v880 = vpop.permute.xlu0 %879
  %881 = vrot.lane.b32.xlu0 %v870, 120
  %v882 = vpop.permute.xlu0 %881
  %883 = vrot.lane.b32.xlu0 %v867, 112
  %v884 = vpop.permute.xlu0 %883
  %885 = vrot.lane.b32.xlu0 %v868, 112
  %v886 = vpop.permute.xlu0 %885
  %887 = vrot.lane.b32.xlu0 %v869, 112
  %v888 = vpop.permute.xlu0 %887
  %889 = vrot.lane.b32.xlu0 %v870, 112
  %v890 = vpop.permute.xlu0 %889
  %891 = vrot.lane.b32.xlu0 %v867, 104
  %v892 = vpop.permute.xlu0 %891
  %893 = vrot.lane.b32.xlu0 %v868, 104
  %v894 = vpop.permute.xlu0 %893
  %895 = vrot.lane.b32.xlu0 %v869, 104
  %v896 = vpop.permute.xlu0 %895
  %897 = vrot.lane.b32.xlu0 %v870, 104
  %v898 = vpop.permute.xlu0 %897
  %v899 = vpack.c.bf16 %v842, %v842
  %v900 = vpack.c.bf16 %v844, %v844
  %v901 = vpack.c.bf16 %v847, %v847
  %v902 = vpack.c.bf16 %v849, %v849
  %907 = vrot.lane.b32.xlu0 %v899, 120
  %v908 = vpop.permute.xlu0 %907
  %909 = vrot.lane.b32.xlu0 %v900, 120
  %v910 = vpop.permute.xlu0 %909
  %911 = vrot.lane.b32.xlu0 %v901, 120
  %v912 = vpop.permute.xlu0 %911
  %913 = vrot.lane.b32.xlu0 %v902, 120
  %v914 = vpop.permute.xlu0 %913
  %915 = vrot.lane.b32.xlu0 %v899, 112
  %v916 = vpop.permute.xlu0 %915
  %917 = vrot.lane.b32.xlu0 %v900, 112
  %v918 = vpop.permute.xlu0 %917
  %919 = vrot.lane.b32.xlu0 %v901, 112
  %v920 = vpop.permute.xlu0 %919
  %921 = vrot.lane.b32.xlu0 %v902, 112
  %v922 = vpop.permute.xlu0 %921
  %923 = vrot.lane.b32.xlu0 %v899, 104
  %v924 = vpop.permute.xlu0 %923
  %925 = vrot.lane.b32.xlu0 %v900, 104
  %v926 = vpop.permute.xlu0 %925
  %927 = vrot.lane.b32.xlu0 %v901, 104
  %v928 = vpop.permute.xlu0 %927
  %929 = vrot.lane.b32.xlu0 %v902, 104
  %v930 = vpop.permute.xlu0 %929
  %v931 = vunpack.c.l.b16 %v867
  %v932 = vunpack.c.l.b16 %v868
  %v933 = vpack.c.b16 %v932, %v931
  %v935 = vsel %vm204, %v851, 0
  %v938 = vsel %vm204, %v933, 0
  %940 = vmatpush.bf16.xpose.msra.mxu0 0
  %941 = vmatpush.bf16.xpose.msra.mxu0 0
  %942 = vmatpush.bf16.xpose.msra.mxu0 0
  %943 = vmatpush.bf16.xpose.msra.mxu0 0
  %944 = vmatpush.bf16.xpose.msra.mxu0 0
  %945 = vmatpush.bf16.xpose.msra.mxu0 0
  %946 = vmatpush.bf16.xpose.msra.mxu0 0
  %947 = vmatpush.bf16.xpose.msra.mxu0 %v938
  %948 = vmatmul.bf16.gmra.mxu0 %v935
  %v949 = vpop.f32.mrf.mxu0
  %v950 = vadd.f32 0.0, %v949
  %v951 = vpop.f32.mrf.mxu0
  %952 = vdwg.mxu0
  %v953 = vunpack.c.l.b16 %v869
  %v954 = vunpack.c.l.b16 %v870
  %v955 = vpack.c.b16 %v954, %v953
  %v957 = vsel %vm204, %v852, 0
  %v960 = vsel %vm204, %v955, 0
  %962 = vmatpush.bf16.xpose.msra.mxu0 0
  %963 = vmatpush.bf16.xpose.msra.mxu0 0
  %964 = vmatpush.bf16.xpose.msra.mxu0 0
  %965 = vmatpush.bf16.xpose.msra.mxu0 0
  %966 = vmatpush.bf16.xpose.msra.mxu0 0
  %967 = vmatpush.bf16.xpose.msra.mxu0 0
  %968 = vmatpush.bf16.xpose.msra.mxu0 0
  %969 = vmatpush.bf16.xpose.msra.mxu0 %v960
  %970 = vmatmul.bf16.gmra.mxu0 %v957
  %v971 = vpop.f32.mrf.mxu0
  %v972 = vadd.f32 0.0, %v971
  %v973 = vpop.f32.mrf.mxu0
  %974 = vdwg.mxu0
  %v975 = vunpack.c.l.b16 %v876
  %v976 = vunpack.c.l.b16 %v878
  %v977 = vpack.c.b16 %v976, %v975
  %v979 = vsel %vm204, %v856, 0
  %v982 = vsel %vm204, %v977, 0
  %984 = vmatpush.bf16.xpose.msra.mxu0 0
  %985 = vmatpush.bf16.xpose.msra.mxu0 0
  %986 = vmatpush.bf16.xpose.msra.mxu0 0
  %987 = vmatpush.bf16.xpose.msra.mxu0 0
  %988 = vmatpush.bf16.xpose.msra.mxu0 0
  %989 = vmatpush.bf16.xpose.msra.mxu0 0
  %990 = vmatpush.bf16.xpose.msra.mxu0 0
  %991 = vmatpush.bf16.xpose.msra.mxu0 %v982
  %992 = vmatmul.bf16.gmra.mxu0 %v979
  %v993 = vpop.f32.mrf.mxu0
  %v994 = vadd.f32 0.0, %v993
  %v995 = vpop.f32.mrf.mxu0
  %996 = vdwg.mxu0
  %v997 = vunpack.c.l.b16 %v880
  %v998 = vunpack.c.l.b16 %v882
  %v999 = vpack.c.b16 %v998, %v997
  %v1001 = vsel %vm204, %v858, 0
  %v1004 = vsel %vm204, %v999, 0
  %1006 = vmatpush.bf16.xpose.msra.mxu0 0
  %1007 = vmatpush.bf16.xpose.msra.mxu0 0
  %1008 = vmatpush.bf16.xpose.msra.mxu0 0
  %1009 = vmatpush.bf16.xpose.msra.mxu0 0
  %1010 = vmatpush.bf16.xpose.msra.mxu0 0
  %1011 = vmatpush.bf16.xpose.msra.mxu0 0
  %1012 = vmatpush.bf16.xpose.msra.mxu0 0
  %1013 = vmatpush.bf16.xpose.msra.mxu0 %v1004
  %1014 = vmatmul.bf16.gmra.mxu0 %v1001
  %v1015 = vpop.f32.mrf.mxu0
  %v1016 = vadd.f32 0.0, %v1015
  %v1017 = vpop.f32.mrf.mxu0
  %1018 = vdwg.mxu0
  %v1019 = vunpack.c.l.b16 %v884
  %v1020 = vunpack.c.l.b16 %v886
  %v1021 = vpack.c.b16 %v1020, %v1019
  %v1023 = vsel %vm204, %v860, 0
  %v1026 = vsel %vm204, %v1021, 0
  %1028 = vmatpush.bf16.xpose.msra.mxu0 0
  %1029 = vmatpush.bf16.xpose.msra.mxu0 0
  %1030 = vmatpush.bf16.xpose.msra.mxu0 0
  %1031 = vmatpush.bf16.xpose.msra.mxu0 0
  %1032 = vmatpush.bf16.xpose.msra.mxu0 0
  %1033 = vmatpush.bf16.xpose.msra.mxu0 0
  %1034 = vmatpush.bf16.xpose.msra.mxu0 0
  %1035 = vmatpush.bf16.xpose.msra.mxu0 %v1026
  %1036 = vmatmul.bf16.gmra.mxu0 %v1023
  %v1037 = vpop.f32.mrf.mxu0
  %v1038 = vadd.f32 0.0, %v1037
  %v1039 = vpop.f32.mrf.mxu0
  %1040 = vdwg.mxu0
  %v1041 = vunpack.c.l.b16 %v888
  %v1042 = vunpack.c.l.b16 %v890
  %v1043 = vpack.c.b16 %v1042, %v1041
  %v1045 = vsel %vm204, %v862, 0
  %v1048 = vsel %vm204, %v1043, 0
  %1050 = vmatpush.bf16.xpose.msra.mxu0 0
  %1051 = vmatpush.bf16.xpose.msra.mxu0 0
  %1052 = vmatpush.bf16.xpose.msra.mxu0 0
  %1053 = vmatpush.bf16.xpose.msra.mxu0 0
  %1054 = vmatpush.bf16.xpose.msra.mxu0 0
  %1055 = vmatpush.bf16.xpose.msra.mxu0 0
  %1056 = vmatpush.bf16.xpose.msra.mxu0 0
  %1057 = vmatpush.bf16.xpose.msra.mxu0 %v1048
  %1058 = vmatmul.bf16.gmra.mxu0 %v1045
  %v1059 = vpop.f32.mrf.mxu0
  %v1060 = vadd.f32 0.0, %v1059
  %v1061 = vpop.f32.mrf.mxu0
  %1062 = vdwg.mxu0
  %v1063 = vunpack.c.l.b16 %v892
  %v1064 = vunpack.c.l.b16 %v894
  %v1065 = vpack.c.b16 %v1064, %v1063
  %v1067 = vsel %vm204, %v864, 0
  %v1070 = vsel %vm204, %v1065, 0
  %1072 = vmatpush.bf16.xpose.msra.mxu0 0
  %1073 = vmatpush.bf16.xpose.msra.mxu0 0
  %1074 = vmatpush.bf16.xpose.msra.mxu0 0
  %1075 = vmatpush.bf16.xpose.msra.mxu0 0
  %1076 = vmatpush.bf16.xpose.msra.mxu0 0
  %1077 = vmatpush.bf16.xpose.msra.mxu0 0
  %1078 = vmatpush.bf16.xpose.msra.mxu0 0
  %1079 = vmatpush.bf16.xpose.msra.mxu0 %v1070
  %1080 = vmatmul.bf16.gmra.mxu0 %v1067
  %v1081 = vpop.f32.mrf.mxu0
  %v1082 = vadd.f32 0.0, %v1081
  %v1083 = vpop.f32.mrf.mxu0
  %1084 = vdwg.mxu0
  %v1085 = vunpack.c.l.b16 %v896
  %v1086 = vunpack.c.l.b16 %v898
  %v1087 = vpack.c.b16 %v1086, %v1085
  %v1089 = vsel %vm204, %v866, 0
  %v1092 = vsel %vm204, %v1087, 0
  %1094 = vmatpush.bf16.xpose.msra.mxu0 0
  %1095 = vmatpush.bf16.xpose.msra.mxu0 0
  %1096 = vmatpush.bf16.xpose.msra.mxu0 0
  %1097 = vmatpush.bf16.xpose.msra.mxu0 0
  %1098 = vmatpush.bf16.xpose.msra.mxu0 0
  %1099 = vmatpush.bf16.xpose.msra.mxu0 0
  %1100 = vmatpush.bf16.xpose.msra.mxu0 0
  %1101 = vmatpush.bf16.xpose.msra.mxu0 %v1092
  %1102 = vmatmul.bf16.gmra.mxu0 %v1089
  %v1103 = vpop.f32.mrf.mxu0
  %v1104 = vadd.f32 0.0, %v1103
  %v1105 = vpop.f32.mrf.mxu0
  %1106 = vdwg.mxu0
  %v1107 = vmul.f32 %v950, 0.35355338
  %v1108 = vmul.f32 %v972, 0.35355338
  %v1109 = vmul.f32 %v994, 0.35355338
  %v1110 = vmul.f32 %v1016, 0.35355338
  %v1111 = vmul.f32 %v1038, 0.35355338
  %v1112 = vmul.f32 %v1060, 0.35355338
  %v1113 = vmul.f32 %v1082, 0.35355338
  %v1114 = vmul.f32 %v1104, 0.35355338
  %v1115 = vsel %vm668, %v1107, -inf
  %1116 = vmax.xlane.f32.xlu0 %v1115
  %v1117 = vpop.xlane.xlu0 %1116
  %v1118 = vsel %vm668, %v1108, -inf
  %1119 = vmax.xlane.f32.xlu0 %v1118
  %v1120 = vpop.xlane.xlu0 %1119
  %v1121 = vsel %vm668, %v1109, -inf
  %1122 = vmax.xlane.f32.xlu0 %v1121
  %v1123 = vpop.xlane.xlu0 %1122
  %v1124 = vsel %vm668, %v1110, -inf
  %1125 = vmax.xlane.f32.xlu0 %v1124
  %v1126 = vpop.xlane.xlu0 %1125
  %v1127 = vsel %vm668, %v1111, -inf
  %1128 = vmax.xlane.f32.xlu0 %v1127
  %v1129 = vpop.xlane.xlu0 %1128
  %v1130 = vsel %vm668, %v1112, -inf
  %1131 = vmax.xlane.f32.xlu0 %v1130
  %v1132 = vpop.xlane.xlu0 %1131
  %v1133 = vsel %vm668, %v1113, -inf
  %1134 = vmax.xlane.f32.xlu0 %v1133
  %v1135 = vpop.xlane.xlu0 %1134
  %v1136 = vsel %vm668, %v1114, -inf
  %1137 = vmax.xlane.f32.xlu0 %v1136
  %v1138 = vpop.xlane.xlu0 %1137
  %v1139 = vsub.f32 %v1107, %v1117
  %v1140 = vsub.f32 %v1108, %v1120
  %v1141 = vsub.f32 %v1109, %v1123
  %v1142 = vsub.f32 %v1110, %v1126
  %v1143 = vsub.f32 %v1111, %v1129
  %v1144 = vsub.f32 %v1112, %v1132
  %v1145 = vsub.f32 %v1113, %v1135
  %v1146 = vsub.f32 %v1114, %v1138
  %v1147 = vmul.f32 %v1139, 1.442695
  %v1148 = vpow.pop %v1147
  %v1149 = vmul.f32 %v1140, 1.442695
  %v1150 = vpow.pop %v1149
  %v1151 = vmul.f32 %v1141, 1.442695
  %v1152 = vpow.pop %v1151
  %v1153 = vmul.f32 %v1142, 1.442695
  %v1154 = vpow.pop %v1153
  %v1155 = vmul.f32 %v1143, 1.442695
  %v1156 = vpow.pop %v1155
  %v1157 = vmul.f32 %v1144, 1.442695
  %v1158 = vpow.pop %v1157
  %v1159 = vmul.f32 %v1145, 1.442695
  %v1160 = vpow.pop %v1159
  %v1161 = vmul.f32 %v1146, 1.442695
  %v1162 = vpow.pop %v1161
  %v1163 = vsel %vm668, %v1148, 0.0
  %1164 = vadd.xlane.f32.xlu0 %v1163
  %v1165 = vpop.xlane.xlu0 %1164
  %v1166 = vsel %vm668, %v1150, 0.0
  %1167 = vadd.xlane.f32.xlu0 %v1166
  %v1168 = vpop.xlane.xlu0 %1167
  %v1169 = vsel %vm668, %v1152, 0.0
  %1170 = vadd.xlane.f32.xlu0 %v1169
  %v1171 = vpop.xlane.xlu0 %1170
  %v1172 = vsel %vm668, %v1154, 0.0
  %1173 = vadd.xlane.f32.xlu0 %v1172
  %v1174 = vpop.xlane.xlu0 %1173
  %v1175 = vsel %vm668, %v1156, 0.0
  %1176 = vadd.xlane.f32.xlu0 %v1175
  %v1177 = vpop.xlane.xlu0 %1176
  %v1178 = vsel %vm668, %v1158, 0.0
  %1179 = vadd.xlane.f32.xlu0 %v1178
  %v1180 = vpop.xlane.xlu0 %1179
  %v1181 = vsel %vm668, %v1160, 0.0
  %1182 = vadd.xlane.f32.xlu0 %v1181
  %v1183 = vpop.xlane.xlu0 %1182
  %v1184 = vsel %vm668, %v1162, 0.0
  %1185 = vadd.xlane.f32.xlu0 %v1184
  %v1186 = vpop.xlane.xlu0 %1185
  %v1187 = vrcp.pop %v1165
  %v1188 = vrcp.pop %v1168
  %v1189 = vrcp.pop %v1171
  %v1190 = vrcp.pop %v1174
  %v1191 = vrcp.pop %v1177
  %v1192 = vrcp.pop %v1180
  %v1193 = vrcp.pop %v1183
  %v1194 = vrcp.pop %v1186
  %v1195 = vmul.f32 %v1148, %v1187
  %v1196 = vmul.f32 %v1150, %v1188
  %v1197 = vmul.f32 %v1152, %v1189
  %v1198 = vmul.f32 %v1154, %v1190
  %v1199 = vmul.f32 %v1156, %v1191
  %v1200 = vmul.f32 %v1158, %v1192
  %v1201 = vmul.f32 %v1160, %v1193
  %v1202 = vmul.f32 %v1162, %v1194
  %v1203 = vpack.c.bf16 %v1195, %v1195
  %v1204 = vpack.c.bf16 %v1196, %v1196
  %v1205 = vpack.c.bf16 %v1197, %v1197
  %v1206 = vpack.c.bf16 %v1198, %v1198
  %v1207 = vpack.c.bf16 %v1199, %v1199
  %v1208 = vpack.c.bf16 %v1200, %v1200
  %v1209 = vpack.c.bf16 %v1201, %v1201
  %v1210 = vpack.c.bf16 %v1202, %v1202
  %v1211 = vunpack.c.l.b16 %v899
  %v1212 = vunpack.c.l.b16 %v900
  %v1213 = vpack.c.b16 %v1212, %v1211
  %v1216 = vsel %vm668, %v1203, 0
  %1218 = vmatpush.bf16.msra.mxu0 0
  %1219 = vmatpush.bf16.msra.mxu0 0
  %1220 = vmatpush.bf16.msra.mxu0 0
  %1221 = vmatpush.bf16.msra.mxu0 0
  %1222 = vmatpush.bf16.msra.mxu0 0
  %1223 = vmatpush.bf16.msra.mxu0 0
  %1224 = vmatpush.bf16.msra.mxu0 0
  %1225 = vmatpush.bf16.msra.mxu0 %v1213
  %1226 = vmatmul.bf16.gmra.mxu0 %v1216
  %v1227 = vpop.f32.mrf.mxu0
  %v1228 = vadd.f32 0.0, %v1227
  %v1229 = vpop.f32.mrf.mxu0
  %1230 = vdwg.mxu0
  %v1231 = vunpack.c.l.b16 %v901
  %v1232 = vunpack.c.l.b16 %v902
  %v1233 = vpack.c.b16 %v1232, %v1231
  %v1236 = vsel %vm668, %v1204, 0
  %1238 = vmatpush.bf16.msra.mxu0 0
  %1239 = vmatpush.bf16.msra.mxu0 0
  %1240 = vmatpush.bf16.msra.mxu0 0
  %1241 = vmatpush.bf16.msra.mxu0 0
  %1242 = vmatpush.bf16.msra.mxu0 0
  %1243 = vmatpush.bf16.msra.mxu0 0
  %1244 = vmatpush.bf16.msra.mxu0 0
  %1245 = vmatpush.bf16.msra.mxu0 %v1233
  %1246 = vmatmul.bf16.gmra.mxu0 %v1236
  %v1247 = vpop.f32.mrf.mxu0
  %v1248 = vadd.f32 0.0, %v1247
  %v1249 = vpop.f32.mrf.mxu0
  %1250 = vdwg.mxu0
  %v1251 = vunpack.c.l.b16 %v908
  %v1252 = vunpack.c.l.b16 %v910
  %v1253 = vpack.c.b16 %v1252, %v1251
  %v1256 = vsel %vm668, %v1205, 0
  %1258 = vmatpush.bf16.msra.mxu0 0
  %1259 = vmatpush.bf16.msra.mxu0 0
  %1260 = vmatpush.bf16.msra.mxu0 0
  %1261 = vmatpush.bf16.msra.mxu0 0
  %1262 = vmatpush.bf16.msra.mxu0 0
  %1263 = vmatpush.bf16.msra.mxu0 0
  %1264 = vmatpush.bf16.msra.mxu0 0
  %1265 = vmatpush.bf16.msra.mxu0 %v1253
  %1266 = vmatmul.bf16.gmra.mxu0 %v1256
  %v1267 = vpop.f32.mrf.mxu0
  %v1268 = vadd.f32 0.0, %v1267
  %v1269 = vpop.f32.mrf.mxu0
  %1270 = vdwg.mxu0
  %v1271 = vunpack.c.l.b16 %v912
  %v1272 = vunpack.c.l.b16 %v914
  %v1273 = vpack.c.b16 %v1272, %v1271
  %v1276 = vsel %vm668, %v1206, 0
  %1278 = vmatpush.bf16.msra.mxu0 0
  %1279 = vmatpush.bf16.msra.mxu0 0
  %1280 = vmatpush.bf16.msra.mxu0 0
  %1281 = vmatpush.bf16.msra.mxu0 0
  %1282 = vmatpush.bf16.msra.mxu0 0
  %1283 = vmatpush.bf16.msra.mxu0 0
  %1284 = vmatpush.bf16.msra.mxu0 0
  %1285 = vmatpush.bf16.msra.mxu0 %v1273
  %1286 = vmatmul.bf16.gmra.mxu0 %v1276
  %v1287 = vpop.f32.mrf.mxu0
  %v1288 = vadd.f32 0.0, %v1287
  %v1289 = vpop.f32.mrf.mxu0
  %1290 = vdwg.mxu0
  %v1291 = vunpack.c.l.b16 %v916
  %v1292 = vunpack.c.l.b16 %v918
  %v1293 = vpack.c.b16 %v1292, %v1291
  %v1296 = vsel %vm668, %v1207, 0
  %1298 = vmatpush.bf16.msra.mxu0 0
  %1299 = vmatpush.bf16.msra.mxu0 0
  %1300 = vmatpush.bf16.msra.mxu0 0
  %1301 = vmatpush.bf16.msra.mxu0 0
  %1302 = vmatpush.bf16.msra.mxu0 0
  %1303 = vmatpush.bf16.msra.mxu0 0
  %1304 = vmatpush.bf16.msra.mxu0 0
  %1305 = vmatpush.bf16.msra.mxu0 %v1293
  %1306 = vmatmul.bf16.gmra.mxu0 %v1296
  %v1307 = vpop.f32.mrf.mxu0
  %v1308 = vadd.f32 0.0, %v1307
  %v1309 = vpop.f32.mrf.mxu0
  %1310 = vdwg.mxu0
  %v1311 = vunpack.c.l.b16 %v920
  %v1312 = vunpack.c.l.b16 %v922
  %v1313 = vpack.c.b16 %v1312, %v1311
  %v1316 = vsel %vm668, %v1208, 0
  %1318 = vmatpush.bf16.msra.mxu0 0
  %1319 = vmatpush.bf16.msra.mxu0 0
  %1320 = vmatpush.bf16.msra.mxu0 0
  %1321 = vmatpush.bf16.msra.mxu0 0
  %1322 = vmatpush.bf16.msra.mxu0 0
  %1323 = vmatpush.bf16.msra.mxu0 0
  %1324 = vmatpush.bf16.msra.mxu0 0
  %1325 = vmatpush.bf16.msra.mxu0 %v1313
  %1326 = vmatmul.bf16.gmra.mxu0 %v1316
  %v1327 = vpop.f32.mrf.mxu0
  %v1328 = vadd.f32 0.0, %v1327
  %v1329 = vpop.f32.mrf.mxu0
  %1330 = vdwg.mxu0
  %v1331 = vunpack.c.l.b16 %v924
  %v1332 = vunpack.c.l.b16 %v926
  %v1333 = vpack.c.b16 %v1332, %v1331
  %v1336 = vsel %vm668, %v1209, 0
  %1338 = vmatpush.bf16.msra.mxu0 0
  %1339 = vmatpush.bf16.msra.mxu0 0
  %1340 = vmatpush.bf16.msra.mxu0 0
  %1341 = vmatpush.bf16.msra.mxu0 0
  %1342 = vmatpush.bf16.msra.mxu0 0
  %1343 = vmatpush.bf16.msra.mxu0 0
  %1344 = vmatpush.bf16.msra.mxu0 0
  %1345 = vmatpush.bf16.msra.mxu0 %v1333
  %1346 = vmatmul.bf16.gmra.mxu0 %v1336
  %v1347 = vpop.f32.mrf.mxu0
  %v1348 = vadd.f32 0.0, %v1347
  %v1349 = vpop.f32.mrf.mxu0
  %1350 = vdwg.mxu0
  %v1351 = vunpack.c.l.b16 %v928
  %v1352 = vunpack.c.l.b16 %v930
  %v1353 = vpack.c.b16 %v1352, %v1351
  %v1356 = vsel %vm668, %v1210, 0
  %1358 = vmatpush.bf16.msra.mxu0 0
  %1359 = vmatpush.bf16.msra.mxu0 0
  %1360 = vmatpush.bf16.msra.mxu0 0
  %1361 = vmatpush.bf16.msra.mxu0 0
  %1362 = vmatpush.bf16.msra.mxu0 0
  %1363 = vmatpush.bf16.msra.mxu0 0
  %1364 = vmatpush.bf16.msra.mxu0 0
  %1365 = vmatpush.bf16.msra.mxu0 %v1353
  %1366 = vmatmul.bf16.gmra.mxu0 %v1356
  %v1367 = vpop.f32.mrf.mxu0
  %v1368 = vadd.f32 0.0, %v1367
  %v1369 = vpop.f32.mrf.mxu0
  %1370 = vdwg.mxu0
  %1373 = vrot.lane.b32.xlu0 %v1268, 8
  %v1374 = vpop.permute.xlu0 %1373
  %1375 = vrot.lane.b32.xlu0 %v1288, 8
  %v1376 = vpop.permute.xlu0 %1375
  %1381 = vrot.lane.b32.xlu0 %v1308, 16
  %v1382 = vpop.permute.xlu0 %1381
  %1383 = vrot.lane.b32.xlu0 %v1328, 16
  %v1384 = vpop.permute.xlu0 %1383
  %1389 = vrot.lane.b32.xlu0 %v1348, 24
  %v1390 = vpop.permute.xlu0 %1389
  %1391 = vrot.lane.b32.xlu0 %v1368, 24
  %v1392 = vpop.permute.xlu0 %1391
  %v1395 = vsel %vm204, %v1228, %v1374
  %v1396 = vsel %vm204, %v1248, %v1376
  %v1397 = vsel %vm668, %v1395, %v1382
  %v1398 = vsel %vm668, %v1396, %v1384
  %v1399 = vsel %vm671, %v1397, %v1390
  %v1400 = vsel %vm671, %v1398, %v1392
  %v1401 = vpack.c.bf16 %v1400, %v1399
  %v1402 = vperm.slane %v81, 7
  %1403 = vrot.lane.b32.xlu0 %v766, 32
  %v1404 = vpop.permute.xlu0 %1403
  %1405 = vrot.lane.b32.xlu0 %v767, 32
  %v1406 = vpop.permute.xlu0 %1405
  %v1410 = vsel %vm99, %v1401, 0
  %1412 = vmatpush.bf16.msra.mxu0 0
  %1413 = vmatpush.bf16.msra.mxu0 0
  %1414 = vmatpush.bf16.msra.mxu0 0
  %1415 = vmatpush.bf16.msra.mxu0 0
  %1416 = vmatpush.bf16.msra.mxu0 0
  %1417 = vmatpush.bf16.msra.mxu0 0
  %1418 = vmatpush.bf16.msra.mxu0 %v1406
  %1419 = vmatpush.bf16.msra.mxu0 %v1404
  %1420 = vmatmul.bf16.gmra.mxu0 %v1410
  %v1421 = vpop.f32.mrf.mxu0
  %v1422 = vadd.f32 %v1402, %v1421
  %v1423 = vpop.f32.mrf.mxu0
  %v1424 = vadd.f32 %v1402, %v1423
  %1425 = vdwg.mxu0
  %v1426 = vadd.f32 %v756, %v1422
  %v1427 = vadd.f32 %v757, %v1424
  %v1428 = vsel %vm99, %v1426, 0.0
  %1429 = vadd.xlane.f32.xlu0 %v1428
  %v1430 = vpop.xlane.xlu0 %1429
  %v1431 = vsel %vm99, %v1427, 0.0
  %1432 = vadd.xlane.f32.xlu0 %v1431
  %v1433 = vpop.xlane.xlu0 %1432
  %v1434 = vmul.f32 %v1430, %v713
  %v1435 = vmul.f32 %v1433, %v713
  %v1436 = vsub.f32 %v1426, %v1434
  %v1437 = vsub.f32 %v1427, %v1435
  %v1438 = vmul.f32 %v1436, %v1436
  %v1439 = vmul.f32 %v1437, %v1437
  %v1440 = vsel %vm99, %v1438, 0.0
  %1441 = vadd.xlane.f32.xlu0 %v1440
  %v1442 = vpop.xlane.xlu0 %1441
  %v1443 = vsel %vm99, %v1439, 0.0
  %1444 = vadd.xlane.f32.xlu0 %v1443
  %v1445 = vpop.xlane.xlu0 %1444
  %v1446 = vmul.f32 %v1442, %v713
  %v1447 = vmul.f32 %v1445, %v713
  %v1448 = vadd.f32 %v1446, 1e-05
  %v1449 = vadd.f32 %v1447, 1e-05
  %v1450 = vrsqrt.pop %v1448
  %v1451 = vmul.f32 %v1450, %v1448
  %v1452 = vmul.f32 %v1451, %v1450
  %v1453 = vmul.f32 0.5, %v1452
  %v1454 = vsub.f32 1.5, %v1453
  %v1455 = vmul.f32 %v1450, %v1454
  %vm1456 = vweird.f32 %v1448
  %vm1457 = vweird.f32 %v1450
  %vm1458 = vmor %vm1456, %vm1457
  %v1459 = vsel %vm1458, %v1450, %v1455
  %v1460 = vrsqrt.pop %v1449
  %v1461 = vmul.f32 %v1460, %v1449
  %v1462 = vmul.f32 %v1461, %v1460
  %v1463 = vmul.f32 0.5, %v1462
  %v1464 = vsub.f32 1.5, %v1463
  %v1465 = vmul.f32 %v1460, %v1464
  %vm1466 = vweird.f32 %v1449
  %vm1467 = vweird.f32 %v1460
  %vm1468 = vmor %vm1466, %vm1467
  %v1469 = vsel %vm1468, %v1460, %v1465
  %v1470 = vmul.f32 %v1436, %v1459
  %v1471 = vmul.f32 %v1437, %v1469
  %v1472 = vperm.slane %v82, 4
  %v1473 = vmul.f32 %v1470, %v1472
  %v1474 = vmul.f32 %v1471, %v1472
  %v1475 = vperm.slane %v82, 5
  %v1476 = vadd.f32 %v1473, %v1475
  %v1477 = vadd.f32 %v1474, %v1475
  %v1478 = vpack.c.bf16 %v1477, %v1476
  %v1479 = vperm.slane %v82, 0
  %v1484 = vunpack.c.l.b16 %v66
  %v1485 = vunpack.c.l.b16 %v68
  %v1486 = vunpack.c.l.b16 %v70
  %v1487 = vunpack.c.l.b16 %v72
  %v1488 = vpack.c.b16 %v1485, %v1484
  %v1489 = vpack.c.b16 %v1487, %v1486
  %v1493 = vsel %vm99, %v1478, 0
  %1495 = vmatpush.bf16.msra.mxu0 0
  %1496 = vmatpush.bf16.msra.mxu0 0
  %1497 = vmatpush.bf16.msra.mxu0 0
  %1498 = vmatpush.bf16.msra.mxu0 0
  %1499 = vmatpush.bf16.msra.mxu0 0
  %1500 = vmatpush.bf16.msra.mxu0 0
  %1501 = vmatpush.bf16.msra.mxu0 %v1489
  %1502 = vmatpush.bf16.msra.mxu0 %v1488
  %1503 = vmatmul.bf16.gmra.mxu0 %v1493
  %v1504 = vpop.f32.mrf.mxu0
  %v1505 = vadd.f32 %v1479, %v1504
  %v1506 = vpop.f32.mrf.mxu0
  %v1507 = vadd.f32 %v1479, %v1506
  %1508 = vdwg.mxu0
  %v1509 = vmax.f32 %v1505, 0.0
  %v1510 = vmax.f32 %v1507, 0.0
  %v1511 = vpack.c.bf16 %v1510, %v1509
  %v1512 = vperm.slane %v82, 1
  %v1521 = vunpack.c.l.b16 %v73
  %v1522 = vunpack.c.l.b16 %v74
  %v1523 = vunpack.c.l.b16 %v75
  %v1524 = vunpack.c.l.b16 %v76
  %v1525 = vunpack.c.l.b16 %v77
  %v1526 = vunpack.c.l.b16 %v78
  %v1527 = vunpack.c.l.b16 %v79
  %v1528 = vunpack.c.l.b16 %v80
  %v1529 = vpack.c.b16 %v1522, %v1521
  %v1530 = vpack.c.b16 %v1524, %v1523
  %v1531 = vpack.c.b16 %v1526, %v1525
  %v1532 = vpack.c.b16 %v1528, %v1527
  %vm1537 = vcmask 523264
  %v1539 = vsel %vm1537, %v1511, 0
  %1541 = vmatpush.bf16.msra.mxu0 0
  %1542 = vmatpush.bf16.msra.mxu0 0
  %1543 = vmatpush.bf16.msra.mxu0 0
  %1544 = vmatpush.bf16.msra.mxu0 0
  %1545 = vmatpush.bf16.msra.mxu0 %v1532
  %1546 = vmatpush.bf16.msra.mxu0 %v1531
  %1547 = vmatpush.bf16.msra.mxu0 %v1530
  %1548 = vmatpush.bf16.msra.mxu0 %v1529
  %1549 = vmatmul.bf16.gmra.mxu0 %v1539
  %v1550 = vpop.f32.mrf.mxu0
  %v1551 = vadd.f32 %v1512, %v1550
  %v1552 = vpop.f32.mrf.mxu0
  %v1553 = vadd.f32 %v1512, %v1552
  %1554 = vdwg.mxu0
  %v1555 = vadd.f32 %v1476, %v1551
  %v1556 = vadd.f32 %v1477, %v1553
  %v1557 = vsel %vm99, %v1555, 0.0
  %1558 = vadd.xlane.f32.xlu0 %v1557
  %v1559 = vpop.xlane.xlu0 %1558
  %v1560 = vsel %vm99, %v1556, 0.0
  %1561 = vadd.xlane.f32.xlu0 %v1560
  %v1562 = vpop.xlane.xlu0 %1561
  %v1563 = vmul.f32 %v1559, %v713
  %v1564 = vmul.f32 %v1562, %v713
  %v1565 = vsub.f32 %v1555, %v1563
  %v1566 = vsub.f32 %v1556, %v1564
  %v1567 = vmul.f32 %v1565, %v1565
  %v1568 = vmul.f32 %v1566, %v1566
  %v1569 = vsel %vm99, %v1567, 0.0
  %1570 = vadd.xlane.f32.xlu0 %v1569
  %v1571 = vpop.xlane.xlu0 %1570
  %v1572 = vsel %vm99, %v1568, 0.0
  %1573 = vadd.xlane.f32.xlu0 %v1572
  %v1574 = vpop.xlane.xlu0 %1573
  %v1575 = vmul.f32 %v1571, %v713
  %v1576 = vmul.f32 %v1574, %v713
  %v1577 = vadd.f32 %v1575, 1e-05
  %v1578 = vadd.f32 %v1576, 1e-05
  %v1579 = vrsqrt.pop %v1577
  %v1580 = vmul.f32 %v1579, %v1577
  %v1581 = vmul.f32 %v1580, %v1579
  %v1582 = vmul.f32 0.5, %v1581
  %v1583 = vsub.f32 1.5, %v1582
  %v1584 = vmul.f32 %v1579, %v1583
  %vm1585 = vweird.f32 %v1577
  %vm1586 = vweird.f32 %v1579
  %vm1587 = vmor %vm1585, %vm1586
  %v1588 = vsel %vm1587, %v1579, %v1584
  %v1589 = vrsqrt.pop %v1578
  %v1590 = vmul.f32 %v1589, %v1578
  %v1591 = vmul.f32 %v1590, %v1589
  %v1592 = vmul.f32 0.5, %v1591
  %v1593 = vsub.f32 1.5, %v1592
  %v1594 = vmul.f32 %v1589, %v1593
  %vm1595 = vweird.f32 %v1578
  %vm1596 = vweird.f32 %v1589
  %vm1597 = vmor %vm1595, %vm1596
  %v1598 = vsel %vm1597, %v1589, %v1594
  %v1599 = vmul.f32 %v1565, %v1588
  %v1600 = vmul.f32 %v1566, %v1598
  %v1601 = vperm.slane %v82, 6
  %v1602 = vmul.f32 %v1599, %v1601
  %v1603 = vmul.f32 %v1600, %v1601
  %v1604 = vperm.slane %v82, 7
  %v1605 = vadd.f32 %v1602, %v1604
  %v1606 = vadd.f32 %v1603, %v1604
  %v1607 = vsel %vm99, %v1605, 0.0
  %1608 = vadd.xlane.f32.xlu0 %v1607
  %v1609 = vpop.xlane.xlu0 %1608
  %v1610 = vsel %vm99, %v1606, 0.0
  %1611 = vadd.xlane.f32.xlu0 %v1610
  %v1612 = vpop.xlane.xlu0 %1611
  %v1613 = vmul.f32 %v1609, %v713
  %v1614 = vmul.f32 %v1612, %v713
  %v1615 = vsub.f32 %v1605, %v1613
  %v1616 = vsub.f32 %v1606, %v1614
  %v1617 = vmul.f32 %v1615, %v1615
  %v1618 = vmul.f32 %v1616, %v1616
  %v1619 = vsel %vm99, %v1617, 0.0
  %1620 = vadd.xlane.f32.xlu0 %v1619
  %v1621 = vpop.xlane.xlu0 %1620
  %v1622 = vsel %vm99, %v1618, 0.0
  %1623 = vadd.xlane.f32.xlu0 %v1622
  %v1624 = vpop.xlane.xlu0 %1623
  %v1625 = vmul.f32 %v1621, %v713
  %v1626 = vmul.f32 %v1624, %v713
  %v1627 = vadd.f32 %v1625, 1e-05
  %v1628 = vadd.f32 %v1626, 1e-05
  %v1629 = vrsqrt.pop %v1627
  %v1630 = vmul.f32 %v1629, %v1627
  %v1631 = vmul.f32 %v1630, %v1629
  %v1632 = vmul.f32 0.5, %v1631
  %v1633 = vsub.f32 1.5, %v1632
  %v1634 = vmul.f32 %v1629, %v1633
  %vm1635 = vweird.f32 %v1627
  %vm1636 = vweird.f32 %v1629
  %vm1637 = vmor %vm1635, %vm1636
  %v1638 = vsel %vm1637, %v1629, %v1634
  %v1639 = vrsqrt.pop %v1628
  %v1640 = vmul.f32 %v1639, %v1628
  %v1641 = vmul.f32 %v1640, %v1639
  %v1642 = vmul.f32 0.5, %v1641
  %v1643 = vsub.f32 1.5, %v1642
  %v1644 = vmul.f32 %v1639, %v1643
  %vm1645 = vweird.f32 %v1628
  %vm1646 = vweird.f32 %v1639
  %vm1647 = vmor %vm1645, %vm1646
  %v1648 = vsel %vm1647, %v1639, %v1644
  %v1649 = vmul.f32 %v1615, %v1638
  %v1650 = vmul.f32 %v1616, %v1648
  %v1651 = vperm.slane %v83, 0
  %v1652 = vmul.f32 %v1649, %v1651
  %v1653 = vmul.f32 %v1650, %v1651
  %v1654 = vperm.slane %v83, 1
  %v1655 = vadd.f32 %v1652, %v1654
  %v1656 = vadd.f32 %v1653, %v1654
  %1658 = vrot.lane.b32.xlu0 %v1656, 32
  %v1659 = vpop.permute.xlu0 %1658
  %v1661 = vsel %vm99, %v1655, %v1659
  %1662 = vst.msk [vmem:[%s7] sm:$0xff] %vm1537, %v1661
  %s1663 = scalar_lea.vmem %s4, 48
  %v1664 = vld [vmem:[%s1663] sm:$0xff]
  %v1665 = vld [vmem:[%s1663 + $0x8] sm:$0xf]
  %v1666 = vld [vmem:[%s1663 + $0xc] sm:$0xff]
  %v1667 = vld [vmem:[%s1663 + $0x14] sm:$0xf]
  %v1668 = vld [vmem:[%s1663 + $0x18] sm:$0xff]
  %v1669 = vld [vmem:[%s1663 + $0x20] sm:$0xf]
  %v1670 = vld [vmem:[%s1663 + $0x24] sm:$0xff]
  %v1671 = vld [vmem:[%s1663 + $0x2c] sm:$0xf]
  %s1672 = scalar_lea.vmem %s5, 32
  %v1673 = vld [vmem:[%s1672] sm:$0xf]
  %v1674 = vld [vmem:[%s1672 + $0x4] sm:$0xf]
  %v1675 = vld [vmem:[%s1672 + $0x8] sm:$0xf]
  %v1676 = vld [vmem:[%s1672 + $0xc] sm:$0xf]
  %v1677 = vld [vmem:[%s1672 + $0x10] sm:$0xf]
  %v1678 = vld [vmem:[%s1672 + $0x14] sm:$0xf]
  %v1679 = vld [vmem:[%s1672 + $0x18] sm:$0xf]
  %v1680 = vld [vmem:[%s1672 + $0x1c] sm:$0xf]
  %s1681 = scalar_lea.vmem %s6, 24
  %v1682 = vld [vmem:[%s1681] sm:$0xff]
  %v1683 = vld [vmem:[%s1681 + $0x8] sm:$0xff]
  %v1684 = vld [vmem:[%s1681 + $0x10] sm:$0x3]
  %v1685 = vadd.f32 %v1605, %v32
  %v1686 = vadd.f32 %v1606, %v35
  %v1687 = vpack.c.bf16 %v1686, %v1685
  %v1692 = vunpack.c.l.b16 %v1664
  %v1693 = vunpack.c.l.b16 %v1666
  %v1694 = vunpack.c.l.b16 %v1668
  %v1695 = vunpack.c.l.b16 %v1670
  %v1696 = vpack.c.b16 %v1693, %v1692
  %v1697 = vpack.c.b16 %v1695, %v1694
  %v1701 = vsel %vm99, %v1687, 0
  %1703 = vmatpush.bf16.msra.mxu0 0
  %1704 = vmatpush.bf16.msra.mxu0 0
  %1705 = vmatpush.bf16.msra.mxu0 0
  %1706 = vmatpush.bf16.msra.mxu0 0
  %1707 = vmatpush.bf16.msra.mxu0 0
  %1708 = vmatpush.bf16.msra.mxu0 0
  %1709 = vmatpush.bf16.msra.mxu0 %v1697
  %1710 = vmatpush.bf16.msra.mxu0 %v1696
  %1711 = vmatmul.bf16.gmra.mxu0 %v1701
  %v1712 = vpop.f32.mrf.mxu0
  %v1713 = vadd.f32 0.0, %v1712
  %v1714 = vpop.f32.mrf.mxu0
  %v1715 = vadd.f32 0.0, %v1714
  %1716 = vdwg.mxu0
  %v1717 = vperm.slane %v1682, 0
  %v1718 = vadd.f32 %v1713, %v1717
  %v1719 = vadd.f32 %v1715, %v1717
  %v1720 = vperm.slane %v1682, 1
  %1722 = vrot.lane.b32.xlu0 %v1720, 32
  %v1723 = vpop.permute.xlu0 %1722
  %v1725 = vadd.f32 %v1713, %v1723
  %v1726 = vadd.f32 %v1715, %v1723
  %v1727 = vpack.c.bf16 %v1606, %v1605
  %v1728 = vperm.slane %v1682, 2
  %1729 = vrot.lane.b32.xlu0 %v1696, 64
  %v1730 = vpop.permute.xlu0 %1729
  %1731 = vrot.lane.b32.xlu0 %v1697, 64
  %v1732 = vpop.permute.xlu0 %1731
  %v1736 = vsel %vm99, %v1727, 0
  %1738 = vmatpush.bf16.msra.mxu0 0
  %1739 = vmatpush.bf16.msra.mxu0 0
  %1740 = vmatpush.bf16.msra.mxu0 0
  %1741 = vmatpush.bf16.msra.mxu0 0
  %1742 = vmatpush.bf16.msra.mxu0 0
  %1743 = vmatpush.bf16.msra.mxu0 0
  %1744 = vmatpush.bf16.msra.mxu0 %v1732
  %1745 = vmatpush.bf16.msra.mxu0 %v1730
  %1746 = vmatmul.bf16.gmra.mxu0 %v1736
  %v1747 = vpop.f32.mrf.mxu0
  %v1748 = vadd.f32 %v1728, %v1747
  %v1749 = vpop.f32.mrf.mxu0
  %v1750 = vadd.f32 %v1728, %v1749
  %1751 = vdwg.mxu0
  %v1752 = vpack.c.bf16 %v1718, %v1718
  %v1753 = vpack.c.bf16 %v1719, %v1719
  %1756 = vrot.lane.b32.xlu0 %v1752, 120
  %v1757 = vpop.permute.xlu0 %1756
  %1758 = vrot.lane.b32.xlu0 %v1753, 120
  %v1759 = vpop.permute.xlu0 %1758
  %1760 = vrot.lane.b32.xlu0 %v1752, 112
  %v1761 = vpop.permute.xlu0 %1760
  %1762 = vrot.lane.b32.xlu0 %v1753, 112
  %v1763 = vpop.permute.xlu0 %1762
  %1764 = vrot.lane.b32.xlu0 %v1752, 104
  %v1765 = vpop.permute.xlu0 %1764
  %1766 = vrot.lane.b32.xlu0 %v1753, 104
  %v1767 = vpop.permute.xlu0 %1766
  %v1768 = vpack.c.bf16 %v1725, %v1725
  %v1769 = vpack.c.bf16 %v1726, %v1726
  %1772 = vrot.lane.b32.xlu0 %v1768, 120
  %v1773 = vpop.permute.xlu0 %1772
  %1774 = vrot.lane.b32.xlu0 %v1769, 120
  %v1775 = vpop.permute.xlu0 %1774
  %1776 = vrot.lane.b32.xlu0 %v1768, 112
  %v1777 = vpop.permute.xlu0 %1776
  %1778 = vrot.lane.b32.xlu0 %v1769, 112
  %v1779 = vpop.permute.xlu0 %1778
  %1780 = vrot.lane.b32.xlu0 %v1768, 104
  %v1781 = vpop.permute.xlu0 %1780
  %1782 = vrot.lane.b32.xlu0 %v1769, 104
  %v1783 = vpop.permute.xlu0 %1782
  %v1784 = vpack.c.bf16 %v1748, %v1748
  %v1785 = vpack.c.bf16 %v1750, %v1750
  %1788 = vrot.lane.b32.xlu0 %v1784, 120
  %v1789 = vpop.permute.xlu0 %1788
  %1790 = vrot.lane.b32.xlu0 %v1785, 120
  %v1791 = vpop.permute.xlu0 %1790
  %1792 = vrot.lane.b32.xlu0 %v1784, 112
  %v1793 = vpop.permute.xlu0 %1792
  %1794 = vrot.lane.b32.xlu0 %v1785, 112
  %v1795 = vpop.permute.xlu0 %1794
  %1796 = vrot.lane.b32.xlu0 %v1784, 104
  %v1797 = vpop.permute.xlu0 %1796
  %1798 = vrot.lane.b32.xlu0 %v1785, 104
  %v1799 = vpop.permute.xlu0 %1798
  %v1800 = vunpack.c.l.b16 %v1768
  %v1801 = vpack.c.b16 %v1800, %v1800
  %1802 = vrot.lane.b32.xlu0 %v1801, 96
  %v1803 = vpop.permute.xlu0 %1802
  %v1805 = vsel %vm204, %v1752, 0
  %v1808 = vsel %vm204, %v1803, 0
  %1810 = vmatpush.bf16.xpose.msra.mxu0 0
  %1811 = vmatpush.bf16.xpose.msra.mxu0 0
  %1812 = vmatpush.bf16.xpose.msra.mxu0 0
  %1813 = vmatpush.bf16.xpose.msra.mxu0 0
  %1814 = vmatpush.bf16.xpose.msra.mxu0 0
  %1815 = vmatpush.bf16.xpose.msra.mxu0 0
  %1816 = vmatpush.bf16.xpose.msra.mxu0 0
  %1817 = vmatpush.bf16.xpose.msra.mxu0 %v1808
  %1818 = vmatmul.bf16.gmra.mxu0 %v1805
  %v1819 = vpop.f32.mrf.mxu0
  %v1820 = vadd.f32 0.0, %v1819
  %v1821 = vpop.f32.mrf.mxu0
  %1822 = vdwg.mxu0
  %v1823 = vunpack.c.l.b16 %v1769
  %v1824 = vpack.c.b16 %v1823, %v1823
  %1825 = vrot.lane.b32.xlu0 %v1824, 96
  %v1826 = vpop.permute.xlu0 %1825
  %v1828 = vsel %vm204, %v1753, 0
  %v1831 = vsel %vm204, %v1826, 0
  %1833 = vmatpush.bf16.xpose.msra.mxu0 0
  %1834 = vmatpush.bf16.xpose.msra.mxu0 0
  %1835 = vmatpush.bf16.xpose.msra.mxu0 0
  %1836 = vmatpush.bf16.xpose.msra.mxu0 0
  %1837 = vmatpush.bf16.xpose.msra.mxu0 0
  %1838 = vmatpush.bf16.xpose.msra.mxu0 0
  %1839 = vmatpush.bf16.xpose.msra.mxu0 0
  %1840 = vmatpush.bf16.xpose.msra.mxu0 %v1831
  %1841 = vmatmul.bf16.gmra.mxu0 %v1828
  %v1842 = vpop.f32.mrf.mxu0
  %v1843 = vadd.f32 0.0, %v1842
  %v1844 = vpop.f32.mrf.mxu0
  %1845 = vdwg.mxu0
  %v1846 = vunpack.c.l.b16 %v1773
  %v1847 = vpack.c.b16 %v1846, %v1846
  %1848 = vrot.lane.b32.xlu0 %v1847, 96
  %v1849 = vpop.permute.xlu0 %1848
  %v1851 = vsel %vm204, %v1757, 0
  %v1854 = vsel %vm204, %v1849, 0
  %1856 = vmatpush.bf16.xpose.msra.mxu0 0
  %1857 = vmatpush.bf16.xpose.msra.mxu0 0
  %1858 = vmatpush.bf16.xpose.msra.mxu0 0
  %1859 = vmatpush.bf16.xpose.msra.mxu0 0
  %1860 = vmatpush.bf16.xpose.msra.mxu0 0
  %1861 = vmatpush.bf16.xpose.msra.mxu0 0
  %1862 = vmatpush.bf16.xpose.msra.mxu0 0
  %1863 = vmatpush.bf16.xpose.msra.mxu0 %v1854
  %1864 = vmatmul.bf16.gmra.mxu0 %v1851
  %v1865 = vpop.f32.mrf.mxu0
  %v1866 = vadd.f32 0.0, %v1865
  %v1867 = vpop.f32.mrf.mxu0
  %1868 = vdwg.mxu0
  %v1869 = vunpack.c.l.b16 %v1775
  %v1870 = vpack.c.b16 %v1869, %v1869
  %1871 = vrot.lane.b32.xlu0 %v1870, 96
  %v1872 = vpop.permute.xlu0 %1871
  %v1874 = vsel %vm204, %v1759, 0
  %v1877 = vsel %vm204, %v1872, 0
  %1879 = vmatpush.bf16.xpose.msra.mxu0 0
  %1880 = vmatpush.bf16.xpose.msra.mxu0 0
  %1881 = vmatpush.bf16.xpose.msra.mxu0 0
  %1882 = vmatpush.bf16.xpose.msra.mxu0 0
  %1883 = vmatpush.bf16.xpose.msra.mxu0 0
  %1884 = vmatpush.bf16.xpose.msra.mxu0 0
  %1885 = vmatpush.bf16.xpose.msra.mxu0 0
  %1886 = vmatpush.bf16.xpose.msra.mxu0 %v1877
  %1887 = vmatmul.bf16.gmra.mxu0 %v1874
  %v1888 = vpop.f32.mrf.mxu0
  %v1889 = vadd.f32 0.0, %v1888
  %v1890 = vpop.f32.mrf.mxu0
  %1891 = vdwg.mxu0
  %v1892 = vunpack.c.l.b16 %v1777
  %v1893 = vpack.c.b16 %v1892, %v1892
  %1894 = vrot.lane.b32.xlu0 %v1893, 96
  %v1895 = vpop.permute.xlu0 %1894
  %v1897 = vsel %vm204, %v1761, 0
  %v1900 = vsel %vm204, %v1895, 0
  %1902 = vmatpush.bf16.xpose.msra.mxu0 0
  %1903 = vmatpush.bf16.xpose.msra.mxu0 0
  %1904 = vmatpush.bf16.xpose.msra.mxu0 0
  %1905 = vmatpush.bf16.xpose.msra.mxu0 0
  %1906 = vmatpush.bf16.xpose.msra.mxu0 0
  %1907 = vmatpush.bf16.xpose.msra.mxu0 0
  %1908 = vmatpush.bf16.xpose.msra.mxu0 0
  %1909 = vmatpush.bf16.xpose.msra.mxu0 %v1900
  %1910 = vmatmul.bf16.gmra.mxu0 %v1897
  %v1911 = vpop.f32.mrf.mxu0
  %v1912 = vadd.f32 0.0, %v1911
  %v1913 = vpop.f32.mrf.mxu0
  %1914 = vdwg.mxu0
  %v1915 = vunpack.c.l.b16 %v1779
  %v1916 = vpack.c.b16 %v1915, %v1915
  %1917 = vrot.lane.b32.xlu0 %v1916, 96
  %v1918 = vpop.permute.xlu0 %1917
  %v1920 = vsel %vm204, %v1763, 0
  %v1923 = vsel %vm204, %v1918, 0
  %1925 = vmatpush.bf16.xpose.msra.mxu0 0
  %1926 = vmatpush.bf16.xpose.msra.mxu0 0
  %1927 = vmatpush.bf16.xpose.msra.mxu0 0
  %1928 = vmatpush.bf16.xpose.msra.mxu0 0
  %1929 = vmatpush.bf16.xpose.msra.mxu0 0
  %1930 = vmatpush.bf16.xpose.msra.mxu0 0
  %1931 = vmatpush.bf16.xpose.msra.mxu0 0
  %1932 = vmatpush.bf16.xpose.msra.mxu0 %v1923
  %1933 = vmatmul.bf16.gmra.mxu0 %v1920
  %v1934 = vpop.f32.mrf.mxu0
  %v1935 = vadd.f32 0.0, %v1934
  %v1936 = vpop.f32.mrf.mxu0
  %1937 = vdwg.mxu0
  %v1938 = vunpack.c.l.b16 %v1781
  %v1939 = vpack.c.b16 %v1938, %v1938
  %1940 = vrot.lane.b32.xlu0 %v1939, 96
  %v1941 = vpop.permute.xlu0 %1940
  %v1943 = vsel %vm204, %v1765, 0
  %v1946 = vsel %vm204, %v1941, 0
  %1948 = vmatpush.bf16.xpose.msra.mxu0 0
  %1949 = vmatpush.bf16.xpose.msra.mxu0 0
  %1950 = vmatpush.bf16.xpose.msra.mxu0 0
  %1951 = vmatpush.bf16.xpose.msra.mxu0 0
  %1952 = vmatpush.bf16.xpose.msra.mxu0 0
  %1953 = vmatpush.bf16.xpose.msra.mxu0 0
  %1954 = vmatpush.bf16.xpose.msra.mxu0 0
  %1955 = vmatpush.bf16.xpose.msra.mxu0 %v1946
  %1956 = vmatmul.bf16.gmra.mxu0 %v1943
  %v1957 = vpop.f32.mrf.mxu0
  %v1958 = vadd.f32 0.0, %v1957
  %v1959 = vpop.f32.mrf.mxu0
  %1960 = vdwg.mxu0
  %v1961 = vunpack.c.l.b16 %v1783
  %v1962 = vpack.c.b16 %v1961, %v1961
  %1963 = vrot.lane.b32.xlu0 %v1962, 96
  %v1964 = vpop.permute.xlu0 %1963
  %v1966 = vsel %vm204, %v1767, 0
  %v1969 = vsel %vm204, %v1964, 0
  %1971 = vmatpush.bf16.xpose.msra.mxu0 0
  %1972 = vmatpush.bf16.xpose.msra.mxu0 0
  %1973 = vmatpush.bf16.xpose.msra.mxu0 0
  %1974 = vmatpush.bf16.xpose.msra.mxu0 0
  %1975 = vmatpush.bf16.xpose.msra.mxu0 0
  %1976 = vmatpush.bf16.xpose.msra.mxu0 0
  %1977 = vmatpush.bf16.xpose.msra.mxu0 0
  %1978 = vmatpush.bf16.xpose.msra.mxu0 %v1969
  %1979 = vmatmul.bf16.gmra.mxu0 %v1966
  %v1980 = vpop.f32.mrf.mxu0
  %v1981 = vadd.f32 0.0, %v1980
  %v1982 = vpop.f32.mrf.mxu0
  %1983 = vdwg.mxu0
  %v1984 = vmul.f32 %v1820, 0.35355338
  %v1985 = vmul.f32 %v1843, 0.35355338
  %v1986 = vmul.f32 %v1866, 0.35355338
  %v1987 = vmul.f32 %v1889, 0.35355338
  %v1988 = vmul.f32 %v1912, 0.35355338
  %v1989 = vmul.f32 %v1935, 0.35355338
  %v1990 = vmul.f32 %v1958, 0.35355338
  %v1991 = vmul.f32 %v1981, 0.35355338
  %v1992 = vsel %vm204, %v1984, -inf
  %1993 = vmax.xlane.f32.xlu0 %v1992
  %v1994 = vpop.xlane.xlu0 %1993
  %v1995 = vsel %vm204, %v1985, -inf
  %1996 = vmax.xlane.f32.xlu0 %v1995
  %v1997 = vpop.xlane.xlu0 %1996
  %v1998 = vsel %vm204, %v1986, -inf
  %1999 = vmax.xlane.f32.xlu0 %v1998
  %v2000 = vpop.xlane.xlu0 %1999
  %v2001 = vsel %vm204, %v1987, -inf
  %2002 = vmax.xlane.f32.xlu0 %v2001
  %v2003 = vpop.xlane.xlu0 %2002
  %v2004 = vsel %vm204, %v1988, -inf
  %2005 = vmax.xlane.f32.xlu0 %v2004
  %v2006 = vpop.xlane.xlu0 %2005
  %v2007 = vsel %vm204, %v1989, -inf
  %2008 = vmax.xlane.f32.xlu0 %v2007
  %v2009 = vpop.xlane.xlu0 %2008
  %v2010 = vsel %vm204, %v1990, -inf
  %2011 = vmax.xlane.f32.xlu0 %v2010
  %v2012 = vpop.xlane.xlu0 %2011
  %v2013 = vsel %vm204, %v1991, -inf
  %2014 = vmax.xlane.f32.xlu0 %v2013
  %v2015 = vpop.xlane.xlu0 %2014
  %v2016 = vsub.f32 %v1984, %v1994
  %v2017 = vsub.f32 %v1985, %v1997
  %v2018 = vsub.f32 %v1986, %v2000
  %v2019 = vsub.f32 %v1987, %v2003
  %v2020 = vsub.f32 %v1988, %v2006
  %v2021 = vsub.f32 %v1989, %v2009
  %v2022 = vsub.f32 %v1990, %v2012
  %v2023 = vsub.f32 %v1991, %v2015
  %v2024 = vmul.f32 %v2016, 1.442695
  %v2025 = vpow.pop %v2024
  %v2026 = vmul.f32 %v2017, 1.442695
  %v2027 = vpow.pop %v2026
  %v2028 = vmul.f32 %v2018, 1.442695
  %v2029 = vpow.pop %v2028
  %v2030 = vmul.f32 %v2019, 1.442695
  %v2031 = vpow.pop %v2030
  %v2032 = vmul.f32 %v2020, 1.442695
  %v2033 = vpow.pop %v2032
  %v2034 = vmul.f32 %v2021, 1.442695
  %v2035 = vpow.pop %v2034
  %v2036 = vmul.f32 %v2022, 1.442695
  %v2037 = vpow.pop %v2036
  %v2038 = vmul.f32 %v2023, 1.442695
  %v2039 = vpow.pop %v2038
  %v2040 = vsel %vm204, %v2025, 0.0
  %2041 = vadd.xlane.f32.xlu0 %v2040
  %v2042 = vpop.xlane.xlu0 %2041
  %v2043 = vsel %vm204, %v2027, 0.0
  %2044 = vadd.xlane.f32.xlu0 %v2043
  %v2045 = vpop.xlane.xlu0 %2044
  %v2046 = vsel %vm204, %v2029, 0.0
  %2047 = vadd.xlane.f32.xlu0 %v2046
  %v2048 = vpop.xlane.xlu0 %2047
  %v2049 = vsel %vm204, %v2031, 0.0
  %2050 = vadd.xlane.f32.xlu0 %v2049
  %v2051 = vpop.xlane.xlu0 %2050
  %v2052 = vsel %vm204, %v2033, 0.0
  %2053 = vadd.xlane.f32.xlu0 %v2052
  %v2054 = vpop.xlane.xlu0 %2053
  %v2055 = vsel %vm204, %v2035, 0.0
  %2056 = vadd.xlane.f32.xlu0 %v2055
  %v2057 = vpop.xlane.xlu0 %2056
  %v2058 = vsel %vm204, %v2037, 0.0
  %2059 = vadd.xlane.f32.xlu0 %v2058
  %v2060 = vpop.xlane.xlu0 %2059
  %v2061 = vsel %vm204, %v2039, 0.0
  %2062 = vadd.xlane.f32.xlu0 %v2061
  %v2063 = vpop.xlane.xlu0 %2062
  %v2064 = vrcp.pop %v2042
  %v2065 = vrcp.pop %v2045
  %v2066 = vrcp.pop %v2048
  %v2067 = vrcp.pop %v2051
  %v2068 = vrcp.pop %v2054
  %v2069 = vrcp.pop %v2057
  %v2070 = vrcp.pop %v2060
  %v2071 = vrcp.pop %v2063
  %v2072 = vmul.f32 %v2025, %v2064
  %v2073 = vmul.f32 %v2027, %v2065
  %v2074 = vmul.f32 %v2029, %v2066
  %v2075 = vmul.f32 %v2031, %v2067
  %v2076 = vmul.f32 %v2033, %v2068
  %v2077 = vmul.f32 %v2035, %v2069
  %v2078 = vmul.f32 %v2037, %v2070
  %v2079 = vmul.f32 %v2039, %v2071
  %v2080 = vpack.c.bf16 %v2072, %v2072
  %v2081 = vpack.c.bf16 %v2073, %v2073
  %v2082 = vpack.c.bf16 %v2074, %v2074
  %v2083 = vpack.c.bf16 %v2075, %v2075
  %v2084 = vpack.c.bf16 %v2076, %v2076
  %v2085 = vpack.c.bf16 %v2077, %v2077
  %v2086 = vpack.c.bf16 %v2078, %v2078
  %v2087 = vpack.c.bf16 %v2079, %v2079
  %v2089 = vsel %vm204, %v2080, 0
  %v2092 = vsel %vm492, %v1784, 0
  %2094 = vmatpush.bf16.msra.mxu0 0
  %2095 = vmatpush.bf16.msra.mxu0 0
  %2096 = vmatpush.bf16.msra.mxu0 0
  %2097 = vmatpush.bf16.msra.mxu0 0
  %2098 = vmatpush.bf16.msra.mxu0 0
  %2099 = vmatpush.bf16.msra.mxu0 0
  %2100 = vmatpush.bf16.msra.mxu0 0
  %2101 = vmatpush.bf16.msra.mxu0 %v2092
  %2102 = vmatmul.bf16.gmra.mxu0 %v2089
  %v2103 = vpop.f32.mrf.mxu0
  %v2104 = vadd.f32 0.0, %v2103
  %v2105 = vpop.f32.mrf.mxu0
  %2106 = vdwg.mxu0
  %v2108 = vsel %vm204, %v2081, 0
  %v2111 = vsel %vm492, %v1785, 0
  %2113 = vmatpush.bf16.msra.mxu0 0
  %2114 = vmatpush.bf16.msra.mxu0 0
  %2115 = vmatpush.bf16.msra.mxu0 0
  %2116 = vmatpush.bf16.msra.mxu0 0
  %2117 = vmatpush.bf16.msra.mxu0 0
  %2118 = vmatpush.bf16.msra.mxu0 0
  %2119 = vmatpush.bf16.msra.mxu0 0
  %2120 = vmatpush.bf16.msra.mxu0 %v2111
  %2121 = vmatmul.bf16.gmra.mxu0 %v2108
  %v2122 = vpop.f32.mrf.mxu0
  %v2123 = vadd.f32 0.0, %v2122
  %v2124 = vpop.f32.mrf.mxu0
  %2125 = vdwg.mxu0
  %v2127 = vsel %vm204, %v2082, 0
  %v2130 = vsel %vm492, %v1789, 0
  %2132 = vmatpush.bf16.msra.mxu0 0
  %2133 = vmatpush.bf16.msra.mxu0 0
  %2134 = vmatpush.bf16.msra.mxu0 0
  %2135 = vmatpush.bf16.msra.mxu0 0
  %2136 = vmatpush.bf16.msra.mxu0 0
  %2137 = vmatpush.bf16.msra.mxu0 0
  %2138 = vmatpush.bf16.msra.mxu0 0
  %2139 = vmatpush.bf16.msra.mxu0 %v2130
  %2140 = vmatmul.bf16.gmra.mxu0 %v2127
  %v2141 = vpop.f32.mrf.mxu0
  %v2142 = vadd.f32 0.0, %v2141
  %v2143 = vpop.f32.mrf.mxu0
  %2144 = vdwg.mxu0
  %v2146 = vsel %vm204, %v2083, 0
  %v2149 = vsel %vm492, %v1791, 0
  %2151 = vmatpush.bf16.msra.mxu0 0
  %2152 = vmatpush.bf16.msra.mxu0 0
  %2153 = vmatpush.bf16.msra.mxu0 0
  %2154 = vmatpush.bf16.msra.mxu0 0
  %2155 = vmatpush.bf16.msra.mxu0 0
  %2156 = vmatpush.bf16.msra.mxu0 0
  %2157 = vmatpush.bf16.msra.mxu0 0
  %2158 = vmatpush.bf16.msra.mxu0 %v2149
  %2159 = vmatmul.bf16.gmra.mxu0 %v2146
  %v2160 = vpop.f32.mrf.mxu0
  %v2161 = vadd.f32 0.0, %v2160
  %v2162 = vpop.f32.mrf.mxu0
  %2163 = vdwg.mxu0
  %v2165 = vsel %vm204, %v2084, 0
  %v2168 = vsel %vm492, %v1793, 0
  %2170 = vmatpush.bf16.msra.mxu0 0
  %2171 = vmatpush.bf16.msra.mxu0 0
  %2172 = vmatpush.bf16.msra.mxu0 0
  %2173 = vmatpush.bf16.msra.mxu0 0
  %2174 = vmatpush.bf16.msra.mxu0 0
  %2175 = vmatpush.bf16.msra.mxu0 0
  %2176 = vmatpush.bf16.msra.mxu0 0
  %2177 = vmatpush.bf16.msra.mxu0 %v2168
  %2178 = vmatmul.bf16.gmra.mxu0 %v2165
  %v2179 = vpop.f32.mrf.mxu0
  %v2180 = vadd.f32 0.0, %v2179
  %v2181 = vpop.f32.mrf.mxu0
  %2182 = vdwg.mxu0
  %v2184 = vsel %vm204, %v2085, 0
  %v2187 = vsel %vm492, %v1795, 0
  %2189 = vmatpush.bf16.msra.mxu0 0
  %2190 = vmatpush.bf16.msra.mxu0 0
  %2191 = vmatpush.bf16.msra.mxu0 0
  %2192 = vmatpush.bf16.msra.mxu0 0
  %2193 = vmatpush.bf16.msra.mxu0 0
  %2194 = vmatpush.bf16.msra.mxu0 0
  %2195 = vmatpush.bf16.msra.mxu0 0
  %2196 = vmatpush.bf16.msra.mxu0 %v2187
  %2197 = vmatmul.bf16.gmra.mxu0 %v2184
  %v2198 = vpop.f32.mrf.mxu0
  %v2199 = vadd.f32 0.0, %v2198
  %v2200 = vpop.f32.mrf.mxu0
  %2201 = vdwg.mxu0
  %v2203 = vsel %vm204, %v2086, 0
  %v2206 = vsel %vm492, %v1797, 0
  %2208 = vmatpush.bf16.msra.mxu0 0
  %2209 = vmatpush.bf16.msra.mxu0 0
  %2210 = vmatpush.bf16.msra.mxu0 0
  %2211 = vmatpush.bf16.msra.mxu0 0
  %2212 = vmatpush.bf16.msra.mxu0 0
  %2213 = vmatpush.bf16.msra.mxu0 0
  %2214 = vmatpush.bf16.msra.mxu0 0
  %2215 = vmatpush.bf16.msra.mxu0 %v2206
  %2216 = vmatmul.bf16.gmra.mxu0 %v2203
  %v2217 = vpop.f32.mrf.mxu0
  %v2218 = vadd.f32 0.0, %v2217
  %v2219 = vpop.f32.mrf.mxu0
  %2220 = vdwg.mxu0
  %v2222 = vsel %vm204, %v2087, 0
  %v2225 = vsel %vm492, %v1799, 0
  %2227 = vmatpush.bf16.msra.mxu0 0
  %2228 = vmatpush.bf16.msra.mxu0 0
  %2229 = vmatpush.bf16.msra.mxu0 0
  %2230 = vmatpush.bf16.msra.mxu0 0
  %2231 = vmatpush.bf16.msra.mxu0 0
  %2232 = vmatpush.bf16.msra.mxu0 0
  %2233 = vmatpush.bf16.msra.mxu0 0
  %2234 = vmatpush.bf16.msra.mxu0 %v2225
  %2235 = vmatmul.bf16.gmra.mxu0 %v2222
  %v2236 = vpop.f32.mrf.mxu0
  %v2237 = vadd.f32 0.0, %v2236
  %v2238 = vpop.f32.mrf.mxu0
  %2239 = vdwg.mxu0
  %2242 = vrot.lane.b32.xlu0 %v2142, 8
  %v2243 = vpop.permute.xlu0 %2242
  %2244 = vrot.lane.b32.xlu0 %v2161, 8
  %v2245 = vpop.permute.xlu0 %2244
  %2250 = vrot.lane.b32.xlu0 %v2180, 16
  %v2251 = vpop.permute.xlu0 %2250
  %2252 = vrot.lane.b32.xlu0 %v2199, 16
  %v2253 = vpop.permute.xlu0 %2252
  %2258 = vrot.lane.b32.xlu0 %v2218, 24
  %v2259 = vpop.permute.xlu0 %2258
  %2260 = vrot.lane.b32.xlu0 %v2237, 24
  %v2261 = vpop.permute.xlu0 %2260
  %v2264 = vsel %vm204, %v2104, %v2243
  %v2265 = vsel %vm204, %v2123, %v2245
  %v2266 = vsel %vm668, %v2264, %v2251
  %v2267 = vsel %vm668, %v2265, %v2253
  %v2268 = vsel %vm671, %v2266, %v2259
  %v2269 = vsel %vm671, %v2267, %v2261
  %v2270 = vpack.c.bf16 %v2269, %v2268
  %v2271 = vperm.slane %v1682, 3
  %2272 = vrot.lane.b32.xlu0 %v1696, 32
  %v2273 = vpop.permute.xlu0 %2272
  %2274 = vrot.lane.b32.xlu0 %v1697, 32
  %v2275 = vpop.permute.xlu0 %2274
  %v2279 = vsel %vm99, %v2270, 0
  %2281 = vmatpush.bf16.msra.mxu0 0
  %2282 = vmatpush.bf16.msra.mxu0 0
  %2283 = vmatpush.bf16.msra.mxu0 0
  %2284 = vmatpush.bf16.msra.mxu0 0
  %2285 = vmatpush.bf16.msra.mxu0 0
  %2286 = vmatpush.bf16.msra.mxu0 0
  %2287 = vmatpush.bf16.msra.mxu0 %v2275
  %2288 = vmatpush.bf16.msra.mxu0 %v2273
  %2289 = vmatmul.bf16.gmra.mxu0 %v2279
  %v2290 = vpop.f32.mrf.mxu0
  %v2291 = vadd.f32 %v2271, %v2290
  %v2292 = vpop.f32.mrf.mxu0
  %v2293 = vadd.f32 %v2271, %v2292
  %2294 = vdwg.mxu0
  %v2295 = vadd.f32 %v1605, %v2291
  %v2296 = vadd.f32 %v1606, %v2293
  %v2297 = vsel %vm99, %v2295, 0.0
  %2298 = vadd.xlane.f32.xlu0 %v2297
  %v2299 = vpop.xlane.xlu0 %2298
  %v2300 = vsel %vm99, %v2296, 0.0
  %2301 = vadd.xlane.f32.xlu0 %v2300
  %v2302 = vpop.xlane.xlu0 %2301
  %v2303 = vmul.f32 %v2299, %v713
  %v2304 = vmul.f32 %v2302, %v713
  %v2305 = vsub.f32 %v2295, %v2303
  %v2306 = vsub.f32 %v2296, %v2304
  %v2307 = vmul.f32 %v2305, %v2305
  %v2308 = vmul.f32 %v2306, %v2306
  %v2309 = vsel %vm99, %v2307, 0.0
  %2310 = vadd.xlane.f32.xlu0 %v2309
  %v2311 = vpop.xlane.xlu0 %2310
  %v2312 = vsel %vm99, %v2308, 0.0
  %2313 = vadd.xlane.f32.xlu0 %v2312
  %v2314 = vpop.xlane.xlu0 %2313
  %v2315 = vmul.f32 %v2311, %v713
  %v2316 = vmul.f32 %v2314, %v713
  %v2317 = vadd.f32 %v2315, 1e-05
  %v2318 = vadd.f32 %v2316, 1e-05
  %v2319 = vrsqrt.pop %v2317
  %v2320 = vmul.f32 %v2319, %v2317
  %v2321 = vmul.f32 %v2320, %v2319
  %v2322 = vmul.f32 0.5, %v2321
  %v2323 = vsub.f32 1.5, %v2322
  %v2324 = vmul.f32 %v2319, %v2323
  %vm2325 = vweird.f32 %v2317
  %vm2326 = vweird.f32 %v2319
  %vm2327 = vmor %vm2325, %vm2326
  %v2328 = vsel %vm2327, %v2319, %v2324
  %v2329 = vrsqrt.pop %v2318
  %v2330 = vmul.f32 %v2329, %v2318
  %v2331 = vmul.f32 %v2330, %v2329
  %v2332 = vmul.f32 0.5, %v2331
  %v2333 = vsub.f32 1.5, %v2332
  %v2334 = vmul.f32 %v2329, %v2333
  %vm2335 = vweird.f32 %v2318
  %vm2336 = vweird.f32 %v2329
  %vm2337 = vmor %vm2335, %vm2336
  %v2338 = vsel %vm2337, %v2329, %v2334
  %v2339 = vmul.f32 %v2305, %v2328
  %v2340 = vmul.f32 %v2306, %v2338
  %v2341 = vperm.slane %v1683, 2
  %v2342 = vmul.f32 %v2339, %v2341
  %v2343 = vmul.f32 %v2340, %v2341
  %v2344 = vperm.slane %v1683, 3
  %v2345 = vadd.f32 %v2342, %v2344
  %v2346 = vadd.f32 %v2343, %v2344
  %v2347 = vadd.f32 %v2345, %v32
  %v2348 = vadd.f32 %v2346, %v35
  %v2349 = vpack.c.bf16 %v2348, %v2347
  %v2350 = vperm.slane %v1682, 4
  %v2351 = vunpack.c.h.b16 %v1664
  %v2352 = vunpack.c.h.b16 %v1666
  %v2353 = vunpack.c.h.b16 %v1668
  %v2354 = vunpack.c.h.b16 %v1670
  %v2355 = vpack.c.b16 %v2352, %v2351
  %v2356 = vpack.c.b16 %v2354, %v2353
  %v2360 = vsel %vm99, %v2349, 0
  %2362 = vmatpush.bf16.msra.mxu0 0
  %2363 = vmatpush.bf16.msra.mxu0 0
  %2364 = vmatpush.bf16.msra.mxu0 0
  %2365 = vmatpush.bf16.msra.mxu0 0
  %2366 = vmatpush.bf16.msra.mxu0 0
  %2367 = vmatpush.bf16.msra.mxu0 0
  %2368 = vmatpush.bf16.msra.mxu0 %v2356
  %2369 = vmatpush.bf16.msra.mxu0 %v2355
  %2370 = vmatmul.bf16.gmra.mxu0 %v2360
  %v2371 = vpop.f32.mrf.mxu0
  %v2372 = vadd.f32 %v2350, %v2371
  %v2373 = vpop.f32.mrf.mxu0
  %v2374 = vadd.f32 %v2350, %v2373
  %2375 = vdwg.mxu0
  %v2376 = vperm.slane %v1682, 5
  %2377 = vrot.lane.b32.xlu0 %v2355, 96
  %v2378 = vpop.permute.xlu0 %2377
  %2379 = vrot.lane.b32.xlu0 %v2356, 96
  %v2380 = vpop.permute.xlu0 %2379
  %2383 = vmatpush.bf16.msra.mxu0 0
  %2384 = vmatpush.bf16.msra.mxu0 0
  %2385 = vmatpush.bf16.msra.mxu0 0
  %2386 = vmatpush.bf16.msra.mxu0 0
  %2387 = vmatpush.bf16.msra.mxu0 0
  %2388 = vmatpush.bf16.msra.mxu0 0
  %2389 = vmatpush.bf16.msra.mxu0 %v2380
  %2390 = vmatpush.bf16.msra.mxu0 %v2378
  %2391 = vmatmul.bf16.gmra.mxu0 %v795
  %v2392 = vpop.f32.mrf.mxu0
  %v2393 = vadd.f32 %v2376, %v2392
  %v2394 = vpop.f32.mrf.mxu0
  %v2395 = vadd.f32 %v2376, %v2394
  %2396 = vmatmul.bf16.gmra.mxu0 %v798
  %v2397 = vpop.f32.mrf.mxu0
  %v2398 = vadd.f32 %v2376, %v2397
  %v2399 = vpop.f32.mrf.mxu0
  %v2400 = vadd.f32 %v2376, %v2399
  %2401 = vdwg.mxu0
  %v2402 = vperm.slane %v1682, 6
  %2403 = vrot.lane.b32.xlu0 %v2355, 64
  %v2404 = vpop.permute.xlu0 %2403
  %2405 = vrot.lane.b32.xlu0 %v2356, 64
  %v2406 = vpop.permute.xlu0 %2405
  %2409 = vmatpush.bf16.msra.mxu0 0
  %2410 = vmatpush.bf16.msra.mxu0 0
  %2411 = vmatpush.bf16.msra.mxu0 0
  %2412 = vmatpush.bf16.msra.mxu0 0
  %2413 = vmatpush.bf16.msra.mxu0 0
  %2414 = vmatpush.bf16.msra.mxu0 0
  %2415 = vmatpush.bf16.msra.mxu0 %v2406
  %2416 = vmatpush.bf16.msra.mxu0 %v2404
  %2417 = vmatmul.bf16.gmra.mxu0 %v827
  %v2418 = vpop.f32.mrf.mxu0
  %v2419 = vadd.f32 %v2402, %v2418
  %v2420 = vpop.f32.mrf.mxu0
  %v2421 = vadd.f32 %v2402, %v2420
  %2422 = vmatmul.bf16.gmra.mxu0 %v830
  %v2423 = vpop.f32.mrf.mxu0
  %v2424 = vadd.f32 %v2402, %v2423
  %v2425 = vpop.f32.mrf.mxu0
  %v2426 = vadd.f32 %v2402, %v2425
  %2427 = vdwg.mxu0
  %v2428 = vpack.c.bf16 %v2372, %v2372
  %v2429 = vpack.c.bf16 %v2374, %v2374
  %2432 = vrot.lane.b32.xlu0 %v2428, 120
  %v2433 = vpop.permute.xlu0 %2432
  %2434 = vrot.lane.b32.xlu0 %v2429, 120
  %v2435 = vpop.permute.xlu0 %2434
  %2436 = vrot.lane.b32.xlu0 %v2428, 112
  %v2437 = vpop.permute.xlu0 %2436
  %2438 = vrot.lane.b32.xlu0 %v2429, 112
  %v2439 = vpop.permute.xlu0 %2438
  %2440 = vrot.lane.b32.xlu0 %v2428, 104
  %v2441 = vpop.permute.xlu0 %2440
  %2442 = vrot.lane.b32.xlu0 %v2429, 104
  %v2443 = vpop.permute.xlu0 %2442
  %v2444 = vpack.c.bf16 %v2393, %v2393
  %v2445 = vpack.c.bf16 %v2395, %v2395
  %v2446 = vpack.c.bf16 %v2398, %v2398
  %v2447 = vpack.c.bf16 %v2400, %v2400
  %2452 = vrot.lane.b32.xlu0 %v2444, 120
  %v2453 = vpop.permute.xlu0 %2452
  %2454 = vrot.lane.b32.xlu0 %v2445, 120
  %v2455 = vpop.permute.xlu0 %2454
  %2456 = vrot.lane.b32.xlu0 %v2446, 120
  %v2457 = vpop.permute.xlu0 %2456
  %2458 = vrot.lane.b32.xlu0 %v2447, 120
  %v2459 = vpop.permute.xlu0 %2458
  %2460 = vrot.lane.b32.xlu0 %v2444, 112
  %v2461 = vpop.permute.xlu0 %2460
  %2462 = vrot.lane.b32.xlu0 %v2445, 112
  %v2463 = vpop.permute.xlu0 %2462
  %2464 = vrot.lane.b32.xlu0 %v2446, 112
  %v2465 = vpop.permute.xlu0 %2464
  %2466 = vrot.lane.b32.xlu0 %v2447, 112
  %v2467 = vpop.permute.xlu0 %2466
  %2468 = vrot.lane.b32.xlu0 %v2444, 104
  %v2469 = vpop.permute.xlu0 %2468
  %2470 = vrot.lane.b32.xlu0 %v2445, 104
  %v2471 = vpop.permute.xlu0 %2470
  %2472 = vrot.lane.b32.xlu0 %v2446, 104
  %v2473 = vpop.permute.xlu0 %2472
  %2474 = vrot.lane.b32.xlu0 %v2447, 104
  %v2475 = vpop.permute.xlu0 %2474
  %v2476 = vpack.c.bf16 %v2419, %v2419
  %v2477 = vpack.c.bf16 %v2421, %v2421
  %v2478 = vpack.c.bf16 %v2424, %v2424
  %v2479 = vpack.c.bf16 %v2426, %v2426
  %2484 = vrot.lane.b32.xlu0 %v2476, 120
  %v2485 = vpop.permute.xlu0 %2484
  %2486 = vrot.lane.b32.xlu0 %v2477, 120
  %v2487 = vpop.permute.xlu0 %2486
  %2488 = vrot.lane.b32.xlu0 %v2478, 120
  %v2489 = vpop.permute.xlu0 %2488
  %2490 = vrot.lane.b32.xlu0 %v2479, 120
  %v2491 = vpop.permute.xlu0 %2490
  %2492 = vrot.lane.b32.xlu0 %v2476, 112
  %v2493 = vpop.permute.xlu0 %2492
  %2494 = vrot.lane.b32.xlu0 %v2477, 112
  %v2495 = vpop.permute.xlu0 %2494
  %2496 = vrot.lane.b32.xlu0 %v2478, 112
  %v2497 = vpop.permute.xlu0 %2496
  %2498 = vrot.lane.b32.xlu0 %v2479, 112
  %v2499 = vpop.permute.xlu0 %2498
  %2500 = vrot.lane.b32.xlu0 %v2476, 104
  %v2501 = vpop.permute.xlu0 %2500
  %2502 = vrot.lane.b32.xlu0 %v2477, 104
  %v2503 = vpop.permute.xlu0 %2502
  %2504 = vrot.lane.b32.xlu0 %v2478, 104
  %v2505 = vpop.permute.xlu0 %2504
  %2506 = vrot.lane.b32.xlu0 %v2479, 104
  %v2507 = vpop.permute.xlu0 %2506
  %v2508 = vunpack.c.l.b16 %v2444
  %v2509 = vunpack.c.l.b16 %v2445
  %v2510 = vpack.c.b16 %v2509, %v2508
  %v2512 = vsel %vm204, %v2428, 0
  %v2515 = vsel %vm204, %v2510, 0
  %2517 = vmatpush.bf16.xpose.msra.mxu0 0
  %2518 = vmatpush.bf16.xpose.msra.mxu0 0
  %2519 = vmatpush.bf16.xpose.msra.mxu0 0
  %2520 = vmatpush.bf16.xpose.msra.mxu0 0
  %2521 = vmatpush.bf16.xpose.msra.mxu0 0
  %2522 = vmatpush.bf16.xpose.msra.mxu0 0
  %2523 = vmatpush.bf16.xpose.msra.mxu0 0
  %2524 = vmatpush.bf16.xpose.msra.mxu0 %v2515
  %2525 = vmatmul.bf16.gmra.mxu0 %v2512
  %v2526 = vpop.f32.mrf.mxu0
  %v2527 = vadd.f32 0.0, %v2526
  %v2528 = vpop.f32.mrf.mxu0
  %2529 = vdwg.mxu0
  %v2530 = vunpack.c.l.b16 %v2446
  %v2531 = vunpack.c.l.b16 %v2447
  %v2532 = vpack.c.b16 %v2531, %v2530
  %v2534 = vsel %vm204, %v2429, 0
  %v2537 = vsel %vm204, %v2532, 0
  %2539 = vmatpush.bf16.xpose.msra.mxu0 0
  %2540 = vmatpush.bf16.xpose.msra.mxu0 0
  %2541 = vmatpush.bf16.xpose.msra.mxu0 0
  %2542 = vmatpush.bf16.xpose.msra.mxu0 0
  %2543 = vmatpush.bf16.xpose.msra.mxu0 0
  %2544 = vmatpush.bf16.xpose.msra.mxu0 0
  %2545 = vmatpush.bf16.xpose.msra.mxu0 0
  %2546 = vmatpush.bf16.xpose.msra.mxu0 %v2537
  %2547 = vmatmul.bf16.gmra.mxu0 %v2534
  %v2548 = vpop.f32.mrf.mxu0
  %v2549 = vadd.f32 0.0, %v2548
  %v2550 = vpop.f32.mrf.mxu0
  %2551 = vdwg.mxu0
  %v2552 = vunpack.c.l.b16 %v2453
  %v2553 = vunpack.c.l.b16 %v2455
  %v2554 = vpack.c.b16 %v2553, %v2552
  %v2556 = vsel %vm204, %v2433, 0
  %v2559 = vsel %vm204, %v2554, 0
  %2561 = vmatpush.bf16.xpose.msra.mxu0 0
  %2562 = vmatpush.bf16.xpose.msra.mxu0 0
  %2563 = vmatpush.bf16.xpose.msra.mxu0 0
  %2564 = vmatpush.bf16.xpose.msra.mxu0 0
  %2565 = vmatpush.bf16.xpose.msra.mxu0 0
  %2566 = vmatpush.bf16.xpose.msra.mxu0 0
  %2567 = vmatpush.bf16.xpose.msra.mxu0 0
  %2568 = vmatpush.bf16.xpose.msra.mxu0 %v2559
  %2569 = vmatmul.bf16.gmra.mxu0 %v2556
  %v2570 = vpop.f32.mrf.mxu0
  %v2571 = vadd.f32 0.0, %v2570
  %v2572 = vpop.f32.mrf.mxu0
  %2573 = vdwg.mxu0
  %v2574 = vunpack.c.l.b16 %v2457
  %v2575 = vunpack.c.l.b16 %v2459
  %v2576 = vpack.c.b16 %v2575, %v2574
  %v2578 = vsel %vm204, %v2435, 0
  %v2581 = vsel %vm204, %v2576, 0
  %2583 = vmatpush.bf16.xpose.msra.mxu0 0
  %2584 = vmatpush.bf16.xpose.msra.mxu0 0
  %2585 = vmatpush.bf16.xpose.msra.mxu0 0
  %2586 = vmatpush.bf16.xpose.msra.mxu0 0
  %2587 = vmatpush.bf16.xpose.msra.mxu0 0
  %2588 = vmatpush.bf16.xpose.msra.mxu0 0
  %2589 = vmatpush.bf16.xpose.msra.mxu0 0
  %2590 = vmatpush.bf16.xpose.msra.mxu0 %v2581
  %2591 = vmatmul.bf16.gmra.mxu0 %v2578
  %v2592 = vpop.f32.mrf.mxu0
  %v2593 = vadd.f32 0.0, %v2592
  %v2594 = vpop.f32.mrf.mxu0
  %2595 = vdwg.mxu0
  %v2596 = vunpack.c.l.b16 %v2461
  %v2597 = vunpack.c.l.b16 %v2463
  %v2598 = vpack.c.b16 %v2597, %v2596
  %v2600 = vsel %vm204, %v2437, 0
  %v2603 = vsel %vm204, %v2598, 0
  %2605 = vmatpush.bf16.xpose.msra.mxu0 0
  %2606 = vmatpush.bf16.xpose.msra.mxu0 0
  %2607 = vmatpush.bf16.xpose.msra.mxu0 0
  %2608 = vmatpush.bf16.xpose.msra.mxu0 0
  %2609 = vmatpush.bf16.xpose.msra.mxu0 0
  %2610 = vmatpush.bf16.xpose.msra.mxu0 0
  %2611 = vmatpush.bf16.xpose.msra.mxu0 0
  %2612 = vmatpush.bf16.xpose.msra.mxu0 %v2603
  %2613 = vmatmul.bf16.gmra.mxu0 %v2600
  %v2614 = vpop.f32.mrf.mxu0
  %v2615 = vadd.f32 0.0, %v2614
  %v2616 = vpop.f32.mrf.mxu0
  %2617 = vdwg.mxu0
  %v2618 = vunpack.c.l.b16 %v2465
  %v2619 = vunpack.c.l.b16 %v2467
  %v2620 = vpack.c.b16 %v2619, %v2618
  %v2622 = vsel %vm204, %v2439, 0
  %v2625 = vsel %vm204, %v2620, 0
  %2627 = vmatpush.bf16.xpose.msra.mxu0 0
  %2628 = vmatpush.bf16.xpose.msra.mxu0 0
  %2629 = vmatpush.bf16.xpose.msra.mxu0 0
  %2630 = vmatpush.bf16.xpose.msra.mxu0 0
  %2631 = vmatpush.bf16.xpose.msra.mxu0 0
  %2632 = vmatpush.bf16.xpose.msra.mxu0 0
  %2633 = vmatpush.bf16.xpose.msra.mxu0 0
  %2634 = vmatpush.bf16.xpose.msra.mxu0 %v2625
  %2635 = vmatmul.bf16.gmra.mxu0 %v2622
  %v2636 = vpop.f32.mrf.mxu0
  %v2637 = vadd.f32 0.0, %v2636
  %v2638 = vpop.f32.mrf.mxu0
  %2639 = vdwg.mxu0
  %v2640 = vunpack.c.l.b16 %v2469
  %v2641 = vunpack.c.l.b16 %v2471
  %v2642 = vpack.c.b16 %v2641, %v2640
  %v2644 = vsel %vm204, %v2441, 0
  %v2647 = vsel %vm204, %v2642, 0
  %2649 = vmatpush.bf16.xpose.msra.mxu0 0
  %2650 = vmatpush.bf16.xpose.msra.mxu0 0
  %2651 = vmatpush.bf16.xpose.msra.mxu0 0
  %2652 = vmatpush.bf16.xpose.msra.mxu0 0
  %2653 = vmatpush.bf16.xpose.msra.mxu0 0
  %2654 = vmatpush.bf16.xpose.msra.mxu0 0
  %2655 = vmatpush.bf16.xpose.msra.mxu0 0
  %2656 = vmatpush.bf16.xpose.msra.mxu0 %v2647
  %2657 = vmatmul.bf16.gmra.mxu0 %v2644
  %v2658 = vpop.f32.mrf.mxu0
  %v2659 = vadd.f32 0.0, %v2658
  %v2660 = vpop.f32.mrf.mxu0
  %2661 = vdwg.mxu0
  %v2662 = vunpack.c.l.b16 %v2473
  %v2663 = vunpack.c.l.b16 %v2475
  %v2664 = vpack.c.b16 %v2663, %v2662
  %v2666 = vsel %vm204, %v2443, 0
  %v2669 = vsel %vm204, %v2664, 0
  %2671 = vmatpush.bf16.xpose.msra.mxu0 0
  %2672 = vmatpush.bf16.xpose.msra.mxu0 0
  %2673 = vmatpush.bf16.xpose.msra.mxu0 0
  %2674 = vmatpush.bf16.xpose.msra.mxu0 0
  %2675 = vmatpush.bf16.xpose.msra.mxu0 0
  %2676 = vmatpush.bf16.xpose.msra.mxu0 0
  %2677 = vmatpush.bf16.xpose.msra.mxu0 0
  %2678 = vmatpush.bf16.xpose.msra.mxu0 %v2669
  %2679 = vmatmul.bf16.gmra.mxu0 %v2666
  %v2680 = vpop.f32.mrf.mxu0
  %v2681 = vadd.f32 0.0, %v2680
  %v2682 = vpop.f32.mrf.mxu0
  %2683 = vdwg.mxu0
  %v2684 = vmul.f32 %v2527, 0.35355338
  %v2685 = vmul.f32 %v2549, 0.35355338
  %v2686 = vmul.f32 %v2571, 0.35355338
  %v2687 = vmul.f32 %v2593, 0.35355338
  %v2688 = vmul.f32 %v2615, 0.35355338
  %v2689 = vmul.f32 %v2637, 0.35355338
  %v2690 = vmul.f32 %v2659, 0.35355338
  %v2691 = vmul.f32 %v2681, 0.35355338
  %v2692 = vsel %vm668, %v2684, -inf
  %2693 = vmax.xlane.f32.xlu0 %v2692
  %v2694 = vpop.xlane.xlu0 %2693
  %v2695 = vsel %vm668, %v2685, -inf
  %2696 = vmax.xlane.f32.xlu0 %v2695
  %v2697 = vpop.xlane.xlu0 %2696
  %v2698 = vsel %vm668, %v2686, -inf
  %2699 = vmax.xlane.f32.xlu0 %v2698
  %v2700 = vpop.xlane.xlu0 %2699
  %v2701 = vsel %vm668, %v2687, -inf
  %2702 = vmax.xlane.f32.xlu0 %v2701
  %v2703 = vpop.xlane.xlu0 %2702
  %v2704 = vsel %vm668, %v2688, -inf
  %2705 = vmax.xlane.f32.xlu0 %v2704
  %v2706 = vpop.xlane.xlu0 %2705
  %v2707 = vsel %vm668, %v2689, -inf
  %2708 = vmax.xlane.f32.xlu0 %v2707
  %v2709 = vpop.xlane.xlu0 %2708
  %v2710 = vsel %vm668, %v2690, -inf
  %2711 = vmax.xlane.f32.xlu0 %v2710
  %v2712 = vpop.xlane.xlu0 %2711
  %v2713 = vsel %vm668, %v2691, -inf
  %2714 = vmax.xlane.f32.xlu0 %v2713
  %v2715 = vpop.xlane.xlu0 %2714
  %v2716 = vsub.f32 %v2684, %v2694
  %v2717 = vsub.f32 %v2685, %v2697
  %v2718 = vsub.f32 %v2686, %v2700
  %v2719 = vsub.f32 %v2687, %v2703
  %v2720 = vsub.f32 %v2688, %v2706
  %v2721 = vsub.f32 %v2689, %v2709
  %v2722 = vsub.f32 %v2690, %v2712
  %v2723 = vsub.f32 %v2691, %v2715
  %v2724 = vmul.f32 %v2716, 1.442695
  %v2725 = vpow.pop %v2724
  %v2726 = vmul.f32 %v2717, 1.442695
  %v2727 = vpow.pop %v2726
  %v2728 = vmul.f32 %v2718, 1.442695
  %v2729 = vpow.pop %v2728
  %v2730 = vmul.f32 %v2719, 1.442695
  %v2731 = vpow.pop %v2730
  %v2732 = vmul.f32 %v2720, 1.442695
  %v2733 = vpow.pop %v2732
  %v2734 = vmul.f32 %v2721, 1.442695
  %v2735 = vpow.pop %v2734
  %v2736 = vmul.f32 %v2722, 1.442695
  %v2737 = vpow.pop %v2736
  %v2738 = vmul.f32 %v2723, 1.442695
  %v2739 = vpow.pop %v2738
  %v2740 = vsel %vm668, %v2725, 0.0
  %2741 = vadd.xlane.f32.xlu0 %v2740
  %v2742 = vpop.xlane.xlu0 %2741
  %v2743 = vsel %vm668, %v2727, 0.0
  %2744 = vadd.xlane.f32.xlu0 %v2743
  %v2745 = vpop.xlane.xlu0 %2744
  %v2746 = vsel %vm668, %v2729, 0.0
  %2747 = vadd.xlane.f32.xlu0 %v2746
  %v2748 = vpop.xlane.xlu0 %2747
  %v2749 = vsel %vm668, %v2731, 0.0
  %2750 = vadd.xlane.f32.xlu0 %v2749
  %v2751 = vpop.xlane.xlu0 %2750
  %v2752 = vsel %vm668, %v2733, 0.0
  %2753 = vadd.xlane.f32.xlu0 %v2752
  %v2754 = vpop.xlane.xlu0 %2753
  %v2755 = vsel %vm668, %v2735, 0.0
  %2756 = vadd.xlane.f32.xlu0 %v2755
  %v2757 = vpop.xlane.xlu0 %2756
  %v2758 = vsel %vm668, %v2737, 0.0
  %2759 = vadd.xlane.f32.xlu0 %v2758
  %v2760 = vpop.xlane.xlu0 %2759
  %v2761 = vsel %vm668, %v2739, 0.0
  %2762 = vadd.xlane.f32.xlu0 %v2761
  %v2763 = vpop.xlane.xlu0 %2762
  %v2764 = vrcp.pop %v2742
  %v2765 = vrcp.pop %v2745
  %v2766 = vrcp.pop %v2748
  %v2767 = vrcp.pop %v2751
  %v2768 = vrcp.pop %v2754
  %v2769 = vrcp.pop %v2757
  %v2770 = vrcp.pop %v2760
  %v2771 = vrcp.pop %v2763
  %v2772 = vmul.f32 %v2725, %v2764
  %v2773 = vmul.f32 %v2727, %v2765
  %v2774 = vmul.f32 %v2729, %v2766
  %v2775 = vmul.f32 %v2731, %v2767
  %v2776 = vmul.f32 %v2733, %v2768
  %v2777 = vmul.f32 %v2735, %v2769
  %v2778 = vmul.f32 %v2737, %v2770
  %v2779 = vmul.f32 %v2739, %v2771
  %v2780 = vpack.c.bf16 %v2772, %v2772
  %v2781 = vpack.c.bf16 %v2773, %v2773
  %v2782 = vpack.c.bf16 %v2774, %v2774
  %v2783 = vpack.c.bf16 %v2775, %v2775
  %v2784 = vpack.c.bf16 %v2776, %v2776
  %v2785 = vpack.c.bf16 %v2777, %v2777
  %v2786 = vpack.c.bf16 %v2778, %v2778
  %v2787 = vpack.c.bf16 %v2779, %v2779
  %v2788 = vunpack.c.l.b16 %v2476
  %v2789 = vunpack.c.l.b16 %v2477
  %v2790 = vpack.c.b16 %v2789, %v2788
  %v2793 = vsel %vm668, %v2780, 0
  %2795 = vmatpush.bf16.msra.mxu0 0
  %2796 = vmatpush.bf16.msra.mxu0 0
  %2797 = vmatpush.bf16.msra.mxu0 0
  %2798 = vmatpush.bf16.msra.mxu0 0
  %2799 = vmatpush.bf16.msra.mxu0 0
  %2800 = vmatpush.bf16.msra.mxu0 0
  %2801 = vmatpush.bf16.msra.mxu0 0
  %2802 = vmatpush.bf16.msra.mxu0 %v2790
  %2803 = vmatmul.bf16.gmra.mxu0 %v2793
  %v2804 = vpop.f32.mrf.mxu0
  %v2805 = vadd.f32 0.0, %v2804
  %v2806 = vpop.f32.mrf.mxu0
  %2807 = vdwg.mxu0
  %v2808 = vunpack.c.l.b16 %v2478
  %v2809 = vunpack.c.l.b16 %v2479
  %v2810 = vpack.c.b16 %v2809, %v2808
  %v2813 = vsel %vm668, %v2781, 0
  %2815 = vmatpush.bf16.msra.mxu0 0
  %2816 = vmatpush.bf16.msra.mxu0 0
  %2817 = vmatpush.bf16.msra.mxu0 0
  %2818 = vmatpush.bf16.msra.mxu0 0
  %2819 = vmatpush.bf16.msra.mxu0 0
  %2820 = vmatpush.bf16.msra.mxu0 0
  %2821 = vmatpush.bf16.msra.mxu0 0
  %2822 = vmatpush.bf16.msra.mxu0 %v2810
  %2823 = vmatmul.bf16.gmra.mxu0 %v2813
  %v2824 = vpop.f32.mrf.mxu0
  %v2825 = vadd.f32 0.0, %v2824
  %v2826 = vpop.f32.mrf.mxu0
  %2827 = vdwg.mxu0
  %v2828 = vunpack.c.l.b16 %v2485
  %v2829 = vunpack.c.l.b16 %v2487
  %v2830 = vpack.c.b16 %v2829, %v2828
  %v2833 = vsel %vm668, %v2782, 0
  %2835 = vmatpush.bf16.msra.mxu0 0
  %2836 = vmatpush.bf16.msra.mxu0 0
  %2837 = vmatpush.bf16.msra.mxu0 0
  %2838 = vmatpush.bf16.msra.mxu0 0
  %2839 = vmatpush.bf16.msra.mxu0 0
  %2840 = vmatpush.bf16.msra.mxu0 0
  %2841 = vmatpush.bf16.msra.mxu0 0
  %2842 = vmatpush.bf16.msra.mxu0 %v2830
  %2843 = vmatmul.bf16.gmra.mxu0 %v2833
  %v2844 = vpop.f32.mrf.mxu0
  %v2845 = vadd.f32 0.0, %v2844
  %v2846 = vpop.f32.mrf.mxu0
  %2847 = vdwg.mxu0
  %v2848 = vunpack.c.l.b16 %v2489
  %v2849 = vunpack.c.l.b16 %v2491
  %v2850 = vpack.c.b16 %v2849, %v2848
  %v2853 = vsel %vm668, %v2783, 0
  %2855 = vmatpush.bf16.msra.mxu0 0
  %2856 = vmatpush.bf16.msra.mxu0 0
  %2857 = vmatpush.bf16.msra.mxu0 0
  %2858 = vmatpush.bf16.msra.mxu0 0
  %2859 = vmatpush.bf16.msra.mxu0 0
  %2860 = vmatpush.bf16.msra.mxu0 0
  %2861 = vmatpush.bf16.msra.mxu0 0
  %2862 = vmatpush.bf16.msra.mxu0 %v2850
  %2863 = vmatmul.bf16.gmra.mxu0 %v2853
  %v2864 = vpop.f32.mrf.mxu0
  %v2865 = vadd.f32 0.0, %v2864
  %v2866 = vpop.f32.mrf.mxu0
  %2867 = vdwg.mxu0
  %v2868 = vunpack.c.l.b16 %v2493
  %v2869 = vunpack.c.l.b16 %v2495
  %v2870 = vpack.c.b16 %v2869, %v2868
  %v2873 = vsel %vm668, %v2784, 0
  %2875 = vmatpush.bf16.msra.mxu0 0
  %2876 = vmatpush.bf16.msra.mxu0 0
  %2877 = vmatpush.bf16.msra.mxu0 0
  %2878 = vmatpush.bf16.msra.mxu0 0
  %2879 = vmatpush.bf16.msra.mxu0 0
  %2880 = vmatpush.bf16.msra.mxu0 0
  %2881 = vmatpush.bf16.msra.mxu0 0
  %2882 = vmatpush.bf16.msra.mxu0 %v2870
  %2883 = vmatmul.bf16.gmra.mxu0 %v2873
  %v2884 = vpop.f32.mrf.mxu0
  %v2885 = vadd.f32 0.0, %v2884
  %v2886 = vpop.f32.mrf.mxu0
  %2887 = vdwg.mxu0
  %v2888 = vunpack.c.l.b16 %v2497
  %v2889 = vunpack.c.l.b16 %v2499
  %v2890 = vpack.c.b16 %v2889, %v2888
  %v2893 = vsel %vm668, %v2785, 0
  %2895 = vmatpush.bf16.msra.mxu0 0
  %2896 = vmatpush.bf16.msra.mxu0 0
  %2897 = vmatpush.bf16.msra.mxu0 0
  %2898 = vmatpush.bf16.msra.mxu0 0
  %2899 = vmatpush.bf16.msra.mxu0 0
  %2900 = vmatpush.bf16.msra.mxu0 0
  %2901 = vmatpush.bf16.msra.mxu0 0
  %2902 = vmatpush.bf16.msra.mxu0 %v2890
  %2903 = vmatmul.bf16.gmra.mxu0 %v2893
  %v2904 = vpop.f32.mrf.mxu0
  %v2905 = vadd.f32 0.0, %v2904
  %v2906 = vpop.f32.mrf.mxu0
  %2907 = vdwg.mxu0
  %v2908 = vunpack.c.l.b16 %v2501
  %v2909 = vunpack.c.l.b16 %v2503
  %v2910 = vpack.c.b16 %v2909, %v2908
  %v2913 = vsel %vm668, %v2786, 0
  %2915 = vmatpush.bf16.msra.mxu0 0
  %2916 = vmatpush.bf16.msra.mxu0 0
  %2917 = vmatpush.bf16.msra.mxu0 0
  %2918 = vmatpush.bf16.msra.mxu0 0
  %2919 = vmatpush.bf16.msra.mxu0 0
  %2920 = vmatpush.bf16.msra.mxu0 0
  %2921 = vmatpush.bf16.msra.mxu0 0
  %2922 = vmatpush.bf16.msra.mxu0 %v2910
  %2923 = vmatmul.bf16.gmra.mxu0 %v2913
  %v2924 = vpop.f32.mrf.mxu0
  %v2925 = vadd.f32 0.0, %v2924
  %v2926 = vpop.f32.mrf.mxu0
  %2927 = vdwg.mxu0
  %v2928 = vunpack.c.l.b16 %v2505
  %v2929 = vunpack.c.l.b16 %v2507
  %v2930 = vpack.c.b16 %v2929, %v2928
  %v2933 = vsel %vm668, %v2787, 0
  %2935 = vmatpush.bf16.msra.mxu0 0
  %2936 = vmatpush.bf16.msra.mxu0 0
  %2937 = vmatpush.bf16.msra.mxu0 0
  %2938 = vmatpush.bf16.msra.mxu0 0
  %2939 = vmatpush.bf16.msra.mxu0 0
  %2940 = vmatpush.bf16.msra.mxu0 0
  %2941 = vmatpush.bf16.msra.mxu0 0
  %2942 = vmatpush.bf16.msra.mxu0 %v2930
  %2943 = vmatmul.bf16.gmra.mxu0 %v2933
  %v2944 = vpop.f32.mrf.mxu0
  %v2945 = vadd.f32 0.0, %v2944
  %v2946 = vpop.f32.mrf.mxu0
  %2947 = vdwg.mxu0
  %2950 = vrot.lane.b32.xlu0 %v2845, 8
  %v2951 = vpop.permute.xlu0 %2950
  %2952 = vrot.lane.b32.xlu0 %v2865, 8
  %v2953 = vpop.permute.xlu0 %2952
  %2958 = vrot.lane.b32.xlu0 %v2885, 16
  %v2959 = vpop.permute.xlu0 %2958
  %2960 = vrot.lane.b32.xlu0 %v2905, 16
  %v2961 = vpop.permute.xlu0 %2960
  %2966 = vrot.lane.b32.xlu0 %v2925, 24
  %v2967 = vpop.permute.xlu0 %2966
  %2968 = vrot.lane.b32.xlu0 %v2945, 24
  %v2969 = vpop.permute.xlu0 %2968
  %v2972 = vsel %vm204, %v2805, %v2951
  %v2973 = vsel %vm204, %v2825, %v2953
  %v2974 = vsel %vm668, %v2972, %v2959
  %v2975 = vsel %vm668, %v2973, %v2961
  %v2976 = vsel %vm671, %v2974, %v2967
  %v2977 = vsel %vm671, %v2975, %v2969
  %v2978 = vpack.c.bf16 %v2977, %v2976
  %v2979 = vperm.slane %v1682, 7
  %2980 = vrot.lane.b32.xlu0 %v2355, 32
  %v2981 = vpop.permute.xlu0 %2980
  %2982 = vrot.lane.b32.xlu0 %v2356, 32
  %v2983 = vpop.permute.xlu0 %2982
  %v2987 = vsel %vm99, %v2978, 0
  %2989 = vmatpush.bf16.msra.mxu0 0
  %2990 = vmatpush.bf16.msra.mxu0 0
  %2991 = vmatpush.bf16.msra.mxu0 0
  %2992 = vmatpush.bf16.msra.mxu0 0
  %2993 = vmatpush.bf16.msra.mxu0 0
  %2994 = vmatpush.bf16.msra.mxu0 0
  %2995 = vmatpush.bf16.msra.mxu0 %v2983
  %2996 = vmatpush.bf16.msra.mxu0 %v2981
  %2997 = vmatmul.bf16.gmra.mxu0 %v2987
  %v2998 = vpop.f32.mrf.mxu0
  %v2999 = vadd.f32 %v2979, %v2998
  %v3000 = vpop.f32.mrf.mxu0
  %v3001 = vadd.f32 %v2979, %v3000
  %3002 = vdwg.mxu0
  %v3003 = vadd.f32 %v2345, %v2999
  %v3004 = vadd.f32 %v2346, %v3001
  %v3005 = vsel %vm99, %v3003, 0.0
  %3006 = vadd.xlane.f32.xlu0 %v3005
  %v3007 = vpop.xlane.xlu0 %3006
  %v3008 = vsel %vm99, %v3004, 0.0
  %3009 = vadd.xlane.f32.xlu0 %v3008
  %v3010 = vpop.xlane.xlu0 %3009
  %v3011 = vmul.f32 %v3007, %v713
  %v3012 = vmul.f32 %v3010, %v713
  %v3013 = vsub.f32 %v3003, %v3011
  %v3014 = vsub.f32 %v3004, %v3012
  %v3015 = vmul.f32 %v3013, %v3013
  %v3016 = vmul.f32 %v3014, %v3014
  %v3017 = vsel %vm99, %v3015, 0.0
  %3018 = vadd.xlane.f32.xlu0 %v3017
  %v3019 = vpop.xlane.xlu0 %3018
  %v3020 = vsel %vm99, %v3016, 0.0
  %3021 = vadd.xlane.f32.xlu0 %v3020
  %v3022 = vpop.xlane.xlu0 %3021
  %v3023 = vmul.f32 %v3019, %v713
  %v3024 = vmul.f32 %v3022, %v713
  %v3025 = vadd.f32 %v3023, 1e-05
  %v3026 = vadd.f32 %v3024, 1e-05
  %v3027 = vrsqrt.pop %v3025
  %v3028 = vmul.f32 %v3027, %v3025
  %v3029 = vmul.f32 %v3028, %v3027
  %v3030 = vmul.f32 0.5, %v3029
  %v3031 = vsub.f32 1.5, %v3030
  %v3032 = vmul.f32 %v3027, %v3031
  %vm3033 = vweird.f32 %v3025
  %vm3034 = vweird.f32 %v3027
  %vm3035 = vmor %vm3033, %vm3034
  %v3036 = vsel %vm3035, %v3027, %v3032
  %v3037 = vrsqrt.pop %v3026
  %v3038 = vmul.f32 %v3037, %v3026
  %v3039 = vmul.f32 %v3038, %v3037
  %v3040 = vmul.f32 0.5, %v3039
  %v3041 = vsub.f32 1.5, %v3040
  %v3042 = vmul.f32 %v3037, %v3041
  %vm3043 = vweird.f32 %v3026
  %vm3044 = vweird.f32 %v3037
  %vm3045 = vmor %vm3043, %vm3044
  %v3046 = vsel %vm3045, %v3037, %v3042
  %v3047 = vmul.f32 %v3013, %v3036
  %v3048 = vmul.f32 %v3014, %v3046
  %v3049 = vperm.slane %v1683, 4
  %v3050 = vmul.f32 %v3047, %v3049
  %v3051 = vmul.f32 %v3048, %v3049
  %v3052 = vperm.slane %v1683, 5
  %v3053 = vadd.f32 %v3050, %v3052
  %v3054 = vadd.f32 %v3051, %v3052
  %v3055 = vpack.c.bf16 %v3054, %v3053
  %v3056 = vperm.slane %v1683, 0
  %v3061 = vunpack.c.l.b16 %v1665
  %v3062 = vunpack.c.l.b16 %v1667
  %v3063 = vunpack.c.l.b16 %v1669
  %v3064 = vunpack.c.l.b16 %v1671
  %v3065 = vpack.c.b16 %v3062, %v3061
  %v3066 = vpack.c.b16 %v3064, %v3063
  %v3070 = vsel %vm99, %v3055, 0
  %3072 = vmatpush.bf16.msra.mxu0 0
  %3073 = vmatpush.bf16.msra.mxu0 0
  %3074 = vmatpush.bf16.msra.mxu0 0
  %3075 = vmatpush.bf16.msra.mxu0 0
  %3076 = vmatpush.bf16.msra.mxu0 0
  %3077 = vmatpush.bf16.msra.mxu0 0
  %3078 = vmatpush.bf16.msra.mxu0 %v3066
  %3079 = vmatpush.bf16.msra.mxu0 %v3065
  %3080 = vmatmul.bf16.gmra.mxu0 %v3070
  %v3081 = vpop.f32.mrf.mxu0
  %v3082 = vadd.f32 %v3056, %v3081
  %v3083 = vpop.f32.mrf.mxu0
  %v3084 = vadd.f32 %v3056, %v3083
  %3085 = vdwg.mxu0
  %v3086 = vmax.f32 %v3082, 0.0
  %v3087 = vmax.f32 %v3084, 0.0
  %v3088 = vpack.c.bf16 %v3087, %v3086
  %v3089 = vperm.slane %v1683, 1
  %v3098 = vunpack.c.l.b16 %v1673
  %v3099 = vunpack.c.l.b16 %v1674
  %v3100 = vunpack.c.l.b16 %v1675
  %v3101 = vunpack.c.l.b16 %v1676
  %v3102 = vunpack.c.l.b16 %v1677
  %v3103 = vunpack.c.l.b16 %v1678
  %v3104 = vunpack.c.l.b16 %v1679
  %v3105 = vunpack.c.l.b16 %v1680
  %v3106 = vpack.c.b16 %v3099, %v3098
  %v3107 = vpack.c.b16 %v3101, %v3100
  %v3108 = vpack.c.b16 %v3103, %v3102
  %v3109 = vpack.c.b16 %v3105, %v3104
  %v3115 = vsel %vm1537, %v3088, 0
  %3117 = vmatpush.bf16.msra.mxu0 0
  %3118 = vmatpush.bf16.msra.mxu0 0
  %3119 = vmatpush.bf16.msra.mxu0 0
  %3120 = vmatpush.bf16.msra.mxu0 0
  %3121 = vmatpush.bf16.msra.mxu0 %v3109
  %3122 = vmatpush.bf16.msra.mxu0 %v3108
  %3123 = vmatpush.bf16.msra.mxu0 %v3107
  %3124 = vmatpush.bf16.msra.mxu0 %v3106
  %3125 = vmatmul.bf16.gmra.mxu0 %v3115
  %v3126 = vpop.f32.mrf.mxu0
  %v3127 = vadd.f32 %v3089, %v3126
  %v3128 = vpop.f32.mrf.mxu0
  %v3129 = vadd.f32 %v3089, %v3128
  %3130 = vdwg.mxu0
  %v3131 = vadd.f32 %v3053, %v3127
  %v3132 = vadd.f32 %v3054, %v3129
  %v3133 = vsel %vm99, %v3131, 0.0
  %3134 = vadd.xlane.f32.xlu0 %v3133
  %v3135 = vpop.xlane.xlu0 %3134
  %v3136 = vsel %vm99, %v3132, 0.0
  %3137 = vadd.xlane.f32.xlu0 %v3136
  %v3138 = vpop.xlane.xlu0 %3137
  %v3139 = vmul.f32 %v3135, %v713
  %v3140 = vmul.f32 %v3138, %v713
  %v3141 = vsub.f32 %v3131, %v3139
  %v3142 = vsub.f32 %v3132, %v3140
  %v3143 = vmul.f32 %v3141, %v3141
  %v3144 = vmul.f32 %v3142, %v3142
  %v3145 = vsel %vm99, %v3143, 0.0
  %3146 = vadd.xlane.f32.xlu0 %v3145
  %v3147 = vpop.xlane.xlu0 %3146
  %v3148 = vsel %vm99, %v3144, 0.0
  %3149 = vadd.xlane.f32.xlu0 %v3148
  %v3150 = vpop.xlane.xlu0 %3149
  %v3151 = vmul.f32 %v3147, %v713
  %v3152 = vmul.f32 %v3150, %v713
  %v3153 = vadd.f32 %v3151, 1e-05
  %v3154 = vadd.f32 %v3152, 1e-05
  %v3155 = vrsqrt.pop %v3153
  %v3156 = vmul.f32 %v3155, %v3153
  %v3157 = vmul.f32 %v3156, %v3155
  %v3158 = vmul.f32 0.5, %v3157
  %v3159 = vsub.f32 1.5, %v3158
  %v3160 = vmul.f32 %v3155, %v3159
  %vm3161 = vweird.f32 %v3153
  %vm3162 = vweird.f32 %v3155
  %vm3163 = vmor %vm3161, %vm3162
  %v3164 = vsel %vm3163, %v3155, %v3160
  %v3165 = vrsqrt.pop %v3154
  %v3166 = vmul.f32 %v3165, %v3154
  %v3167 = vmul.f32 %v3166, %v3165
  %v3168 = vmul.f32 0.5, %v3167
  %v3169 = vsub.f32 1.5, %v3168
  %v3170 = vmul.f32 %v3165, %v3169
  %vm3171 = vweird.f32 %v3154
  %vm3172 = vweird.f32 %v3165
  %vm3173 = vmor %vm3171, %vm3172
  %v3174 = vsel %vm3173, %v3165, %v3170
  %v3175 = vmul.f32 %v3141, %v3164
  %v3176 = vmul.f32 %v3142, %v3174
  %v3177 = vperm.slane %v1683, 6
  %v3178 = vmul.f32 %v3175, %v3177
  %v3179 = vmul.f32 %v3176, %v3177
  %v3180 = vperm.slane %v1683, 7
  %v3181 = vadd.f32 %v3178, %v3180
  %v3182 = vadd.f32 %v3179, %v3180
  %v3183 = vsel %vm99, %v3181, 0.0
  %3184 = vadd.xlane.f32.xlu0 %v3183
  %v3185 = vpop.xlane.xlu0 %3184
  %v3186 = vsel %vm99, %v3182, 0.0
  %3187 = vadd.xlane.f32.xlu0 %v3186
  %v3188 = vpop.xlane.xlu0 %3187
  %v3189 = vmul.f32 %v3185, %v713
  %v3190 = vmul.f32 %v3188, %v713
  %v3191 = vsub.f32 %v3181, %v3189
  %v3192 = vsub.f32 %v3182, %v3190
  %v3193 = vmul.f32 %v3191, %v3191
  %v3194 = vmul.f32 %v3192, %v3192
  %v3195 = vsel %vm99, %v3193, 0.0
  %3196 = vadd.xlane.f32.xlu0 %v3195
  %v3197 = vpop.xlane.xlu0 %3196
  %v3198 = vsel %vm99, %v3194, 0.0
  %3199 = vadd.xlane.f32.xlu0 %v3198
  %v3200 = vpop.xlane.xlu0 %3199
  %v3201 = vmul.f32 %v3197, %v713
  %v3202 = vmul.f32 %v3200, %v713
  %v3203 = vadd.f32 %v3201, 1e-05
  %v3204 = vadd.f32 %v3202, 1e-05
  %v3205 = vrsqrt.pop %v3203
  %v3206 = vmul.f32 %v3205, %v3203
  %v3207 = vmul.f32 %v3206, %v3205
  %v3208 = vmul.f32 0.5, %v3207
  %v3209 = vsub.f32 1.5, %v3208
  %v3210 = vmul.f32 %v3205, %v3209
  %vm3211 = vweird.f32 %v3203
  %vm3212 = vweird.f32 %v3205
  %vm3213 = vmor %vm3211, %vm3212
  %v3214 = vsel %vm3213, %v3205, %v3210
  %v3215 = vrsqrt.pop %v3204
  %v3216 = vmul.f32 %v3215, %v3204
  %v3217 = vmul.f32 %v3216, %v3215
  %v3218 = vmul.f32 0.5, %v3217
  %v3219 = vsub.f32 1.5, %v3218
  %v3220 = vmul.f32 %v3215, %v3219
  %vm3221 = vweird.f32 %v3204
  %vm3222 = vweird.f32 %v3215
  %vm3223 = vmor %vm3221, %vm3222
  %v3224 = vsel %vm3223, %v3215, %v3220
  %v3225 = vmul.f32 %v3191, %v3214
  %v3226 = vmul.f32 %v3192, %v3224
  %v3227 = vperm.slane %v1684, 0
  %v3228 = vmul.f32 %v3225, %v3227
  %v3229 = vmul.f32 %v3226, %v3227
  %v3230 = vperm.slane %v1684, 1
  %v3231 = vadd.f32 %v3228, %v3230
  %v3232 = vadd.f32 %v3229, %v3230
  %3234 = vrot.lane.b32.xlu0 %v3232, 32
  %v3235 = vpop.permute.xlu0 %3234
  %v3237 = vsel %vm99, %v3231, %v3235
  %s3238 = scalar_lea.vmem %s7, 8
  %3239 = vst.msk [vmem:[%s3238] sm:$0xff] %vm1537, %v3237
  // Predicated region
  $region30: #{transformer_decoder.1} parent=0 // pred_check
    _
  $region31: #{transformer_decoder.1} parent=0 // pred_check_branch
    %3241 = sbr.rel (0) target = $region33
  $region32: #{transformer_decoder.1} parent=0 // pred_region
    _
  $region33: #{transformer_decoder.1} parent=0 // pred_fallthru
    _
  // Predicated region
  $region34: #{transformer_decoder.1} parent=0 // pred_check
    _
  $region35: #{transformer_decoder.1} parent=0 // pred_check_branch
    %3243 = sbr.rel (0) target = $region37
  $region36: #{transformer_decoder.1} parent=0 // pred_region
    _
  $region37: #{transformer_decoder.1} parent=0 // pred_fallthru
    _

</llo_original>
